<compile_context>
chip_gen: v6e
topology: v6e:2x2x1
jax: 0.10.0
libtpu: 0.0.40
codegen_flags: <defaults>
</compile_context>

<pallas_src>
import jax
import jax.numpy as jnp
from jax.experimental import pallas as pl
from jax.experimental.pallas import tpu as pltpu


# ----------------------------------------------------------------------------
# In-kernel helpers (value-level, all in VMEM/vregs)
# ----------------------------------------------------------------------------
def _pad_hw1(v):
    """Zero-pad a (Nb, H, W, C) value by 1 pixel in H and W (SAME halo)."""
    nb, h, w, c = v.shape
    zrow = jnp.zeros((nb, 1, w, c), v.dtype)
    v = jnp.concatenate([zrow, v, zrow], axis=1)
    zcol = jnp.zeros((nb, h + 2, 1, c), v.dtype)
    return jnp.concatenate([zcol, v, zcol], axis=2)


# ----------------------------------------------------------------------------
# Fused DecodeLayer kernel:
#   conv3x3+bias+ReLU -> (virtual channel concat) -> conv3x3+bias+ReLU
# ----------------------------------------------------------------------------
def decode_layer_kernel(x_ref, s_ref, w1_ref, b1_ref, w2_ref, b2_ref, o_ref):
    # x_ref : (Nb, H, W, Cin)        raw (unpadded) input images
    # s_ref : (Nb, H, W, Csk)        raw (unpadded) skip images
    # w1_ref: (9*Cin, Cd)            dense-conv GEMM weight (tap-major rows)
    # b1_ref: (1, Cd)                fp32 bias
    # w2_ref: (9*(Cd+Csk), Cout)     decode-conv GEMM weight; per tap the rows
    #                                are ordered [dense chans | skip chans],
    #                                matching torch.cat([dense, skip], dim=1)
    # b2_ref: (1, Cout)              fp32 bias
    # o_ref : (Nb, H, W, Cout)       output
    nb, H, W, Cin = x_ref.shape
    Csk = s_ref.shape[3]
    Cd = w1_ref.shape[1]
    Cout = o_ref.shape[3]
    P = nb * H * W
    cdt = w1_ref.dtype  # compute (MXU operand) dtype: bf16 or fp32

    x = x_ref[...].astype(cdt)
    s = s_ref[...].astype(cdt)

    # ---- dense_block: im2col in VMEM, one big-K GEMM, fp32 accumulation -----
    xpad = _pad_hw1(x)                                   # (Nb, H+2, W+2, Cin)
    col1 = jnp.concatenate(
        [xpad[:, dy:dy + H, dx:dx + W, :]
         for dy in range(3) for dx in range(3)],
        axis=-1).reshape(P, 9 * Cin)                     # (P, 9*Cin)
    dense = jnp.dot(col1, w1_ref[...],
                    preferred_element_type=jnp.float32)  # (P, Cd) fp32
    dense = jnp.maximum(dense + b1_ref[...], 0.0)

    # ---- decode_block on the virtual concat [dense | skip] ------------------
    dpad = _pad_hw1(dense.reshape(nb, H, W, Cd).astype(cdt))
    spad = _pad_hw1(s)
    pieces = []
    for dy in range(3):
        for dx in range(3):
            pieces.append(dpad[:, dy:dy + H, dx:dx + W, :])   # dense channels
            pieces.append(spad[:, dy:dy + H, dx:dx + W, :])   # skip channels
    col2 = jnp.concatenate(pieces, axis=-1).reshape(P, 9 * (Cd + Csk))
    out = jnp.dot(col2, w2_ref[...],
                  preferred_element_type=jnp.float32)    # (P, Cout) fp32
    out = jnp.maximum(out + b2_ref[...], 0.0)
    o_ref[...] = out.reshape(nb, H, W, Cout).astype(o_ref.dtype)


# ----------------------------------------------------------------------------
# Wrapper: DecodeLayer.forward
# ----------------------------------------------------------------------------
def decode_layer_forward(x, skip, params, *, use_bf16=True, images_per_block=1):
    """x, skip: NHWC.  params = (w1, b1, w2, b2) with HWIO conv weights.

    Mirrors DecodeLayer.forward exactly (NCHW channel-concat dim=1 -> axis=-1).
    `use_bf16=True` (default) feeds bf16 operands to the MXU with fp32
    accumulation — the fast path on v6e/v7x and a pure memory win on v5e.
    """
    w1, b1, w2, b2 = params
    N, H, W, Cin = x.shape
    Csk = skip.shape[-1]
    Cd = w1.shape[-1]
    Cc = w2.shape[-2]
    Cout = w2.shape[-1]
    assert Cc == Cd + Csk, (Cc, Cd, Csk)
    nb = images_per_block
    assert N % nb == 0, (N, nb)

    cdt = jnp.bfloat16 if use_bf16 else jnp.float32

    # Flattened GEMM weights.  Invariant: row index = (3*dy + dx)*C + c, i.e.
    # tap-major / input-channel-minor, matching the in-kernel im2col column
    # order; W2's input channels are [dense | skip] exactly like
    # torch.cat([dense, skip], dim=1).
    w1k = w1.reshape(9 * Cin, Cd).astype(cdt)
    w2k = w2.reshape(9 * Cc, Cout).astype(cdt)
    b1k = b1.reshape(1, Cd).astype(jnp.float32)
    b2k = b2.reshape(1, Cout).astype(jnp.float32)

    return pl.pallas_call(
        decode_layer_kernel,
        out_shape=jax.ShapeDtypeStruct((N, H, W, Cout), x.dtype),
        grid_spec=pltpu.PrefetchScalarGridSpec(
            num_scalar_prefetch=0,
            grid=(N // nb,),
            in_specs=[
                pl.BlockSpec((nb, H, W, Cin), lambda n: (n, 0, 0, 0)),
                pl.BlockSpec((nb, H, W, Csk), lambda n: (n, 0, 0, 0)),
                pl.BlockSpec((9 * Cin, Cd), lambda n: (0, 0)),
                pl.BlockSpec((1, Cd), lambda n: (0, 0)),
                pl.BlockSpec((9 * Cc, Cout), lambda n: (0, 0)),
                pl.BlockSpec((1, Cout), lambda n: (0, 0)),
            ],
            out_specs=pl.BlockSpec((nb, H, W, Cout), lambda n: (n, 0, 0, 0)),
        ),
        compiler_params=pltpu.CompilerParams(
            # Grid over batch blocks: each v7x TensorCore takes whole images.
            dimension_semantics=("parallel",),
            # Above the 16/32 MiB scoped defaults, below v7x's 64 MiB physical.
            vmem_limit_bytes=48 * 1024 * 1024,
        ),
    )(x, skip, w1k, b1k, w2k, b2k)


# ----------------------------------------------------------------------------
# Pure-JAX reference (correctness check only)
# ----------------------------------------------------------------------------
def _ref_conv3x3_bias_relu(x, w, b):
    y = jax.lax.conv_general_dilated(
        x, w, window_strides=(1, 1), padding="SAME",
        dimension_numbers=("NHWC", "HWIO", "NHWC"),
        precision=jax.lax.Precision.HIGHEST)
    return jnp.maximum(y + b, 0.0)


def _ref_forward(x, skip, params):
    w1, b1, w2, b2 = params
    dense_out = _ref_conv3x3_bias_relu(x, w1, b1)
    cat_out = jnp.concatenate([dense_out, skip], axis=-1)
    return _ref_conv3x3_bias_relu(cat_out, w2, b2)


if __name__ == "__main__":
    # Small shapes: batch=2, C_in=4, H=W=16, C_dense=8, C_skip=4, C_out=4.
    N, H, W = 2, 16, 16
    C_in, C_dense, C_skip, C_out = 4, 8, 4, 4

    key = jax.random.PRNGKey(0)
    kx, ks, kw1, kb1, kw2, kb2 = jax.random.split(key, 6)

    x = jax.random.normal(kx, (N, H, W, C_in), dtype=jnp.float32)       # NHWC
    skip = jax.random.normal(ks, (N, H, W, C_skip), dtype=jnp.float32)  # NHWC

    w1 = 0.1 * jax.random.normal(kw1, (3, 3, C_in, C_dense), dtype=jnp.float32)
    b1 = 0.1 * jax.random.normal(kb1, (C_dense,), dtype=jnp.float32)
    w2 = 0.1 * jax.random.normal(kw2, (3, 3, C_dense + C_skip, C_out),
                                 dtype=jnp.float32)
    b2 = 0.1 * jax.random.normal(kb2, (C_out,), dtype=jnp.float32)
    params = (w1, b1, w2, b2)

    fwd = jax.jit(decode_layer_forward,
                  static_argnames=("use_bf16", "images_per_block"))
    ref = jax.block_until_ready(_ref_forward(x, skip, params))

    # fp32-operand path: tight tolerance (a hidden bf16 regression would show
    # ~1e-2 errors; margin left for single-big-K vs per-tap accumulation order).
    out_f32 = jax.block_until_ready(fwd(x, skip, params, use_bf16=False))
    assert out_f32.shape == (N, H, W, C_out), out_f32.shape
    err32 = float(jnp.max(jnp.abs(out_f32 - ref)))
    assert jnp.allclose(out_f32, ref, atol=1e-3, rtol=1e-3), err32

    # Default bf16-operand / fp32-accumulate path (v6e/v7x MXU fast path):
    # intentionally looser check against the fp32 reference.
    out_bf16 = jax.block_until_ready(fwd(x, skip, params))
    assert out_bf16.shape == (N, H, W, C_out), out_bf16.shape
    errbf = float(jnp.max(jnp.abs(out_bf16 - ref)))
    assert jnp.allclose(out_bf16, ref, atol=5e-2, rtol=5e-2), errbf

    print("KERNEL_OK")
</pallas_src>

<mosaic_0001>
module attributes {stable_mosaic.version = 11 : i64} {
  func.func @decode_layer_kernel(%arg0: i32, %arg1: memref<1x16x16x4xf32, #tpu.memory_space<vmem>>, %arg2: memref<1x16x16x4xf32, #tpu.memory_space<vmem>>, %arg3: memref<36x8xf32, #tpu.memory_space<vmem>>, %arg4: memref<1x8xf32, #tpu.memory_space<vmem>>, %arg5: memref<108x4xf32, #tpu.memory_space<vmem>>, %arg6: memref<1x4xf32, #tpu.memory_space<vmem>>, %arg7: memref<1x16x16x4xf32, #tpu.memory_space<vmem>>) attributes {dimension_semantics = [#tpu.dimension_semantics<parallel>], iteration_bounds = array<i64: 2>, scalar_prefetch = 0 : i64, scratch_operands = 0 : i64, tpu.core_type = #tpu.core_type<tc>, window_params = [{transform_indices = @transform_0, window_bounds = array<i64: 1, 16, 16, 4>}, {transform_indices = @transform_1, window_bounds = array<i64: 1, 16, 16, 4>}, {pipeline_mode = #tpu.pipeline_mode<synchronous>, transform_indices = @transform_2, window_bounds = array<i64: 36, 8>}, {pipeline_mode = #tpu.pipeline_mode<synchronous>, transform_indices = @transform_3, window_bounds = array<i64: 1, 8>}, {pipeline_mode = #tpu.pipeline_mode<synchronous>, transform_indices = @transform_4, window_bounds = array<i64: 108, 4>}, {pipeline_mode = #tpu.pipeline_mode<synchronous>, transform_indices = @transform_5, window_bounds = array<i64: 1, 4>}, {transform_indices = @transform_6, window_bounds = array<i64: 1, 16, 16, 4>}]} {
    %c0 = arith.constant 0 : index
    %c0_0 = arith.constant 0 : index
    %c0_1 = arith.constant 0 : index
    %c0_2 = arith.constant 0 : index
    %0 = vector.load %arg1[%c0, %c0_0, %c0_1, %c0_2] : memref<1x16x16x4xf32, #tpu.memory_space<vmem>>, vector<1x16x16x4xf32>
    %c0_3 = arith.constant 0 : index
    %c0_4 = arith.constant 0 : index
    %c0_5 = arith.constant 0 : index
    %c0_6 = arith.constant 0 : index
    %1 = vector.load %arg2[%c0_3, %c0_4, %c0_5, %c0_6] : memref<1x16x16x4xf32, #tpu.memory_space<vmem>>, vector<1x16x16x4xf32>
    %cst = arith.constant 0.000000e+00 : f32
    %2 = vector.broadcast %cst : f32 to vector<1x1x16x4xf32>
    %3 = tpu.concatenate %2, %0, %2 in 1 : vector<1x1x16x4xf32>, vector<1x16x16x4xf32>, vector<1x1x16x4xf32> -> vector<1x18x16x4xf32>
    %cst_7 = arith.constant 0.000000e+00 : f32
    %4 = vector.broadcast %cst_7 : f32 to vector<1x18x1x4xf32>
    %5 = tpu.concatenate %4, %3, %4 in 2 : vector<1x18x1x4xf32>, vector<1x18x16x4xf32>, vector<1x18x1x4xf32> -> vector<1x18x18x4xf32>
    %6 = vector.extract_strided_slice %5 {offsets = [0, 0, 0, 0], sizes = [1, 16, 16, 4], strides = [1, 1, 1, 1]} : vector<1x18x18x4xf32> to vector<1x16x16x4xf32>
    %7 = vector.extract_strided_slice %5 {offsets = [0, 0, 1, 0], sizes = [1, 16, 16, 4], strides = [1, 1, 1, 1]} : vector<1x18x18x4xf32> to vector<1x16x16x4xf32>
    %8 = vector.extract_strided_slice %5 {offsets = [0, 0, 2, 0], sizes = [1, 16, 16, 4], strides = [1, 1, 1, 1]} : vector<1x18x18x4xf32> to vector<1x16x16x4xf32>
    %9 = vector.extract_strided_slice %5 {offsets = [0, 1, 0, 0], sizes = [1, 16, 16, 4], strides = [1, 1, 1, 1]} : vector<1x18x18x4xf32> to vector<1x16x16x4xf32>
    %10 = vector.extract_strided_slice %5 {offsets = [0, 1, 1, 0], sizes = [1, 16, 16, 4], strides = [1, 1, 1, 1]} : vector<1x18x18x4xf32> to vector<1x16x16x4xf32>
    %11 = vector.extract_strided_slice %5 {offsets = [0, 1, 2, 0], sizes = [1, 16, 16, 4], strides = [1, 1, 1, 1]} : vector<1x18x18x4xf32> to vector<1x16x16x4xf32>
    %12 = vector.extract_strided_slice %5 {offsets = [0, 2, 0, 0], sizes = [1, 16, 16, 4], strides = [1, 1, 1, 1]} : vector<1x18x18x4xf32> to vector<1x16x16x4xf32>
    %13 = vector.extract_strided_slice %5 {offsets = [0, 2, 1, 0], sizes = [1, 16, 16, 4], strides = [1, 1, 1, 1]} : vector<1x18x18x4xf32> to vector<1x16x16x4xf32>
    %14 = vector.extract_strided_slice %5 {offsets = [0, 2, 2, 0], sizes = [1, 16, 16, 4], strides = [1, 1, 1, 1]} : vector<1x18x18x4xf32> to vector<1x16x16x4xf32>
    %15 = tpu.concatenate %6, %7, %8, %9, %10, %11, %12, %13, %14 in 3 : vector<1x16x16x4xf32>, vector<1x16x16x4xf32>, vector<1x16x16x4xf32>, vector<1x16x16x4xf32>, vector<1x16x16x4xf32>, vector<1x16x16x4xf32>, vector<1x16x16x4xf32>, vector<1x16x16x4xf32>, vector<1x16x16x4xf32> -> vector<1x16x16x36xf32>
    %16 = vector.shape_cast %15 : vector<1x16x16x36xf32> to vector<256x36xf32>
    %c0_8 = arith.constant 0 : index
    %c0_9 = arith.constant 0 : index
    %17 = vector.load %arg3[%c0_8, %c0_9] : memref<36x8xf32, #tpu.memory_space<vmem>>, vector<36x8xf32>
    %cst_10 = arith.constant dense<0.000000e+00> : vector<256x8xf32>
    %18 = tpu.matmul %16, %17, %cst_10 {dimension_numbers = #tpu.dot_dimension_numbers<[1], [0], [0], [1], [0, 0, 1, 1], [], []>} : vector<256x36xf32>, vector<36x8xf32>, vector<256x8xf32> -> vector<256x8xf32>
    %c0_11 = arith.constant 0 : index
    %c0_12 = arith.constant 0 : index
    %19 = vector.load %arg4[%c0_11, %c0_12] : memref<1x8xf32, #tpu.memory_space<vmem>>, vector<1x8xf32>
    %20 = vector.broadcast %19 : vector<1x8xf32> to vector<256x8xf32>
    %21 = arith.addf %18, %20 : vector<256x8xf32>
    %cst_13 = arith.constant 0.000000e+00 : f32
    %22 = vector.broadcast %cst_13 : f32 to vector<256x8xf32>
    %23 = arith.maximumf %21, %22 : vector<256x8xf32>
    %24 = vector.shape_cast %23 : vector<256x8xf32> to vector<1x16x16x8xf32>
    %cst_14 = arith.constant 0.000000e+00 : f32
    %25 = vector.broadcast %cst_14 : f32 to vector<1x1x16x8xf32>
    %26 = tpu.concatenate %25, %24, %25 in 1 : vector<1x1x16x8xf32>, vector<1x16x16x8xf32>, vector<1x1x16x8xf32> -> vector<1x18x16x8xf32>
    %cst_15 = arith.constant 0.000000e+00 : f32
    %27 = vector.broadcast %cst_15 : f32 to vector<1x18x1x8xf32>
    %28 = tpu.concatenate %27, %26, %27 in 2 : vector<1x18x1x8xf32>, vector<1x18x16x8xf32>, vector<1x18x1x8xf32> -> vector<1x18x18x8xf32>
    %cst_16 = arith.constant 0.000000e+00 : f32
    %29 = vector.broadcast %cst_16 : f32 to vector<1x1x16x4xf32>
    %30 = tpu.concatenate %29, %1, %29 in 1 : vector<1x1x16x4xf32>, vector<1x16x16x4xf32>, vector<1x1x16x4xf32> -> vector<1x18x16x4xf32>
    %cst_17 = arith.constant 0.000000e+00 : f32
    %31 = vector.broadcast %cst_17 : f32 to vector<1x18x1x4xf32>
    %32 = tpu.concatenate %31, %30, %31 in 2 : vector<1x18x1x4xf32>, vector<1x18x16x4xf32>, vector<1x18x1x4xf32> -> vector<1x18x18x4xf32>
    %33 = vector.extract_strided_slice %28 {offsets = [0, 0, 0, 0], sizes = [1, 16, 16, 8], strides = [1, 1, 1, 1]} : vector<1x18x18x8xf32> to vector<1x16x16x8xf32>
    %34 = vector.extract_strided_slice %32 {offsets = [0, 0, 0, 0], sizes = [1, 16, 16, 4], strides = [1, 1, 1, 1]} : vector<1x18x18x4xf32> to vector<1x16x16x4xf32>
    %35 = vector.extract_strided_slice %28 {offsets = [0, 0, 1, 0], sizes = [1, 16, 16, 8], strides = [1, 1, 1, 1]} : vector<1x18x18x8xf32> to vector<1x16x16x8xf32>
    %36 = vector.extract_strided_slice %32 {offsets = [0, 0, 1, 0], sizes = [1, 16, 16, 4], strides = [1, 1, 1, 1]} : vector<1x18x18x4xf32> to vector<1x16x16x4xf32>
    %37 = vector.extract_strided_slice %28 {offsets = [0, 0, 2, 0], sizes = [1, 16, 16, 8], strides = [1, 1, 1, 1]} : vector<1x18x18x8xf32> to vector<1x16x16x8xf32>
    %38 = vector.extract_strided_slice %32 {offsets = [0, 0, 2, 0], sizes = [1, 16, 16, 4], strides = [1, 1, 1, 1]} : vector<1x18x18x4xf32> to vector<1x16x16x4xf32>
    %39 = vector.extract_strided_slice %28 {offsets = [0, 1, 0, 0], sizes = [1, 16, 16, 8], strides = [1, 1, 1, 1]} : vector<1x18x18x8xf32> to vector<1x16x16x8xf32>
    %40 = vector.extract_strided_slice %32 {offsets = [0, 1, 0, 0], sizes = [1, 16, 16, 4], strides = [1, 1, 1, 1]} : vector<1x18x18x4xf32> to vector<1x16x16x4xf32>
    %41 = vector.extract_strided_slice %28 {offsets = [0, 1, 1, 0], sizes = [1, 16, 16, 8], strides = [1, 1, 1, 1]} : vector<1x18x18x8xf32> to vector<1x16x16x8xf32>
    %42 = vector.extract_strided_slice %32 {offsets = [0, 1, 1, 0], sizes = [1, 16, 16, 4], strides = [1, 1, 1, 1]} : vector<1x18x18x4xf32> to vector<1x16x16x4xf32>
    %43 = vector.extract_strided_slice %28 {offsets = [0, 1, 2, 0], sizes = [1, 16, 16, 8], strides = [1, 1, 1, 1]} : vector<1x18x18x8xf32> to vector<1x16x16x8xf32>
    %44 = vector.extract_strided_slice %32 {offsets = [0, 1, 2, 0], sizes = [1, 16, 16, 4], strides = [1, 1, 1, 1]} : vector<1x18x18x4xf32> to vector<1x16x16x4xf32>
    %45 = vector.extract_strided_slice %28 {offsets = [0, 2, 0, 0], sizes = [1, 16, 16, 8], strides = [1, 1, 1, 1]} : vector<1x18x18x8xf32> to vector<1x16x16x8xf32>
    %46 = vector.extract_strided_slice %32 {offsets = [0, 2, 0, 0], sizes = [1, 16, 16, 4], strides = [1, 1, 1, 1]} : vector<1x18x18x4xf32> to vector<1x16x16x4xf32>
    %47 = vector.extract_strided_slice %28 {offsets = [0, 2, 1, 0], sizes = [1, 16, 16, 8], strides = [1, 1, 1, 1]} : vector<1x18x18x8xf32> to vector<1x16x16x8xf32>
    %48 = vector.extract_strided_slice %32 {offsets = [0, 2, 1, 0], sizes = [1, 16, 16, 4], strides = [1, 1, 1, 1]} : vector<1x18x18x4xf32> to vector<1x16x16x4xf32>
    %49 = vector.extract_strided_slice %28 {offsets = [0, 2, 2, 0], sizes = [1, 16, 16, 8], strides = [1, 1, 1, 1]} : vector<1x18x18x8xf32> to vector<1x16x16x8xf32>
    %50 = vector.extract_strided_slice %32 {offsets = [0, 2, 2, 0], sizes = [1, 16, 16, 4], strides = [1, 1, 1, 1]} : vector<1x18x18x4xf32> to vector<1x16x16x4xf32>
    %51 = tpu.concatenate %33, %34, %35, %36, %37, %38, %39, %40, %41, %42, %43, %44, %45, %46, %47, %48 in 3 : vector<1x16x16x8xf32>, vector<1x16x16x4xf32>, vector<1x16x16x8xf32>, vector<1x16x16x4xf32>, vector<1x16x16x8xf32>, vector<1x16x16x4xf32>, vector<1x16x16x8xf32>, vector<1x16x16x4xf32>, vector<1x16x16x8xf32>, vector<1x16x16x4xf32>, vector<1x16x16x8xf32>, vector<1x16x16x4xf32>, vector<1x16x16x8xf32>, vector<1x16x16x4xf32>, vector<1x16x16x8xf32>, vector<1x16x16x4xf32> -> vector<1x16x16x96xf32>
    %52 = tpu.concatenate %49, %50 in 3 : vector<1x16x16x8xf32>, vector<1x16x16x4xf32> -> vector<1x16x16x12xf32>
    %53 = tpu.concatenate %51, %52 in 3 : vector<1x16x16x96xf32>, vector<1x16x16x12xf32> -> vector<1x16x16x108xf32>
    %54 = vector.shape_cast %53 : vector<1x16x16x108xf32> to vector<256x108xf32>
    %c0_18 = arith.constant 0 : index
    %c0_19 = arith.constant 0 : index
    %55 = vector.load %arg5[%c0_18, %c0_19] : memref<108x4xf32, #tpu.memory_space<vmem>>, vector<108x4xf32>
    %cst_20 = arith.constant dense<0.000000e+00> : vector<256x4xf32>
    %56 = tpu.matmul %54, %55, %cst_20 {dimension_numbers = #tpu.dot_dimension_numbers<[1], [0], [0], [1], [0, 0, 1, 1], [], []>} : vector<256x108xf32>, vector<108x4xf32>, vector<256x4xf32> -> vector<256x4xf32>
    %c0_21 = arith.constant 0 : index
    %c0_22 = arith.constant 0 : index
    %57 = vector.load %arg6[%c0_21, %c0_22] : memref<1x4xf32, #tpu.memory_space<vmem>>, vector<1x4xf32>
    %58 = vector.broadcast %57 : vector<1x4xf32> to vector<256x4xf32>
    %59 = arith.addf %56, %58 : vector<256x4xf32>
    %cst_23 = arith.constant 0.000000e+00 : f32
    %60 = vector.broadcast %cst_23 : f32 to vector<256x4xf32>
    %61 = arith.maximumf %59, %60 : vector<256x4xf32>
    %62 = vector.shape_cast %61 : vector<256x4xf32> to vector<1x16x16x4xf32>
    %c0_24 = arith.constant 0 : index
    %c0_25 = arith.constant 0 : index
    %c0_26 = arith.constant 0 : index
    %c0_27 = arith.constant 0 : index
    %63 = vector.load %arg7[%c0_24, %c0_25, %c0_26, %c0_27] : memref<1x16x16x4xf32, #tpu.memory_space<vmem>>, vector<1x16x16x4xf32>
    tpu.vector_store %arg7[%c0_24, %c0_25, %c0_26, %c0_27], %62 {strides = array<i32>} : memref<1x16x16x4xf32, #tpu.memory_space<vmem>>, vector<1x16x16x4xf32>,
    return
  }
  func.func @transform_0(%arg0: i32) -> (i32, i32, i32, i32) {
    %c0_i32 = arith.constant 0 : i32
    %c0_i32_0 = arith.constant 0 : i32
    %c0_i32_1 = arith.constant 0 : i32
    %c0_i32_2 = arith.constant 0 : i32
    return %arg0, %c0_i32, %c0_i32_0, %c0_i32_1 : i32, i32, i32, i32
  }
  func.func @transform_1(%arg0: i32) -> (i32, i32, i32, i32) {
    %c0_i32 = arith.constant 0 : i32
    %c0_i32_0 = arith.constant 0 : i32
    %c0_i32_1 = arith.constant 0 : i32
    %c0_i32_2 = arith.constant 0 : i32
    return %arg0, %c0_i32, %c0_i32_0, %c0_i32_1 : i32, i32, i32, i32
  }
  func.func @transform_2(%arg0: i32) -> (i32, i32) {
    %c0_i32 = arith.constant 0 : i32
    %c0_i32_0 = arith.constant 0 : i32
    %c0_i32_1 = arith.constant 0 : i32
    return %c0_i32, %c0_i32_0 : i32, i32
  }
  func.func @transform_3(%arg0: i32) -> (i32, i32) {
    %c0_i32 = arith.constant 0 : i32
    %c0_i32_0 = arith.constant 0 : i32
    %c0_i32_1 = arith.constant 0 : i32
    return %c0_i32, %c0_i32_0 : i32, i32
  }
  func.func @transform_4(%arg0: i32) -> (i32, i32) {
    %c0_i32 = arith.constant 0 : i32
    %c0_i32_0 = arith.constant 0 : i32
    %c0_i32_1 = arith.constant 0 : i32
    return %c0_i32, %c0_i32_0 : i32, i32
  }
  func.func @transform_5(%arg0: i32) -> (i32, i32) {
    %c0_i32 = arith.constant 0 : i32
    %c0_i32_0 = arith.constant 0 : i32
    %c0_i32_1 = arith.constant 0 : i32
    return %c0_i32, %c0_i32_0 : i32, i32
  }
  func.func @transform_6(%arg0: i32) -> (i32, i32, i32, i32) {
    %c0_i32 = arith.constant 0 : i32
    %c0_i32_0 = arith.constant 0 : i32
    %c0_i32_1 = arith.constant 0 : i32
    %c0_i32_2 = arith.constant 0 : i32
    return %arg0, %c0_i32, %c0_i32_0, %c0_i32_1 : i32, i32, i32, i32
  }
}

</mosaic_0001>

<llo_original>
// kernel: decode_layer_forward.1
$region0: #{decode_layer_forward.1}
  #allocation0 [shape = 'u32[]', space=smem, size = 0x4, offset = 0x4, fixed_abs, tag = 'smem constant byte address 0x4 - core index']
  #allocation1 [shape = 'u32[144,128]{1,0:T(1,128)}', space=vmem, size = 0x12000, scoped, tag = 'internal scratch']
  %s0 = inlined_call_operand.vmem [shape: f32[2,16,16,4], index: 0, kind: input, shape index: {}]
  %s1 = inlined_call_operand.vmem [shape: f32[2,16,16,4], index: 1, kind: input, shape index: {}]
  %s2 = inlined_call_operand.vmem [shape: f32[36,8], index: 2, kind: input, shape index: {}]
  %s3 = inlined_call_operand.vmem [shape: f32[1,8], index: 3, kind: input, shape index: {}]
  %s4 = inlined_call_operand.vmem [shape: f32[108,4], index: 4, kind: input, shape index: {}]
  %s5 = inlined_call_operand.vmem [shape: f32[1,4], index: 5, kind: input, shape index: {}]
  %s6 = inlined_call_operand.vmem [shape: f32[2,16,16,4], index: 6, kind: output, shape index: {}]
  %s7 = sld [smem:[#allocation0]]
  $region57: #{decode_layer_forward.1} parent=0
    _
  %s9 = ssub.s32 1, %s7
  %s10 = scalar_select 0, %s9, %s7
  loop: start=0, step=1, limit=4
  $region2: #{decode_layer_forward.1} parent=0 // loop_pre_header
    _
  $region3: #{decode_layer_forward.1} parent=0 // loop_header
    %s12 = sphi 0, %s16
    %p13 = scmp.ge.s32.totalorder %s12, 4
    %s22 = sphi 0, %s24
    %s25 = sphi 0, %s22
    %s26 = sphi 0, %s25
    %s42 = sphi 0, %s26
    %s48 = sphi 0, %s50
    %s51 = sphi 0, %s48
    %s52 = sphi 0, %s51
    %s68 = sphi 0, %s52
    %s72 = sphi 0, %s72
    %s74 = sphi 0, %s72
    %s75 = sphi 0, %s74
    %s89 = sphi 0, %s75
    %s93 = sphi 0, %s93
    %s95 = sphi 0, %s93
    %s96 = sphi 0, %s95
    %s110 = sphi 0, %s96
    %s114 = sphi 0, %s114
    %s116 = sphi 0, %s114
    %s117 = sphi 0, %s116
    %s131 = sphi 0, %s117
    %s135 = sphi 0, %s135
    %s137 = sphi 0, %s135
    %s138 = sphi 0, %s137
    %s152 = sphi 0, %s138
    %s158 = sphi 0, %s160
    %s161 = sphi 0, %s158
    %s162 = sphi 0, %s161
    %s178 = sphi 0, %s162
  $region4: #{decode_layer_forward.1} parent=0 // loop_header_branch
    %15 = sbr.rel (%p13) target = $region8
  $region5: #{decode_layer_forward.1} parent=0 // loop_body
    %s17 = ssub.s32 %s12, 1
    %s18 = ssub.s32 %s12, 2
    %s19 = sadd.s32 %s12, 1
    %s20 = ssub.s32 %s12, %s19
    %p21 = scmp.eq.s32.totalorder %s20, 0
    %s23 = sadd.s32 %s22, 1
    %s24 = scalar_select %p21, %s22, %s23
    %p27 = pneg %p21
    %p28 = scmp.eq.s32.totalorder %s12, 1
    %p29 = por %p27, %p28
    %p30 = scmp.ne.s32.totalorder %s22, %s25
    %p31 = scmp.eq.s32.totalorder %s12, 0
    %p32 = por %p30, %p31
    %p33 = scmp.ne.s32.totalorder %s22, %s25
    %p34 = scmp.eq.s32.totalorder %s17, 1
    %p35 = por %p33, %p34
    %p36 = scmp.ne.s32.totalorder %s25, %s26
    %p37 = scmp.eq.s32.totalorder %s17, 0
    %p38 = por %p36, %p37
    %p39 = scmp.ne.s32.totalorder %s25, %s26
    %p40 = scmp.eq.s32.totalorder %s18, 1
    %p41 = por %p39, %p40
    %p43 = scmp.ne.s32.totalorder %s26, %s42
    %p44 = scmp.eq.s32.totalorder %s18, 0
    %p45 = por %p43, %p44
    %s46 = ssub.s32 %s12, %s19
    %p47 = scmp.eq.s32.totalorder %s46, 0
    %s49 = sadd.s32 %s48, 1
    %s50 = scalar_select %p47, %s48, %s49
    %p53 = pneg %p47
    %p54 = scmp.eq.s32.totalorder %s12, 1
    %p55 = por %p53, %p54
    %p56 = scmp.ne.s32.totalorder %s48, %s51
    %p57 = scmp.eq.s32.totalorder %s12, 0
    %p58 = por %p56, %p57
    %p59 = scmp.ne.s32.totalorder %s48, %s51
    %p60 = scmp.eq.s32.totalorder %s17, 1
    %p61 = por %p59, %p60
    %p62 = scmp.ne.s32.totalorder %s51, %s52
    %p63 = scmp.eq.s32.totalorder %s17, 0
    %p64 = por %p62, %p63
    %p65 = scmp.ne.s32.totalorder %s51, %s52
    %p66 = scmp.eq.s32.totalorder %s18, 1
    %p67 = por %p65, %p66
    %p69 = scmp.ne.s32.totalorder %s52, %s68
    %p70 = scmp.eq.s32.totalorder %s18, 0
    %p71 = por %p69, %p70
    %s73 = sadd.s32 %s72, 1
    %p76 = scmp.eq.s32.totalorder %s12, 1
    %p77 = scmp.ne.s32.totalorder %s72, %s74
    %p78 = scmp.eq.s32.totalorder %s12, 0
    %p79 = por %p77, %p78
    %p80 = scmp.ne.s32.totalorder %s72, %s74
    %p81 = scmp.eq.s32.totalorder %s17, 1
    %p82 = por %p80, %p81
    %p83 = scmp.ne.s32.totalorder %s74, %s75
    %p84 = scmp.eq.s32.totalorder %s17, 0
    %p85 = por %p83, %p84
    %p86 = scmp.ne.s32.totalorder %s74, %s75
    %p87 = scmp.eq.s32.totalorder %s18, 1
    %p88 = por %p86, %p87
    %p90 = scmp.ne.s32.totalorder %s75, %s89
    %p91 = scmp.eq.s32.totalorder %s18, 0
    %p92 = por %p90, %p91
    %s94 = sadd.s32 %s93, 1
    %p97 = scmp.eq.s32.totalorder %s12, 1
    %p98 = scmp.ne.s32.totalorder %s93, %s95
    %p99 = scmp.eq.s32.totalorder %s12, 0
    %p100 = por %p98, %p99
    %p101 = scmp.ne.s32.totalorder %s93, %s95
    %p102 = scmp.eq.s32.totalorder %s17, 1
    %p103 = por %p101, %p102
    %p104 = scmp.ne.s32.totalorder %s95, %s96
    %p105 = scmp.eq.s32.totalorder %s17, 0
    %p106 = por %p104, %p105
    %p107 = scmp.ne.s32.totalorder %s95, %s96
    %p108 = scmp.eq.s32.totalorder %s18, 1
    %p109 = por %p107, %p108
    %p111 = scmp.ne.s32.totalorder %s96, %s110
    %p112 = scmp.eq.s32.totalorder %s18, 0
    %p113 = por %p111, %p112
    %s115 = sadd.s32 %s114, 1
    %p118 = scmp.eq.s32.totalorder %s12, 1
    %p119 = scmp.ne.s32.totalorder %s114, %s116
    %p120 = scmp.eq.s32.totalorder %s12, 0
    %p121 = por %p119, %p120
    %p122 = scmp.ne.s32.totalorder %s114, %s116
    %p123 = scmp.eq.s32.totalorder %s17, 1
    %p124 = por %p122, %p123
    %p125 = scmp.ne.s32.totalorder %s116, %s117
    %p126 = scmp.eq.s32.totalorder %s17, 0
    %p127 = por %p125, %p126
    %p128 = scmp.ne.s32.totalorder %s116, %s117
    %p129 = scmp.eq.s32.totalorder %s18, 1
    %p130 = por %p128, %p129
    %p132 = scmp.ne.s32.totalorder %s117, %s131
    %p133 = scmp.eq.s32.totalorder %s18, 0
    %p134 = por %p132, %p133
    %s136 = sadd.s32 %s135, 1
    %p139 = scmp.eq.s32.totalorder %s12, 1
    %p140 = scmp.ne.s32.totalorder %s135, %s137
    %p141 = scmp.eq.s32.totalorder %s12, 0
    %p142 = por %p140, %p141
    %p143 = scmp.ne.s32.totalorder %s135, %s137
    %p144 = scmp.eq.s32.totalorder %s17, 1
    %p145 = por %p143, %p144
    %p146 = scmp.ne.s32.totalorder %s137, %s138
    %p147 = scmp.eq.s32.totalorder %s17, 0
    %p148 = por %p146, %p147
    %p149 = scmp.ne.s32.totalorder %s137, %s138
    %p150 = scmp.eq.s32.totalorder %s18, 1
    %p151 = por %p149, %p150
    %p153 = scmp.ne.s32.totalorder %s138, %s152
    %p154 = scmp.eq.s32.totalorder %s18, 0
    %p155 = por %p153, %p154
    %s156 = ssub.s32 %s12, %s19
    %p157 = scmp.eq.s32.totalorder %s156, 0
    %s159 = sadd.s32 %s158, 1
    %s160 = scalar_select %p157, %s158, %s159
    %p163 = pneg %p157
    %p164 = scmp.eq.s32.totalorder %s12, 1
    %p165 = por %p163, %p164
    %p166 = scmp.ne.s32.totalorder %s158, %s161
    %p167 = scmp.eq.s32.totalorder %s12, 0
    %p168 = por %p166, %p167
    %p169 = scmp.ne.s32.totalorder %s158, %s161
    %p170 = scmp.eq.s32.totalorder %s17, 1
    %p171 = por %p169, %p170
    %p172 = scmp.ne.s32.totalorder %s161, %s162
    %p173 = scmp.eq.s32.totalorder %s17, 0
    %p174 = por %p172, %p173
    %p175 = scmp.ne.s32.totalorder %s161, %s162
    %p176 = scmp.eq.s32.totalorder %s18, 1
    %p177 = por %p175, %p176
    %p179 = scmp.ne.s32.totalorder %s162, %s178
    %p180 = scmp.eq.s32.totalorder %s18, 0
    %p181 = por %p179, %p180
    %p182 = scmp.le.s32.totalorder 1, %s12
    %p183 = scmp.lt.s32.totalorder %s12, 3
    %p184 = pnand %p182, %p183
    %p185 = pneg %p184
    // Predicated region
    $region9: #{decode_layer_forward.1} parent=5 // pred_check
      _
    $region10: #{decode_layer_forward.1} parent=5 // pred_check_branch
      %187 = sbr.rel (%p184) target = $region12
    $region11: #{decode_layer_forward.1} parent=5 // pred_region
      %s188 = ssub.s32 %s12, 1
      // Predicated region
      $region13: #{decode_layer_forward.1} parent=11 // pred_check
        %p189 = pneg %p85
      $region14: #{decode_layer_forward.1} parent=11 // pred_check_branch
        %191 = sbr.rel (%p189) target = $region16
      $region15: #{decode_layer_forward.1} parent=11 // pred_region
        _
      $region16: #{decode_layer_forward.1} parent=11 // pred_fallthru
        _
      // Predicated region
      $region17: #{decode_layer_forward.1} parent=11 // pred_check
        %p192 = pneg %p106
      $region18: #{decode_layer_forward.1} parent=11 // pred_check_branch
        %194 = sbr.rel (%p192) target = $region20
      $region19: #{decode_layer_forward.1} parent=11 // pred_region
        _
      $region20: #{decode_layer_forward.1} parent=11 // pred_fallthru
        _
      // Predicated region
      $region21: #{decode_layer_forward.1} parent=11 // pred_check
        %p195 = pneg %p127
      $region22: #{decode_layer_forward.1} parent=11 // pred_check_branch
        %197 = sbr.rel (%p195) target = $region24
      $region23: #{decode_layer_forward.1} parent=11 // pred_region
        _
      $region24: #{decode_layer_forward.1} parent=11 // pred_fallthru
        _
      // Predicated region
      $region25: #{decode_layer_forward.1} parent=11 // pred_check
        %p198 = pneg %p148
      $region26: #{decode_layer_forward.1} parent=11 // pred_check_branch
        %200 = sbr.rel (%p198) target = $region28
      $region27: #{decode_layer_forward.1} parent=11 // pred_region
        _
      $region28: #{decode_layer_forward.1} parent=11 // pred_fallthru
        _
    $region12: #{decode_layer_forward.1} parent=5 // pred_fallthru
      _
    %p201 = scmp.lt.s32.totalorder %s12, 2
    // Predicated region
    $region29: #{decode_layer_forward.1} parent=5 // pred_check
      %p202 = pneg %p201
    $region30: #{decode_layer_forward.1} parent=5 // pred_check_branch
      %204 = sbr.rel (%p202) target = $region32
    $region31: #{decode_layer_forward.1} parent=5 // pred_region
      // Predicated region
      $region33: #{decode_layer_forward.1} parent=31 // pred_check
        %p205 = pneg %p32
      $region34: #{decode_layer_forward.1} parent=31 // pred_check_branch
        %207 = sbr.rel (%p205) target = $region36
      $region35: #{decode_layer_forward.1} parent=31 // pred_region
        %p208 = scmp.lt.s32.totalorder %s12, 1
        %s209 = scalar_select %p208, %s12, 1
        %s210 = smul.addr %s209, 32
        %s211 = smul.addr %s210, 8
        %s212 = scalar_lea.vmem %s0, %s211
      $region36: #{decode_layer_forward.1} parent=31 // pred_fallthru
        _
      // Predicated region
      $region37: #{decode_layer_forward.1} parent=31 // pred_check
        %p213 = pneg %p58
      $region38: #{decode_layer_forward.1} parent=31 // pred_check_branch
        %215 = sbr.rel (%p213) target = $region40
      $region39: #{decode_layer_forward.1} parent=31 // pred_region
        %p216 = scmp.lt.s32.totalorder %s12, 1
        %s217 = scalar_select %p216, %s12, 1
        %s218 = smul.addr %s217, 32
        %s219 = smul.addr %s218, 8
        %s220 = scalar_lea.vmem %s1, %s219
      $region40: #{decode_layer_forward.1} parent=31 // pred_fallthru
        _
    $region32: #{decode_layer_forward.1} parent=5 // pred_fallthru
      _
    %p221 = scmp.le.s32.totalorder 1, %s12
    %p222 = scmp.lt.s32.totalorder %s12, 3
    %p223 = pnand %p221, %p222
    %p224 = pneg %p223
    // Predicated region
    $region41: #{decode_layer_forward.1} parent=5 // pred_check
      _
    $region42: #{decode_layer_forward.1} parent=5 // pred_check_branch
      %226 = sbr.rel (%p223) target = $region44
    $region43: #{decode_layer_forward.1} parent=5 // pred_region
      %s227 = ssub.s32 %s12, 1
      %p228 = scmp.lt.s32.totalorder %s17, 1
      %s229 = scalar_select %p228, %s17, 1
      %s230 = smul.addr %s229, 32
      %s231 = smul.addr %s230, 8
      %s232 = scalar_lea.vmem %s0, %s231
      %p233 = pneg %p38
      %p234 = pneg %p35
      %p235 = scmp.lt.s32.totalorder %s17, 1
      %s236 = scalar_select %p235, %s17, 1
      %s237 = smul.addr %s236, 32
      %s238 = smul.addr %s237, 8
      %s239 = scalar_lea.vmem %s1, %s238
      %p240 = pneg %p64
      %p241 = pneg %p61
      %p242 = pneg %p85
      %p243 = pneg %p82
      %p244 = pneg %p106
      %p245 = pneg %p103
      %p246 = pneg %p127
      %p247 = pneg %p124
      %p248 = pneg %p148
      %p249 = pneg %p145
      %p250 = pneg %p174
      %p251 = pneg %p171
      %p252 = scmp.lt.s32.totalorder %s17, 1
      %s253 = scalar_select %p252, %s17, 1
      %s254 = smul.addr %s253, 32
      %s255 = smul.addr %s254, 8
      %s256 = scalar_lea.vmem %s6, %s255
      %p257 = scmp.lt.s32.totalorder %s17, 1
      %s258 = scalar_select %p257, %s17, 1
      %s259 = smul.addr %s258, 32
      %s260 = smul.addr %s259, 8
      %s261 = scalar_lea.vmem %s0, %s260
      %p262 = scmp.lt.s32.totalorder %s17, 1
      %s263 = scalar_select %p262, %s17, 1
      %s264 = smul.addr %s263, 32
      %s265 = smul.addr %s264, 8
      %s266 = scalar_lea.vmem %s1, %s265
      %p267 = scmp.lt.s32.totalorder %s17, 1
      %s268 = scalar_select %p267, %s17, 1
      %s269 = smul.addr %s268, 32
      %s270 = smul.addr %s269, 8
      %s271 = scalar_lea.vmem %s6, %s270
      %v272 = vld [vmem:[%s261] sm:$0xff]
      %v273 = vld [vmem:[%s261 + $0x8] sm:$0xff]
      %v274 = vld [vmem:[%s261 + $0x10] sm:$0xff]
      %v275 = vld [vmem:[%s261 + $0x18] sm:$0xff]
      %v276 = vld [vmem:[%s261 + $0x20] sm:$0xff]
      %v277 = vld [vmem:[%s261 + $0x28] sm:$0xff]
      %v278 = vld [vmem:[%s261 + $0x30] sm:$0xff]
      %v279 = vld [vmem:[%s261 + $0x38] sm:$0xff]
      %v280 = vld [vmem:[%s261 + $0x40] sm:$0xff]
      %v281 = vld [vmem:[%s261 + $0x48] sm:$0xff]
      %v282 = vld [vmem:[%s261 + $0x50] sm:$0xff]
      %v283 = vld [vmem:[%s261 + $0x58] sm:$0xff]
      %v284 = vld [vmem:[%s261 + $0x60] sm:$0xff]
      %v285 = vld [vmem:[%s261 + $0x68] sm:$0xff]
      %v286 = vld [vmem:[%s261 + $0x70] sm:$0xff]
      %v287 = vld [vmem:[%s261 + $0x78] sm:$0xff]
      %v288 = vld [vmem:[%s261 + $0x80] sm:$0xff]
      %v289 = vld [vmem:[%s261 + $0x88] sm:$0xff]
      %v290 = vld [vmem:[%s261 + $0x90] sm:$0xff]
      %v291 = vld [vmem:[%s261 + $0x98] sm:$0xff]
      %v292 = vld [vmem:[%s261 + $0xa0] sm:$0xff]
      %v293 = vld [vmem:[%s261 + $0xa8] sm:$0xff]
      %v294 = vld [vmem:[%s261 + $0xb0] sm:$0xff]
      %v295 = vld [vmem:[%s261 + $0xb8] sm:$0xff]
      %v296 = vld [vmem:[%s261 + $0xc0] sm:$0xff]
      %v297 = vld [vmem:[%s261 + $0xc8] sm:$0xff]
      %v298 = vld [vmem:[%s261 + $0xd0] sm:$0xff]
      %v299 = vld [vmem:[%s261 + $0xd8] sm:$0xff]
      %v300 = vld [vmem:[%s261 + $0xe0] sm:$0xff]
      %v301 = vld [vmem:[%s261 + $0xe8] sm:$0xff]
      %v302 = vld [vmem:[%s261 + $0xf0] sm:$0xff]
      %v303 = vld [vmem:[%s261 + $0xf8] sm:$0xff]
      %v304 = vld [vmem:[%s266] sm:$0xff]
      %v305 = vld [vmem:[%s266 + $0x8] sm:$0xff]
      %v306 = vld [vmem:[%s266 + $0x10] sm:$0xff]
      %v307 = vld [vmem:[%s266 + $0x18] sm:$0xff]
      %v308 = vld [vmem:[%s266 + $0x20] sm:$0xff]
      %v309 = vld [vmem:[%s266 + $0x28] sm:$0xff]
      %v310 = vld [vmem:[%s266 + $0x30] sm:$0xff]
      %v311 = vld [vmem:[%s266 + $0x38] sm:$0xff]
      %v312 = vld [vmem:[%s266 + $0x40] sm:$0xff]
      %v313 = vld [vmem:[%s266 + $0x48] sm:$0xff]
      %v314 = vld [vmem:[%s266 + $0x50] sm:$0xff]
      %v315 = vld [vmem:[%s266 + $0x58] sm:$0xff]
      %v316 = vld [vmem:[%s266 + $0x60] sm:$0xff]
      %v317 = vld [vmem:[%s266 + $0x68] sm:$0xff]
      %v318 = vld [vmem:[%s266 + $0x70] sm:$0xff]
      %v319 = vld [vmem:[%s266 + $0x78] sm:$0xff]
      %v320 = vld [vmem:[%s266 + $0x80] sm:$0xff]
      %v321 = vld [vmem:[%s266 + $0x88] sm:$0xff]
      %v322 = vld [vmem:[%s266 + $0x90] sm:$0xff]
      %v323 = vld [vmem:[%s266 + $0x98] sm:$0xff]
      %v324 = vld [vmem:[%s266 + $0xa0] sm:$0xff]
      %v325 = vld [vmem:[%s266 + $0xa8] sm:$0xff]
      %v326 = vld [vmem:[%s266 + $0xb0] sm:$0xff]
      %v327 = vld [vmem:[%s266 + $0xb8] sm:$0xff]
      %v328 = vld [vmem:[%s266 + $0xc0] sm:$0xff]
      %v329 = vld [vmem:[%s266 + $0xc8] sm:$0xff]
      %v330 = vld [vmem:[%s266 + $0xd0] sm:$0xff]
      %v331 = vld [vmem:[%s266 + $0xd8] sm:$0xff]
      %v332 = vld [vmem:[%s266 + $0xe0] sm:$0xff]
      %v333 = vld [vmem:[%s266 + $0xe8] sm:$0xff]
      %v334 = vld [vmem:[%s266 + $0xf0] sm:$0xff]
      %v335 = vld [vmem:[%s266 + $0xf8] sm:$0xff]
      %vm369 = vcmask 1040384
      %v370 = vrot.slane 0.0, 7
      %v371 = vsel %vm369, %v370, %v370
      %v372 = vrot.slane %v272, 7
      %v373 = vrot.slane %v273, 7
      %v374 = vsel %vm369, %v372, %v373
      %v375 = vrot.slane %v274, 7
      %v376 = vrot.slane %v275, 7
      %v377 = vsel %vm369, %v375, %v376
      %v378 = vrot.slane %v276, 7
      %v379 = vrot.slane %v277, 7
      %v380 = vsel %vm369, %v378, %v379
      %v381 = vrot.slane %v278, 7
      %v382 = vrot.slane %v279, 7
      %v383 = vsel %vm369, %v381, %v382
      %v384 = vrot.slane %v280, 7
      %v385 = vrot.slane %v281, 7
      %v386 = vsel %vm369, %v384, %v385
      %v387 = vrot.slane %v282, 7
      %v388 = vrot.slane %v283, 7
      %v389 = vsel %vm369, %v387, %v388
      %v390 = vrot.slane %v284, 7
      %v391 = vrot.slane %v285, 7
      %v392 = vsel %vm369, %v390, %v391
      %v393 = vrot.slane %v286, 7
      %v394 = vrot.slane %v287, 7
      %v395 = vsel %vm369, %v393, %v394
      %v396 = vrot.slane %v288, 7
      %v397 = vrot.slane %v289, 7
      %v398 = vsel %vm369, %v396, %v397
      %v399 = vrot.slane %v290, 7
      %v400 = vrot.slane %v291, 7
      %v401 = vsel %vm369, %v399, %v400
      %v402 = vrot.slane %v292, 7
      %v403 = vrot.slane %v293, 7
      %v404 = vsel %vm369, %v402, %v403
      %v405 = vrot.slane %v294, 7
      %v406 = vrot.slane %v295, 7
      %v407 = vsel %vm369, %v405, %v406
      %v408 = vrot.slane %v296, 7
      %v409 = vrot.slane %v297, 7
      %v410 = vsel %vm369, %v408, %v409
      %v411 = vrot.slane %v298, 7
      %v412 = vrot.slane %v299, 7
      %v413 = vsel %vm369, %v411, %v412
      %v414 = vrot.slane %v300, 7
      %v415 = vrot.slane %v301, 7
      %v416 = vsel %vm369, %v414, %v415
      %v417 = vrot.slane %v302, 7
      %v418 = vrot.slane %v303, 7
      %v419 = vsel %vm369, %v417, %v418
      %v469 = vsel %vm369, 0.0, %v370
      %v470 = vsel %vm369, 0.0, %v372
      %v471 = vsel %vm369, 0.0, %v375
      %v472 = vsel %vm369, 0.0, %v378
      %v473 = vsel %vm369, 0.0, %v381
      %v474 = vsel %vm369, 0.0, %v384
      %v475 = vsel %vm369, 0.0, %v387
      %v476 = vsel %vm369, 0.0, %v390
      %v477 = vsel %vm369, 0.0, %v393
      %v478 = vsel %vm369, 0.0, %v396
      %v479 = vsel %vm369, 0.0, %v399
      %v480 = vsel %vm369, 0.0, %v402
      %v481 = vsel %vm369, 0.0, %v405
      %v482 = vsel %vm369, 0.0, %v408
      %v483 = vsel %vm369, 0.0, %v411
      %v484 = vsel %vm369, 0.0, %v414
      %v485 = vsel %vm369, 0.0, %v417
      %v486 = vsel %vm369, %v370, 0.0
      %v487 = vsel %vm369, %v373, 0.0
      %v488 = vsel %vm369, %v376, 0.0
      %v489 = vsel %vm369, %v379, 0.0
      %v490 = vsel %vm369, %v382, 0.0
      %v491 = vsel %vm369, %v385, 0.0
      %v492 = vsel %vm369, %v388, 0.0
      %v493 = vsel %vm369, %v391, 0.0
      %v494 = vsel %vm369, %v394, 0.0
      %v495 = vsel %vm369, %v397, 0.0
      %v496 = vsel %vm369, %v400, 0.0
      %v497 = vsel %vm369, %v403, 0.0
      %v498 = vsel %vm369, %v406, 0.0
      %v499 = vsel %vm369, %v409, 0.0
      %v500 = vsel %vm369, %v412, 0.0
      %v501 = vsel %vm369, %v415, 0.0
      %v502 = vsel %vm369, %v418, 0.0
      %vm535 = vcmask 1046528
      %v536 = vrot.slane %v469, 1
      %v537 = vrot.slane %v371, 1
      %v538 = vsel %vm535, %v536, %v537
      %v539 = vrot.slane %v486, 1
      %v540 = vsel %vm535, %v537, %v539
      %v541 = vrot.slane %v470, 1
      %v542 = vrot.slane %v374, 1
      %v543 = vsel %vm535, %v541, %v542
      %v544 = vrot.slane %v487, 1
      %v545 = vsel %vm535, %v542, %v544
      %v546 = vrot.slane %v471, 1
      %v547 = vrot.slane %v377, 1
      %v548 = vsel %vm535, %v546, %v547
      %v549 = vrot.slane %v488, 1
      %v550 = vsel %vm535, %v547, %v549
      %v551 = vrot.slane %v472, 1
      %v552 = vrot.slane %v380, 1
      %v553 = vsel %vm535, %v551, %v552
      %v554 = vrot.slane %v489, 1
      %v555 = vsel %vm535, %v552, %v554
      %v556 = vrot.slane %v473, 1
      %v557 = vrot.slane %v383, 1
      %v558 = vsel %vm535, %v556, %v557
      %v559 = vrot.slane %v490, 1
      %v560 = vsel %vm535, %v557, %v559
      %v561 = vrot.slane %v474, 1
      %v562 = vrot.slane %v386, 1
      %v563 = vsel %vm535, %v561, %v562
      %v564 = vrot.slane %v491, 1
      %v565 = vsel %vm535, %v562, %v564
      %v566 = vrot.slane %v475, 1
      %v567 = vrot.slane %v389, 1
      %v568 = vsel %vm535, %v566, %v567
      %v569 = vrot.slane %v492, 1
      %v570 = vsel %vm535, %v567, %v569
      %v571 = vrot.slane %v476, 1
      %v572 = vrot.slane %v392, 1
      %v573 = vsel %vm535, %v571, %v572
      %v574 = vrot.slane %v493, 1
      %v575 = vsel %vm535, %v572, %v574
      %v576 = vrot.slane %v477, 1
      %v577 = vrot.slane %v395, 1
      %v578 = vsel %vm535, %v576, %v577
      %v579 = vrot.slane %v494, 1
      %v580 = vsel %vm535, %v577, %v579
      %v581 = vrot.slane %v478, 1
      %v582 = vrot.slane %v398, 1
      %v583 = vsel %vm535, %v581, %v582
      %v584 = vrot.slane %v495, 1
      %v585 = vsel %vm535, %v582, %v584
      %v586 = vrot.slane %v479, 1
      %v587 = vrot.slane %v401, 1
      %v588 = vsel %vm535, %v586, %v587
      %v589 = vrot.slane %v496, 1
      %v590 = vsel %vm535, %v587, %v589
      %v591 = vrot.slane %v480, 1
      %v592 = vrot.slane %v404, 1
      %v593 = vsel %vm535, %v591, %v592
      %v594 = vrot.slane %v497, 1
      %v595 = vsel %vm535, %v592, %v594
      %v596 = vrot.slane %v481, 1
      %v597 = vrot.slane %v407, 1
      %v598 = vsel %vm535, %v596, %v597
      %v599 = vrot.slane %v498, 1
      %v600 = vsel %vm535, %v597, %v599
      %v601 = vrot.slane %v482, 1
      %v602 = vrot.slane %v410, 1
      %v603 = vsel %vm535, %v601, %v602
      %v604 = vrot.slane %v499, 1
      %v605 = vsel %vm535, %v602, %v604
      %v606 = vrot.slane %v483, 1
      %v607 = vrot.slane %v413, 1
      %v608 = vsel %vm535, %v606, %v607
      %v609 = vrot.slane %v500, 1
      %v610 = vsel %vm535, %v607, %v609
      %v611 = vrot.slane %v484, 1
      %v612 = vrot.slane %v416, 1
      %v613 = vsel %vm535, %v611, %v612
      %v614 = vrot.slane %v501, 1
      %v615 = vsel %vm535, %v612, %v614
      %616 = vrot.lane.b32.xlu0 %v538, 4
      %v617 = vpop.permute.xlu0 %616
      %618 = vrot.lane.b32.xlu0 %v540, 4
      %v619 = vpop.permute.xlu0 %618
      %620 = vrot.lane.b32.xlu0 %v543, 4
      %v621 = vpop.permute.xlu0 %620
      %622 = vrot.lane.b32.xlu0 %v545, 4
      %v623 = vpop.permute.xlu0 %622
      %624 = vrot.lane.b32.xlu0 %v548, 4
      %v625 = vpop.permute.xlu0 %624
      %626 = vrot.lane.b32.xlu0 %v550, 4
      %v627 = vpop.permute.xlu0 %626
      %628 = vrot.lane.b32.xlu0 %v553, 4
      %v629 = vpop.permute.xlu0 %628
      %630 = vrot.lane.b32.xlu0 %v555, 4
      %v631 = vpop.permute.xlu0 %630
      %632 = vrot.lane.b32.xlu0 %v558, 4
      %v633 = vpop.permute.xlu0 %632
      %634 = vrot.lane.b32.xlu0 %v560, 4
      %v635 = vpop.permute.xlu0 %634
      %636 = vrot.lane.b32.xlu0 %v563, 4
      %v637 = vpop.permute.xlu0 %636
      %638 = vrot.lane.b32.xlu0 %v565, 4
      %v639 = vpop.permute.xlu0 %638
      %640 = vrot.lane.b32.xlu0 %v568, 4
      %v641 = vpop.permute.xlu0 %640
      %642 = vrot.lane.b32.xlu0 %v570, 4
      %v643 = vpop.permute.xlu0 %642
      %644 = vrot.lane.b32.xlu0 %v573, 4
      %v645 = vpop.permute.xlu0 %644
      %646 = vrot.lane.b32.xlu0 %v575, 4
      %v647 = vpop.permute.xlu0 %646
      %648 = vrot.lane.b32.xlu0 %v578, 4
      %v649 = vpop.permute.xlu0 %648
      %650 = vrot.lane.b32.xlu0 %v580, 4
      %v651 = vpop.permute.xlu0 %650
      %652 = vrot.lane.b32.xlu0 %v583, 4
      %v653 = vpop.permute.xlu0 %652
      %654 = vrot.lane.b32.xlu0 %v585, 4
      %v655 = vpop.permute.xlu0 %654
      %656 = vrot.lane.b32.xlu0 %v588, 4
      %v657 = vpop.permute.xlu0 %656
      %658 = vrot.lane.b32.xlu0 %v590, 4
      %v659 = vpop.permute.xlu0 %658
      %660 = vrot.lane.b32.xlu0 %v593, 4
      %v661 = vpop.permute.xlu0 %660
      %662 = vrot.lane.b32.xlu0 %v595, 4
      %v663 = vpop.permute.xlu0 %662
      %664 = vrot.lane.b32.xlu0 %v598, 4
      %v665 = vpop.permute.xlu0 %664
      %666 = vrot.lane.b32.xlu0 %v600, 4
      %v667 = vpop.permute.xlu0 %666
      %668 = vrot.lane.b32.xlu0 %v603, 4
      %v669 = vpop.permute.xlu0 %668
      %670 = vrot.lane.b32.xlu0 %v605, 4
      %v671 = vpop.permute.xlu0 %670
      %672 = vrot.lane.b32.xlu0 %v608, 4
      %v673 = vpop.permute.xlu0 %672
      %674 = vrot.lane.b32.xlu0 %v610, 4
      %v675 = vpop.permute.xlu0 %674
      %676 = vrot.lane.b32.xlu0 %v613, 4
      %v677 = vpop.permute.xlu0 %676
      %678 = vrot.lane.b32.xlu0 %v615, 4
      %v679 = vpop.permute.xlu0 %678
      %vm712 = vcmask 1045504
      %v713 = vrot.slane %v469, 2
      %v714 = vrot.slane %v371, 2
      %v715 = vsel %vm712, %v713, %v714
      %v716 = vrot.slane %v486, 2
      %v717 = vsel %vm712, %v714, %v716
      %v718 = vrot.slane %v470, 2
      %v719 = vrot.slane %v374, 2
      %v720 = vsel %vm712, %v718, %v719
      %v721 = vrot.slane %v487, 2
      %v722 = vsel %vm712, %v719, %v721
      %v723 = vrot.slane %v471, 2
      %v724 = vrot.slane %v377, 2
      %v725 = vsel %vm712, %v723, %v724
      %v726 = vrot.slane %v488, 2
      %v727 = vsel %vm712, %v724, %v726
      %v728 = vrot.slane %v472, 2
      %v729 = vrot.slane %v380, 2
      %v730 = vsel %vm712, %v728, %v729
      %v731 = vrot.slane %v489, 2
      %v732 = vsel %vm712, %v729, %v731
      %v733 = vrot.slane %v473, 2
      %v734 = vrot.slane %v383, 2
      %v735 = vsel %vm712, %v733, %v734
      %v736 = vrot.slane %v490, 2
      %v737 = vsel %vm712, %v734, %v736
      %v738 = vrot.slane %v474, 2
      %v739 = vrot.slane %v386, 2
      %v740 = vsel %vm712, %v738, %v739
      %v741 = vrot.slane %v491, 2
      %v742 = vsel %vm712, %v739, %v741
      %v743 = vrot.slane %v475, 2
      %v744 = vrot.slane %v389, 2
      %v745 = vsel %vm712, %v743, %v744
      %v746 = vrot.slane %v492, 2
      %v747 = vsel %vm712, %v744, %v746
      %v748 = vrot.slane %v476, 2
      %v749 = vrot.slane %v392, 2
      %v750 = vsel %vm712, %v748, %v749
      %v751 = vrot.slane %v493, 2
      %v752 = vsel %vm712, %v749, %v751
      %v753 = vrot.slane %v477, 2
      %v754 = vrot.slane %v395, 2
      %v755 = vsel %vm712, %v753, %v754
      %v756 = vrot.slane %v494, 2
      %v757 = vsel %vm712, %v754, %v756
      %v758 = vrot.slane %v478, 2
      %v759 = vrot.slane %v398, 2
      %v760 = vsel %vm712, %v758, %v759
      %v761 = vrot.slane %v495, 2
      %v762 = vsel %vm712, %v759, %v761
      %v763 = vrot.slane %v479, 2
      %v764 = vrot.slane %v401, 2
      %v765 = vsel %vm712, %v763, %v764
      %v766 = vrot.slane %v496, 2
      %v767 = vsel %vm712, %v764, %v766
      %v768 = vrot.slane %v480, 2
      %v769 = vrot.slane %v404, 2
      %v770 = vsel %vm712, %v768, %v769
      %v771 = vrot.slane %v497, 2
      %v772 = vsel %vm712, %v769, %v771
      %v773 = vrot.slane %v481, 2
      %v774 = vrot.slane %v407, 2
      %v775 = vsel %vm712, %v773, %v774
      %v776 = vrot.slane %v498, 2
      %v777 = vsel %vm712, %v774, %v776
      %v778 = vrot.slane %v482, 2
      %v779 = vrot.slane %v410, 2
      %v780 = vsel %vm712, %v778, %v779
      %v781 = vrot.slane %v499, 2
      %v782 = vsel %vm712, %v779, %v781
      %v783 = vrot.slane %v483, 2
      %v784 = vrot.slane %v413, 2
      %v785 = vsel %vm712, %v783, %v784
      %v786 = vrot.slane %v500, 2
      %v787 = vsel %vm712, %v784, %v786
      %v788 = vrot.slane %v484, 2
      %v789 = vrot.slane %v416, 2
      %v790 = vsel %vm712, %v788, %v789
      %v791 = vrot.slane %v501, 2
      %v792 = vsel %vm712, %v789, %v791
      %793 = vrot.lane.b32.xlu0 %v715, 8
      %v794 = vpop.permute.xlu0 %793
      %795 = vrot.lane.b32.xlu0 %v717, 8
      %v796 = vpop.permute.xlu0 %795
      %797 = vrot.lane.b32.xlu0 %v720, 8
      %v798 = vpop.permute.xlu0 %797
      %799 = vrot.lane.b32.xlu0 %v722, 8
      %v800 = vpop.permute.xlu0 %799
      %801 = vrot.lane.b32.xlu0 %v725, 8
      %v802 = vpop.permute.xlu0 %801
      %803 = vrot.lane.b32.xlu0 %v727, 8
      %v804 = vpop.permute.xlu0 %803
      %805 = vrot.lane.b32.xlu0 %v730, 8
      %v806 = vpop.permute.xlu0 %805
      %807 = vrot.lane.b32.xlu0 %v732, 8
      %v808 = vpop.permute.xlu0 %807
      %809 = vrot.lane.b32.xlu0 %v735, 8
      %v810 = vpop.permute.xlu0 %809
      %811 = vrot.lane.b32.xlu0 %v737, 8
      %v812 = vpop.permute.xlu0 %811
      %813 = vrot.lane.b32.xlu0 %v740, 8
      %v814 = vpop.permute.xlu0 %813
      %815 = vrot.lane.b32.xlu0 %v742, 8
      %v816 = vpop.permute.xlu0 %815
      %817 = vrot.lane.b32.xlu0 %v745, 8
      %v818 = vpop.permute.xlu0 %817
      %819 = vrot.lane.b32.xlu0 %v747, 8
      %v820 = vpop.permute.xlu0 %819
      %821 = vrot.lane.b32.xlu0 %v750, 8
      %v822 = vpop.permute.xlu0 %821
      %823 = vrot.lane.b32.xlu0 %v752, 8
      %v824 = vpop.permute.xlu0 %823
      %825 = vrot.lane.b32.xlu0 %v755, 8
      %v826 = vpop.permute.xlu0 %825
      %827 = vrot.lane.b32.xlu0 %v757, 8
      %v828 = vpop.permute.xlu0 %827
      %829 = vrot.lane.b32.xlu0 %v760, 8
      %v830 = vpop.permute.xlu0 %829
      %831 = vrot.lane.b32.xlu0 %v762, 8
      %v832 = vpop.permute.xlu0 %831
      %833 = vrot.lane.b32.xlu0 %v765, 8
      %v834 = vpop.permute.xlu0 %833
      %835 = vrot.lane.b32.xlu0 %v767, 8
      %v836 = vpop.permute.xlu0 %835
      %837 = vrot.lane.b32.xlu0 %v770, 8
      %v838 = vpop.permute.xlu0 %837
      %839 = vrot.lane.b32.xlu0 %v772, 8
      %v840 = vpop.permute.xlu0 %839
      %841 = vrot.lane.b32.xlu0 %v775, 8
      %v842 = vpop.permute.xlu0 %841
      %843 = vrot.lane.b32.xlu0 %v777, 8
      %v844 = vpop.permute.xlu0 %843
      %845 = vrot.lane.b32.xlu0 %v780, 8
      %v846 = vpop.permute.xlu0 %845
      %847 = vrot.lane.b32.xlu0 %v782, 8
      %v848 = vpop.permute.xlu0 %847
      %849 = vrot.lane.b32.xlu0 %v785, 8
      %v850 = vpop.permute.xlu0 %849
      %851 = vrot.lane.b32.xlu0 %v787, 8
      %v852 = vpop.permute.xlu0 %851
      %853 = vrot.lane.b32.xlu0 %v790, 8
      %v854 = vpop.permute.xlu0 %853
      %855 = vrot.lane.b32.xlu0 %v792, 8
      %v856 = vpop.permute.xlu0 %855
      %890 = vrot.lane.b32.xlu0 %v470, 12
      %v891 = vpop.permute.xlu0 %890
      %892 = vrot.lane.b32.xlu0 %v374, 12
      %v893 = vpop.permute.xlu0 %892
      %894 = vrot.lane.b32.xlu0 %v471, 12
      %v895 = vpop.permute.xlu0 %894
      %896 = vrot.lane.b32.xlu0 %v377, 12
      %v897 = vpop.permute.xlu0 %896
      %898 = vrot.lane.b32.xlu0 %v472, 12
      %v899 = vpop.permute.xlu0 %898
      %900 = vrot.lane.b32.xlu0 %v380, 12
      %v901 = vpop.permute.xlu0 %900
      %902 = vrot.lane.b32.xlu0 %v473, 12
      %v903 = vpop.permute.xlu0 %902
      %904 = vrot.lane.b32.xlu0 %v383, 12
      %v905 = vpop.permute.xlu0 %904
      %906 = vrot.lane.b32.xlu0 %v474, 12
      %v907 = vpop.permute.xlu0 %906
      %908 = vrot.lane.b32.xlu0 %v386, 12
      %v909 = vpop.permute.xlu0 %908
      %910 = vrot.lane.b32.xlu0 %v475, 12
      %v911 = vpop.permute.xlu0 %910
      %912 = vrot.lane.b32.xlu0 %v389, 12
      %v913 = vpop.permute.xlu0 %912
      %914 = vrot.lane.b32.xlu0 %v476, 12
      %v915 = vpop.permute.xlu0 %914
      %916 = vrot.lane.b32.xlu0 %v392, 12
      %v917 = vpop.permute.xlu0 %916
      %918 = vrot.lane.b32.xlu0 %v477, 12
      %v919 = vpop.permute.xlu0 %918
      %920 = vrot.lane.b32.xlu0 %v395, 12
      %v921 = vpop.permute.xlu0 %920
      %922 = vrot.lane.b32.xlu0 %v478, 12
      %v923 = vpop.permute.xlu0 %922
      %924 = vrot.lane.b32.xlu0 %v398, 12
      %v925 = vpop.permute.xlu0 %924
      %926 = vrot.lane.b32.xlu0 %v479, 12
      %v927 = vpop.permute.xlu0 %926
      %928 = vrot.lane.b32.xlu0 %v401, 12
      %v929 = vpop.permute.xlu0 %928
      %930 = vrot.lane.b32.xlu0 %v480, 12
      %v931 = vpop.permute.xlu0 %930
      %932 = vrot.lane.b32.xlu0 %v404, 12
      %v933 = vpop.permute.xlu0 %932
      %934 = vrot.lane.b32.xlu0 %v481, 12
      %v935 = vpop.permute.xlu0 %934
      %936 = vrot.lane.b32.xlu0 %v407, 12
      %v937 = vpop.permute.xlu0 %936
      %938 = vrot.lane.b32.xlu0 %v482, 12
      %v939 = vpop.permute.xlu0 %938
      %940 = vrot.lane.b32.xlu0 %v410, 12
      %v941 = vpop.permute.xlu0 %940
      %942 = vrot.lane.b32.xlu0 %v483, 12
      %v943 = vpop.permute.xlu0 %942
      %944 = vrot.lane.b32.xlu0 %v413, 12
      %v945 = vpop.permute.xlu0 %944
      %946 = vrot.lane.b32.xlu0 %v484, 12
      %v947 = vpop.permute.xlu0 %946
      %948 = vrot.lane.b32.xlu0 %v416, 12
      %v949 = vpop.permute.xlu0 %948
      %950 = vrot.lane.b32.xlu0 %v485, 12
      %v951 = vpop.permute.xlu0 %950
      %952 = vrot.lane.b32.xlu0 %v419, 12
      %v953 = vpop.permute.xlu0 %952
      %v987 = vrot.slane %v485, 1
      %v988 = vrot.slane %v419, 1
      %v989 = vsel %vm535, %v987, %v988
      %v990 = vrot.slane %v502, 1
      %v991 = vsel %vm535, %v988, %v990
      %992 = vrot.lane.b32.xlu0 %v543, 16
      %v993 = vpop.permute.xlu0 %992
      %994 = vrot.lane.b32.xlu0 %v545, 16
      %v995 = vpop.permute.xlu0 %994
      %996 = vrot.lane.b32.xlu0 %v548, 16
      %v997 = vpop.permute.xlu0 %996
      %998 = vrot.lane.b32.xlu0 %v550, 16
      %v999 = vpop.permute.xlu0 %998
      %1000 = vrot.lane.b32.xlu0 %v553, 16
      %v1001 = vpop.permute.xlu0 %1000
      %1002 = vrot.lane.b32.xlu0 %v555, 16
      %v1003 = vpop.permute.xlu0 %1002
      %1004 = vrot.lane.b32.xlu0 %v558, 16
      %v1005 = vpop.permute.xlu0 %1004
      %1006 = vrot.lane.b32.xlu0 %v560, 16
      %v1007 = vpop.permute.xlu0 %1006
      %1008 = vrot.lane.b32.xlu0 %v563, 16
      %v1009 = vpop.permute.xlu0 %1008
      %1010 = vrot.lane.b32.xlu0 %v565, 16
      %v1011 = vpop.permute.xlu0 %1010
      %1012 = vrot.lane.b32.xlu0 %v568, 16
      %v1013 = vpop.permute.xlu0 %1012
      %1014 = vrot.lane.b32.xlu0 %v570, 16
      %v1015 = vpop.permute.xlu0 %1014
      %1016 = vrot.lane.b32.xlu0 %v573, 16
      %v1017 = vpop.permute.xlu0 %1016
      %1018 = vrot.lane.b32.xlu0 %v575, 16
      %v1019 = vpop.permute.xlu0 %1018
      %1020 = vrot.lane.b32.xlu0 %v578, 16
      %v1021 = vpop.permute.xlu0 %1020
      %1022 = vrot.lane.b32.xlu0 %v580, 16
      %v1023 = vpop.permute.xlu0 %1022
      %1024 = vrot.lane.b32.xlu0 %v583, 16
      %v1025 = vpop.permute.xlu0 %1024
      %1026 = vrot.lane.b32.xlu0 %v585, 16
      %v1027 = vpop.permute.xlu0 %1026
      %1028 = vrot.lane.b32.xlu0 %v588, 16
      %v1029 = vpop.permute.xlu0 %1028
      %1030 = vrot.lane.b32.xlu0 %v590, 16
      %v1031 = vpop.permute.xlu0 %1030
      %1032 = vrot.lane.b32.xlu0 %v593, 16
      %v1033 = vpop.permute.xlu0 %1032
      %1034 = vrot.lane.b32.xlu0 %v595, 16
      %v1035 = vpop.permute.xlu0 %1034
      %1036 = vrot.lane.b32.xlu0 %v598, 16
      %v1037 = vpop.permute.xlu0 %1036
      %1038 = vrot.lane.b32.xlu0 %v600, 16
      %v1039 = vpop.permute.xlu0 %1038
      %1040 = vrot.lane.b32.xlu0 %v603, 16
      %v1041 = vpop.permute.xlu0 %1040
      %1042 = vrot.lane.b32.xlu0 %v605, 16
      %v1043 = vpop.permute.xlu0 %1042
      %1044 = vrot.lane.b32.xlu0 %v608, 16
      %v1045 = vpop.permute.xlu0 %1044
      %1046 = vrot.lane.b32.xlu0 %v610, 16
      %v1047 = vpop.permute.xlu0 %1046
      %1048 = vrot.lane.b32.xlu0 %v613, 16
      %v1049 = vpop.permute.xlu0 %1048
      %1050 = vrot.lane.b32.xlu0 %v615, 16
      %v1051 = vpop.permute.xlu0 %1050
      %1052 = vrot.lane.b32.xlu0 %v989, 16
      %v1053 = vpop.permute.xlu0 %1052
      %1054 = vrot.lane.b32.xlu0 %v991, 16
      %v1055 = vpop.permute.xlu0 %1054
      %v1088 = vrot.slane %v485, 2
      %v1089 = vrot.slane %v419, 2
      %v1090 = vsel %vm712, %v1088, %v1089
      %v1091 = vrot.slane %v502, 2
      %v1092 = vsel %vm712, %v1089, %v1091
      %1093 = vrot.lane.b32.xlu0 %v720, 20
      %v1094 = vpop.permute.xlu0 %1093
      %1095 = vrot.lane.b32.xlu0 %v722, 20
      %v1096 = vpop.permute.xlu0 %1095
      %1097 = vrot.lane.b32.xlu0 %v725, 20
      %v1098 = vpop.permute.xlu0 %1097
      %1099 = vrot.lane.b32.xlu0 %v727, 20
      %v1100 = vpop.permute.xlu0 %1099
      %1101 = vrot.lane.b32.xlu0 %v730, 20
      %v1102 = vpop.permute.xlu0 %1101
      %1103 = vrot.lane.b32.xlu0 %v732, 20
      %v1104 = vpop.permute.xlu0 %1103
      %1105 = vrot.lane.b32.xlu0 %v735, 20
      %v1106 = vpop.permute.xlu0 %1105
      %1107 = vrot.lane.b32.xlu0 %v737, 20
      %v1108 = vpop.permute.xlu0 %1107
      %1109 = vrot.lane.b32.xlu0 %v740, 20
      %v1110 = vpop.permute.xlu0 %1109
      %1111 = vrot.lane.b32.xlu0 %v742, 20
      %v1112 = vpop.permute.xlu0 %1111
      %1113 = vrot.lane.b32.xlu0 %v745, 20
      %v1114 = vpop.permute.xlu0 %1113
      %1115 = vrot.lane.b32.xlu0 %v747, 20
      %v1116 = vpop.permute.xlu0 %1115
      %1117 = vrot.lane.b32.xlu0 %v750, 20
      %v1118 = vpop.permute.xlu0 %1117
      %1119 = vrot.lane.b32.xlu0 %v752, 20
      %v1120 = vpop.permute.xlu0 %1119
      %1121 = vrot.lane.b32.xlu0 %v755, 20
      %v1122 = vpop.permute.xlu0 %1121
      %1123 = vrot.lane.b32.xlu0 %v757, 20
      %v1124 = vpop.permute.xlu0 %1123
      %1125 = vrot.lane.b32.xlu0 %v760, 20
      %v1126 = vpop.permute.xlu0 %1125
      %1127 = vrot.lane.b32.xlu0 %v762, 20
      %v1128 = vpop.permute.xlu0 %1127
      %1129 = vrot.lane.b32.xlu0 %v765, 20
      %v1130 = vpop.permute.xlu0 %1129
      %1131 = vrot.lane.b32.xlu0 %v767, 20
      %v1132 = vpop.permute.xlu0 %1131
      %1133 = vrot.lane.b32.xlu0 %v770, 20
      %v1134 = vpop.permute.xlu0 %1133
      %1135 = vrot.lane.b32.xlu0 %v772, 20
      %v1136 = vpop.permute.xlu0 %1135
      %1137 = vrot.lane.b32.xlu0 %v775, 20
      %v1138 = vpop.permute.xlu0 %1137
      %1139 = vrot.lane.b32.xlu0 %v777, 20
      %v1140 = vpop.permute.xlu0 %1139
      %1141 = vrot.lane.b32.xlu0 %v780, 20
      %v1142 = vpop.permute.xlu0 %1141
      %1143 = vrot.lane.b32.xlu0 %v782, 20
      %v1144 = vpop.permute.xlu0 %1143
      %1145 = vrot.lane.b32.xlu0 %v785, 20
      %v1146 = vpop.permute.xlu0 %1145
      %1147 = vrot.lane.b32.xlu0 %v787, 20
      %v1148 = vpop.permute.xlu0 %1147
      %1149 = vrot.lane.b32.xlu0 %v790, 20
      %v1150 = vpop.permute.xlu0 %1149
      %1151 = vrot.lane.b32.xlu0 %v792, 20
      %v1152 = vpop.permute.xlu0 %1151
      %1153 = vrot.lane.b32.xlu0 %v1090, 20
      %v1154 = vpop.permute.xlu0 %1153
      %1155 = vrot.lane.b32.xlu0 %v1092, 20
      %v1156 = vpop.permute.xlu0 %1155
      %1189 = vrot.lane.b32.xlu0 %v471, 24
      %v1190 = vpop.permute.xlu0 %1189
      %1191 = vrot.lane.b32.xlu0 %v377, 24
      %v1192 = vpop.permute.xlu0 %1191
      %1193 = vrot.lane.b32.xlu0 %v472, 24
      %v1194 = vpop.permute.xlu0 %1193
      %1195 = vrot.lane.b32.xlu0 %v380, 24
      %v1196 = vpop.permute.xlu0 %1195
      %1197 = vrot.lane.b32.xlu0 %v473, 24
      %v1198 = vpop.permute.xlu0 %1197
      %1199 = vrot.lane.b32.xlu0 %v383, 24
      %v1200 = vpop.permute.xlu0 %1199
      %1201 = vrot.lane.b32.xlu0 %v474, 24
      %v1202 = vpop.permute.xlu0 %1201
      %1203 = vrot.lane.b32.xlu0 %v386, 24
      %v1204 = vpop.permute.xlu0 %1203
      %1205 = vrot.lane.b32.xlu0 %v475, 24
      %v1206 = vpop.permute.xlu0 %1205
      %1207 = vrot.lane.b32.xlu0 %v389, 24
      %v1208 = vpop.permute.xlu0 %1207
      %1209 = vrot.lane.b32.xlu0 %v476, 24
      %v1210 = vpop.permute.xlu0 %1209
      %1211 = vrot.lane.b32.xlu0 %v392, 24
      %v1212 = vpop.permute.xlu0 %1211
      %1213 = vrot.lane.b32.xlu0 %v477, 24
      %v1214 = vpop.permute.xlu0 %1213
      %1215 = vrot.lane.b32.xlu0 %v395, 24
      %v1216 = vpop.permute.xlu0 %1215
      %1217 = vrot.lane.b32.xlu0 %v478, 24
      %v1218 = vpop.permute.xlu0 %1217
      %1219 = vrot.lane.b32.xlu0 %v398, 24
      %v1220 = vpop.permute.xlu0 %1219
      %1221 = vrot.lane.b32.xlu0 %v479, 24
      %v1222 = vpop.permute.xlu0 %1221
      %1223 = vrot.lane.b32.xlu0 %v401, 24
      %v1224 = vpop.permute.xlu0 %1223
      %1225 = vrot.lane.b32.xlu0 %v480, 24
      %v1226 = vpop.permute.xlu0 %1225
      %1227 = vrot.lane.b32.xlu0 %v404, 24
      %v1228 = vpop.permute.xlu0 %1227
      %1229 = vrot.lane.b32.xlu0 %v481, 24
      %v1230 = vpop.permute.xlu0 %1229
      %1231 = vrot.lane.b32.xlu0 %v407, 24
      %v1232 = vpop.permute.xlu0 %1231
      %1233 = vrot.lane.b32.xlu0 %v482, 24
      %v1234 = vpop.permute.xlu0 %1233
      %1235 = vrot.lane.b32.xlu0 %v410, 24
      %v1236 = vpop.permute.xlu0 %1235
      %1237 = vrot.lane.b32.xlu0 %v483, 24
      %v1238 = vpop.permute.xlu0 %1237
      %1239 = vrot.lane.b32.xlu0 %v413, 24
      %v1240 = vpop.permute.xlu0 %1239
      %1241 = vrot.lane.b32.xlu0 %v484, 24
      %v1242 = vpop.permute.xlu0 %1241
      %1243 = vrot.lane.b32.xlu0 %v416, 24
      %v1244 = vpop.permute.xlu0 %1243
      %1245 = vrot.lane.b32.xlu0 %v485, 24
      %v1246 = vpop.permute.xlu0 %1245
      %1247 = vrot.lane.b32.xlu0 %v419, 24
      %v1248 = vpop.permute.xlu0 %1247
      %1249 = vrot.lane.b32.xlu0 %v469, 24
      %v1250 = vpop.permute.xlu0 %1249
      %1251 = vrot.lane.b32.xlu0 %v371, 24
      %v1252 = vpop.permute.xlu0 %1251
      %1285 = vrot.lane.b32.xlu0 %v548, 28
      %v1286 = vpop.permute.xlu0 %1285
      %1287 = vrot.lane.b32.xlu0 %v550, 28
      %v1288 = vpop.permute.xlu0 %1287
      %1289 = vrot.lane.b32.xlu0 %v553, 28
      %v1290 = vpop.permute.xlu0 %1289
      %1291 = vrot.lane.b32.xlu0 %v555, 28
      %v1292 = vpop.permute.xlu0 %1291
      %1293 = vrot.lane.b32.xlu0 %v558, 28
      %v1294 = vpop.permute.xlu0 %1293
      %1295 = vrot.lane.b32.xlu0 %v560, 28
      %v1296 = vpop.permute.xlu0 %1295
      %1297 = vrot.lane.b32.xlu0 %v563, 28
      %v1298 = vpop.permute.xlu0 %1297
      %1299 = vrot.lane.b32.xlu0 %v565, 28
      %v1300 = vpop.permute.xlu0 %1299
      %1301 = vrot.lane.b32.xlu0 %v568, 28
      %v1302 = vpop.permute.xlu0 %1301
      %1303 = vrot.lane.b32.xlu0 %v570, 28
      %v1304 = vpop.permute.xlu0 %1303
      %1305 = vrot.lane.b32.xlu0 %v573, 28
      %v1306 = vpop.permute.xlu0 %1305
      %1307 = vrot.lane.b32.xlu0 %v575, 28
      %v1308 = vpop.permute.xlu0 %1307
      %1309 = vrot.lane.b32.xlu0 %v578, 28
      %v1310 = vpop.permute.xlu0 %1309
      %1311 = vrot.lane.b32.xlu0 %v580, 28
      %v1312 = vpop.permute.xlu0 %1311
      %1313 = vrot.lane.b32.xlu0 %v583, 28
      %v1314 = vpop.permute.xlu0 %1313
      %1315 = vrot.lane.b32.xlu0 %v585, 28
      %v1316 = vpop.permute.xlu0 %1315
      %1317 = vrot.lane.b32.xlu0 %v588, 28
      %v1318 = vpop.permute.xlu0 %1317
      %1319 = vrot.lane.b32.xlu0 %v590, 28
      %v1320 = vpop.permute.xlu0 %1319
      %1321 = vrot.lane.b32.xlu0 %v593, 28
      %v1322 = vpop.permute.xlu0 %1321
      %1323 = vrot.lane.b32.xlu0 %v595, 28
      %v1324 = vpop.permute.xlu0 %1323
      %1325 = vrot.lane.b32.xlu0 %v598, 28
      %v1326 = vpop.permute.xlu0 %1325
      %1327 = vrot.lane.b32.xlu0 %v600, 28
      %v1328 = vpop.permute.xlu0 %1327
      %1329 = vrot.lane.b32.xlu0 %v603, 28
      %v1330 = vpop.permute.xlu0 %1329
      %1331 = vrot.lane.b32.xlu0 %v605, 28
      %v1332 = vpop.permute.xlu0 %1331
      %1333 = vrot.lane.b32.xlu0 %v608, 28
      %v1334 = vpop.permute.xlu0 %1333
      %1335 = vrot.lane.b32.xlu0 %v610, 28
      %v1336 = vpop.permute.xlu0 %1335
      %1337 = vrot.lane.b32.xlu0 %v613, 28
      %v1338 = vpop.permute.xlu0 %1337
      %1339 = vrot.lane.b32.xlu0 %v615, 28
      %v1340 = vpop.permute.xlu0 %1339
      %1341 = vrot.lane.b32.xlu0 %v989, 28
      %v1342 = vpop.permute.xlu0 %1341
      %1343 = vrot.lane.b32.xlu0 %v991, 28
      %v1344 = vpop.permute.xlu0 %1343
      %1345 = vrot.lane.b32.xlu0 %v538, 28
      %v1346 = vpop.permute.xlu0 %1345
      %1347 = vrot.lane.b32.xlu0 %v540, 28
      %v1348 = vpop.permute.xlu0 %1347
      %1381 = vrot.lane.b32.xlu0 %v725, 32
      %v1382 = vpop.permute.xlu0 %1381
      %1383 = vrot.lane.b32.xlu0 %v727, 32
      %v1384 = vpop.permute.xlu0 %1383
      %1385 = vrot.lane.b32.xlu0 %v730, 32
      %v1386 = vpop.permute.xlu0 %1385
      %1387 = vrot.lane.b32.xlu0 %v732, 32
      %v1388 = vpop.permute.xlu0 %1387
      %1389 = vrot.lane.b32.xlu0 %v735, 32
      %v1390 = vpop.permute.xlu0 %1389
      %1391 = vrot.lane.b32.xlu0 %v737, 32
      %v1392 = vpop.permute.xlu0 %1391
      %1393 = vrot.lane.b32.xlu0 %v740, 32
      %v1394 = vpop.permute.xlu0 %1393
      %1395 = vrot.lane.b32.xlu0 %v742, 32
      %v1396 = vpop.permute.xlu0 %1395
      %1397 = vrot.lane.b32.xlu0 %v745, 32
      %v1398 = vpop.permute.xlu0 %1397
      %1399 = vrot.lane.b32.xlu0 %v747, 32
      %v1400 = vpop.permute.xlu0 %1399
      %1401 = vrot.lane.b32.xlu0 %v750, 32
      %v1402 = vpop.permute.xlu0 %1401
      %1403 = vrot.lane.b32.xlu0 %v752, 32
      %v1404 = vpop.permute.xlu0 %1403
      %1405 = vrot.lane.b32.xlu0 %v755, 32
      %v1406 = vpop.permute.xlu0 %1405
      %1407 = vrot.lane.b32.xlu0 %v757, 32
      %v1408 = vpop.permute.xlu0 %1407
      %1409 = vrot.lane.b32.xlu0 %v760, 32
      %v1410 = vpop.permute.xlu0 %1409
      %1411 = vrot.lane.b32.xlu0 %v762, 32
      %v1412 = vpop.permute.xlu0 %1411
      %1413 = vrot.lane.b32.xlu0 %v765, 32
      %v1414 = vpop.permute.xlu0 %1413
      %1415 = vrot.lane.b32.xlu0 %v767, 32
      %v1416 = vpop.permute.xlu0 %1415
      %1417 = vrot.lane.b32.xlu0 %v770, 32
      %v1418 = vpop.permute.xlu0 %1417
      %1419 = vrot.lane.b32.xlu0 %v772, 32
      %v1420 = vpop.permute.xlu0 %1419
      %1421 = vrot.lane.b32.xlu0 %v775, 32
      %v1422 = vpop.permute.xlu0 %1421
      %1423 = vrot.lane.b32.xlu0 %v777, 32
      %v1424 = vpop.permute.xlu0 %1423
      %1425 = vrot.lane.b32.xlu0 %v780, 32
      %v1426 = vpop.permute.xlu0 %1425
      %1427 = vrot.lane.b32.xlu0 %v782, 32
      %v1428 = vpop.permute.xlu0 %1427
      %1429 = vrot.lane.b32.xlu0 %v785, 32
      %v1430 = vpop.permute.xlu0 %1429
      %1431 = vrot.lane.b32.xlu0 %v787, 32
      %v1432 = vpop.permute.xlu0 %1431
      %1433 = vrot.lane.b32.xlu0 %v790, 32
      %v1434 = vpop.permute.xlu0 %1433
      %1435 = vrot.lane.b32.xlu0 %v792, 32
      %v1436 = vpop.permute.xlu0 %1435
      %1437 = vrot.lane.b32.xlu0 %v1090, 32
      %v1438 = vpop.permute.xlu0 %1437
      %1439 = vrot.lane.b32.xlu0 %v1092, 32
      %v1440 = vpop.permute.xlu0 %1439
      %1441 = vrot.lane.b32.xlu0 %v715, 32
      %v1442 = vpop.permute.xlu0 %1441
      %1443 = vrot.lane.b32.xlu0 %v717, 32
      %v1444 = vpop.permute.xlu0 %1443
      %vm1477 = vcmask 31744
      %v1478 = vsel %vm1477, %v469, %v617
      %v1479 = vsel %vm1477, %v371, %v619
      %v1480 = vsel %vm1477, %v470, %v621
      %v1481 = vsel %vm1477, %v374, %v623
      %v1482 = vsel %vm1477, %v471, %v625
      %v1483 = vsel %vm1477, %v377, %v627
      %v1484 = vsel %vm1477, %v472, %v629
      %v1485 = vsel %vm1477, %v380, %v631
      %v1486 = vsel %vm1477, %v473, %v633
      %v1487 = vsel %vm1477, %v383, %v635
      %v1488 = vsel %vm1477, %v474, %v637
      %v1489 = vsel %vm1477, %v386, %v639
      %v1490 = vsel %vm1477, %v475, %v641
      %v1491 = vsel %vm1477, %v389, %v643
      %v1492 = vsel %vm1477, %v476, %v645
      %v1493 = vsel %vm1477, %v392, %v647
      %v1494 = vsel %vm1477, %v477, %v649
      %v1495 = vsel %vm1477, %v395, %v651
      %v1496 = vsel %vm1477, %v478, %v653
      %v1497 = vsel %vm1477, %v398, %v655
      %v1498 = vsel %vm1477, %v479, %v657
      %v1499 = vsel %vm1477, %v401, %v659
      %v1500 = vsel %vm1477, %v480, %v661
      %v1501 = vsel %vm1477, %v404, %v663
      %v1502 = vsel %vm1477, %v481, %v665
      %v1503 = vsel %vm1477, %v407, %v667
      %v1504 = vsel %vm1477, %v482, %v669
      %v1505 = vsel %vm1477, %v410, %v671
      %v1506 = vsel %vm1477, %v483, %v673
      %v1507 = vsel %vm1477, %v413, %v675
      %v1508 = vsel %vm1477, %v484, %v677
      %v1509 = vsel %vm1477, %v416, %v679
      %vm1510 = vcmask 64512
      %v1511 = vsel %vm1510, %v1478, %v794
      %v1512 = vsel %vm1510, %v1479, %v796
      %v1513 = vsel %vm1510, %v1480, %v798
      %v1514 = vsel %vm1510, %v1481, %v800
      %v1515 = vsel %vm1510, %v1482, %v802
      %v1516 = vsel %vm1510, %v1483, %v804
      %v1517 = vsel %vm1510, %v1484, %v806
      %v1518 = vsel %vm1510, %v1485, %v808
      %v1519 = vsel %vm1510, %v1486, %v810
      %v1520 = vsel %vm1510, %v1487, %v812
      %v1521 = vsel %vm1510, %v1488, %v814
      %v1522 = vsel %vm1510, %v1489, %v816
      %v1523 = vsel %vm1510, %v1490, %v818
      %v1524 = vsel %vm1510, %v1491, %v820
      %v1525 = vsel %vm1510, %v1492, %v822
      %v1526 = vsel %vm1510, %v1493, %v824
      %v1527 = vsel %vm1510, %v1494, %v826
      %v1528 = vsel %vm1510, %v1495, %v828
      %v1529 = vsel %vm1510, %v1496, %v830
      %v1530 = vsel %vm1510, %v1497, %v832
      %v1531 = vsel %vm1510, %v1498, %v834
      %v1532 = vsel %vm1510, %v1499, %v836
      %v1533 = vsel %vm1510, %v1500, %v838
      %v1534 = vsel %vm1510, %v1501, %v840
      %v1535 = vsel %vm1510, %v1502, %v842
      %v1536 = vsel %vm1510, %v1503, %v844
      %v1537 = vsel %vm1510, %v1504, %v846
      %v1538 = vsel %vm1510, %v1505, %v848
      %v1539 = vsel %vm1510, %v1506, %v850
      %v1540 = vsel %vm1510, %v1507, %v852
      %v1541 = vsel %vm1510, %v1508, %v854
      %v1542 = vsel %vm1510, %v1509, %v856
      %vm1543 = vcmask 97280
      %v1544 = vsel %vm1543, %v1511, %v891
      %v1545 = vsel %vm1543, %v1512, %v893
      %v1546 = vsel %vm1543, %v1513, %v895
      %v1547 = vsel %vm1543, %v1514, %v897
      %v1548 = vsel %vm1543, %v1515, %v899
      %v1549 = vsel %vm1543, %v1516, %v901
      %v1550 = vsel %vm1543, %v1517, %v903
      %v1551 = vsel %vm1543, %v1518, %v905
      %v1552 = vsel %vm1543, %v1519, %v907
      %v1553 = vsel %vm1543, %v1520, %v909
      %v1554 = vsel %vm1543, %v1521, %v911
      %v1555 = vsel %vm1543, %v1522, %v913
      %v1556 = vsel %vm1543, %v1523, %v915
      %v1557 = vsel %vm1543, %v1524, %v917
      %v1558 = vsel %vm1543, %v1525, %v919
      %v1559 = vsel %vm1543, %v1526, %v921
      %v1560 = vsel %vm1543, %v1527, %v923
      %v1561 = vsel %vm1543, %v1528, %v925
      %v1562 = vsel %vm1543, %v1529, %v927
      %v1563 = vsel %vm1543, %v1530, %v929
      %v1564 = vsel %vm1543, %v1531, %v931
      %v1565 = vsel %vm1543, %v1532, %v933
      %v1566 = vsel %vm1543, %v1533, %v935
      %v1567 = vsel %vm1543, %v1534, %v937
      %v1568 = vsel %vm1543, %v1535, %v939
      %v1569 = vsel %vm1543, %v1536, %v941
      %v1570 = vsel %vm1543, %v1537, %v943
      %v1571 = vsel %vm1543, %v1538, %v945
      %v1572 = vsel %vm1543, %v1539, %v947
      %v1573 = vsel %vm1543, %v1540, %v949
      %v1574 = vsel %vm1543, %v1541, %v951
      %v1575 = vsel %vm1543, %v1542, %v953
      %vm1576 = vcmask 130048
      %v1577 = vsel %vm1576, %v1544, %v993
      %v1578 = vsel %vm1576, %v1545, %v995
      %v1579 = vsel %vm1576, %v1546, %v997
      %v1580 = vsel %vm1576, %v1547, %v999
      %v1581 = vsel %vm1576, %v1548, %v1001
      %v1582 = vsel %vm1576, %v1549, %v1003
      %v1583 = vsel %vm1576, %v1550, %v1005
      %v1584 = vsel %vm1576, %v1551, %v1007
      %v1585 = vsel %vm1576, %v1552, %v1009
      %v1586 = vsel %vm1576, %v1553, %v1011
      %v1587 = vsel %vm1576, %v1554, %v1013
      %v1588 = vsel %vm1576, %v1555, %v1015
      %v1589 = vsel %vm1576, %v1556, %v1017
      %v1590 = vsel %vm1576, %v1557, %v1019
      %v1591 = vsel %vm1576, %v1558, %v1021
      %v1592 = vsel %vm1576, %v1559, %v1023
      %v1593 = vsel %vm1576, %v1560, %v1025
      %v1594 = vsel %vm1576, %v1561, %v1027
      %v1595 = vsel %vm1576, %v1562, %v1029
      %v1596 = vsel %vm1576, %v1563, %v1031
      %v1597 = vsel %vm1576, %v1564, %v1033
      %v1598 = vsel %vm1576, %v1565, %v1035
      %v1599 = vsel %vm1576, %v1566, %v1037
      %v1600 = vsel %vm1576, %v1567, %v1039
      %v1601 = vsel %vm1576, %v1568, %v1041
      %v1602 = vsel %vm1576, %v1569, %v1043
      %v1603 = vsel %vm1576, %v1570, %v1045
      %v1604 = vsel %vm1576, %v1571, %v1047
      %v1605 = vsel %vm1576, %v1572, %v1049
      %v1606 = vsel %vm1576, %v1573, %v1051
      %v1607 = vsel %vm1576, %v1574, %v1053
      %v1608 = vsel %vm1576, %v1575, %v1055
      %vm1609 = vcmask 162816
      %v1610 = vsel %vm1609, %v1577, %v1094
      %v1611 = vsel %vm1609, %v1578, %v1096
      %v1612 = vsel %vm1609, %v1579, %v1098
      %v1613 = vsel %vm1609, %v1580, %v1100
      %v1614 = vsel %vm1609, %v1581, %v1102
      %v1615 = vsel %vm1609, %v1582, %v1104
      %v1616 = vsel %vm1609, %v1583, %v1106
      %v1617 = vsel %vm1609, %v1584, %v1108
      %v1618 = vsel %vm1609, %v1585, %v1110
      %v1619 = vsel %vm1609, %v1586, %v1112
      %v1620 = vsel %vm1609, %v1587, %v1114
      %v1621 = vsel %vm1609, %v1588, %v1116
      %v1622 = vsel %vm1609, %v1589, %v1118
      %v1623 = vsel %vm1609, %v1590, %v1120
      %v1624 = vsel %vm1609, %v1591, %v1122
      %v1625 = vsel %vm1609, %v1592, %v1124
      %v1626 = vsel %vm1609, %v1593, %v1126
      %v1627 = vsel %vm1609, %v1594, %v1128
      %v1628 = vsel %vm1609, %v1595, %v1130
      %v1629 = vsel %vm1609, %v1596, %v1132
      %v1630 = vsel %vm1609, %v1597, %v1134
      %v1631 = vsel %vm1609, %v1598, %v1136
      %v1632 = vsel %vm1609, %v1599, %v1138
      %v1633 = vsel %vm1609, %v1600, %v1140
      %v1634 = vsel %vm1609, %v1601, %v1142
      %v1635 = vsel %vm1609, %v1602, %v1144
      %v1636 = vsel %vm1609, %v1603, %v1146
      %v1637 = vsel %vm1609, %v1604, %v1148
      %v1638 = vsel %vm1609, %v1605, %v1150
      %v1639 = vsel %vm1609, %v1606, %v1152
      %v1640 = vsel %vm1609, %v1607, %v1154
      %v1641 = vsel %vm1609, %v1608, %v1156
      %vm1642 = vcmask 195584
      %v1643 = vsel %vm1642, %v1610, %v1190
      %v1644 = vsel %vm1642, %v1611, %v1192
      %v1645 = vsel %vm1642, %v1612, %v1194
      %v1646 = vsel %vm1642, %v1613, %v1196
      %v1647 = vsel %vm1642, %v1614, %v1198
      %v1648 = vsel %vm1642, %v1615, %v1200
      %v1649 = vsel %vm1642, %v1616, %v1202
      %v1650 = vsel %vm1642, %v1617, %v1204
      %v1651 = vsel %vm1642, %v1618, %v1206
      %v1652 = vsel %vm1642, %v1619, %v1208
      %v1653 = vsel %vm1642, %v1620, %v1210
      %v1654 = vsel %vm1642, %v1621, %v1212
      %v1655 = vsel %vm1642, %v1622, %v1214
      %v1656 = vsel %vm1642, %v1623, %v1216
      %v1657 = vsel %vm1642, %v1624, %v1218
      %v1658 = vsel %vm1642, %v1625, %v1220
      %v1659 = vsel %vm1642, %v1626, %v1222
      %v1660 = vsel %vm1642, %v1627, %v1224
      %v1661 = vsel %vm1642, %v1628, %v1226
      %v1662 = vsel %vm1642, %v1629, %v1228
      %v1663 = vsel %vm1642, %v1630, %v1230
      %v1664 = vsel %vm1642, %v1631, %v1232
      %v1665 = vsel %vm1642, %v1632, %v1234
      %v1666 = vsel %vm1642, %v1633, %v1236
      %v1667 = vsel %vm1642, %v1634, %v1238
      %v1668 = vsel %vm1642, %v1635, %v1240
      %v1669 = vsel %vm1642, %v1636, %v1242
      %v1670 = vsel %vm1642, %v1637, %v1244
      %v1671 = vsel %vm1642, %v1638, %v1246
      %v1672 = vsel %vm1642, %v1639, %v1248
      %v1673 = vsel %vm1642, %v1640, %v1250
      %v1674 = vsel %vm1642, %v1641, %v1252
      %vm1675 = vcmask 228352
      %v1676 = vsel %vm1675, %v1643, %v1286
      %v1677 = vsel %vm1675, %v1644, %v1288
      %v1678 = vsel %vm1675, %v1645, %v1290
      %v1679 = vsel %vm1675, %v1646, %v1292
      %v1680 = vsel %vm1675, %v1647, %v1294
      %v1681 = vsel %vm1675, %v1648, %v1296
      %v1682 = vsel %vm1675, %v1649, %v1298
      %v1683 = vsel %vm1675, %v1650, %v1300
      %v1684 = vsel %vm1675, %v1651, %v1302
      %v1685 = vsel %vm1675, %v1652, %v1304
      %v1686 = vsel %vm1675, %v1653, %v1306
      %v1687 = vsel %vm1675, %v1654, %v1308
      %v1688 = vsel %vm1675, %v1655, %v1310
      %v1689 = vsel %vm1675, %v1656, %v1312
      %v1690 = vsel %vm1675, %v1657, %v1314
      %v1691 = vsel %vm1675, %v1658, %v1316
      %v1692 = vsel %vm1675, %v1659, %v1318
      %v1693 = vsel %vm1675, %v1660, %v1320
      %v1694 = vsel %vm1675, %v1661, %v1322
      %v1695 = vsel %vm1675, %v1662, %v1324
      %v1696 = vsel %vm1675, %v1663, %v1326
      %v1697 = vsel %vm1675, %v1664, %v1328
      %v1698 = vsel %vm1675, %v1665, %v1330
      %v1699 = vsel %vm1675, %v1666, %v1332
      %v1700 = vsel %vm1675, %v1667, %v1334
      %v1701 = vsel %vm1675, %v1668, %v1336
      %v1702 = vsel %vm1675, %v1669, %v1338
      %v1703 = vsel %vm1675, %v1670, %v1340
      %v1704 = vsel %vm1675, %v1671, %v1342
      %v1705 = vsel %vm1675, %v1672, %v1344
      %v1706 = vsel %vm1675, %v1673, %v1346
      %v1707 = vsel %vm1675, %v1674, %v1348
      %vm1708 = vcmask 261120
      %v1709 = vsel %vm1708, %v1676, %v1382
      %v1710 = vsel %vm1708, %v1677, %v1384
      %v1711 = vsel %vm1708, %v1678, %v1386
      %v1712 = vsel %vm1708, %v1679, %v1388
      %v1713 = vsel %vm1708, %v1680, %v1390
      %v1714 = vsel %vm1708, %v1681, %v1392
      %v1715 = vsel %vm1708, %v1682, %v1394
      %v1716 = vsel %vm1708, %v1683, %v1396
      %v1717 = vsel %vm1708, %v1684, %v1398
      %v1718 = vsel %vm1708, %v1685, %v1400
      %v1719 = vsel %vm1708, %v1686, %v1402
      %v1720 = vsel %vm1708, %v1687, %v1404
      %v1721 = vsel %vm1708, %v1688, %v1406
      %v1722 = vsel %vm1708, %v1689, %v1408
      %v1723 = vsel %vm1708, %v1690, %v1410
      %v1724 = vsel %vm1708, %v1691, %v1412
      %v1725 = vsel %vm1708, %v1692, %v1414
      %v1726 = vsel %vm1708, %v1693, %v1416
      %v1727 = vsel %vm1708, %v1694, %v1418
      %v1728 = vsel %vm1708, %v1695, %v1420
      %v1729 = vsel %vm1708, %v1696, %v1422
      %v1730 = vsel %vm1708, %v1697, %v1424
      %v1731 = vsel %vm1708, %v1698, %v1426
      %v1732 = vsel %vm1708, %v1699, %v1428
      %v1733 = vsel %vm1708, %v1700, %v1430
      %v1734 = vsel %vm1708, %v1701, %v1432
      %v1735 = vsel %vm1708, %v1702, %v1434
      %v1736 = vsel %vm1708, %v1703, %v1436
      %v1737 = vsel %vm1708, %v1704, %v1438
      %v1738 = vsel %vm1708, %v1705, %v1440
      %v1739 = vsel %vm1708, %v1706, %v1442
      %v1740 = vsel %vm1708, %v1707, %v1444
      %v1741 = vld [vmem:[%s2] sm:$0xff]
      %v1742 = vld [vmem:[%s2 + $0x8] sm:$0xff]
      %v1743 = vld [vmem:[%s2 + $0x10] sm:$0xff]
      %v1744 = vld [vmem:[%s2 + $0x18] sm:$0xff]
      %v1745 = vld [vmem:[%s2 + $0x20] sm:$0xf]
      %v1746 = vld [vmem:[%s3] sm:$0x1]
      %v1748 = vlaneseq
      %v1749 = vshrl.u32 %v1748, 7
      %v1750 = vsub.s32 0, %v1749
      %v1751 = vrot.slane %v1746, %v1750
      %vm1753 = vcmask 293888
      %v1755 = vsel %vm1753, %v1709, 0
      %v1758 = vsel %vm1753, %v1710, 0
      %v1761 = vsel %vm1753, %v1711, 0
      %v1764 = vsel %vm1753, %v1712, 0
      %v1767 = vsel %vm1753, %v1713, 0
      %v1770 = vsel %vm1753, %v1714, 0
      %v1773 = vsel %vm1753, %v1715, 0
      %v1776 = vsel %vm1753, %v1716, 0
      %v1779 = vsel %vm1753, %v1717, 0
      %v1782 = vsel %vm1753, %v1718, 0
      %v1785 = vsel %vm1753, %v1719, 0
      %v1788 = vsel %vm1753, %v1720, 0
      %v1791 = vsel %vm1753, %v1721, 0
      %v1794 = vsel %vm1753, %v1722, 0
      %v1797 = vsel %vm1753, %v1723, 0
      %v1800 = vsel %vm1753, %v1724, 0
      %v1803 = vsel %vm1753, %v1725, 0
      %v1806 = vsel %vm1753, %v1726, 0
      %v1809 = vsel %vm1753, %v1727, 0
      %v1812 = vsel %vm1753, %v1728, 0
      %v1815 = vsel %vm1753, %v1729, 0
      %v1818 = vsel %vm1753, %v1730, 0
      %v1821 = vsel %vm1753, %v1731, 0
      %v1824 = vsel %vm1753, %v1732, 0
      %v1827 = vsel %vm1753, %v1733, 0
      %v1830 = vsel %vm1753, %v1734, 0
      %v1833 = vsel %vm1753, %v1735, 0
      %v1836 = vsel %vm1753, %v1736, 0
      %v1839 = vsel %vm1753, %v1737, 0
      %v1842 = vsel %vm1753, %v1738, 0
      %v1845 = vsel %vm1753, %v1739, 0
      %v1848 = vsel %vm1753, %v1740, 0
      %vm1850 = vcmask 1043456
      %v1852 = vsel %vm1850, %v1745, 0
      %1854 = vmatprep.subr.mxu0 0.0
      %1855 = vmatpush1.msra.mxu0 0.0
      %1856 = vmatprep.subr.mxu0 0.0
      %1857 = vmatpush1.msra.mxu0 0.0
      %1858 = vmatprep.subr.mxu0 0.0
      %1859 = vmatpush1.msra.mxu0 0.0
      %1860 = vmatprep.subr.mxu0 0.0
      %1861 = vmatpush1.msra.mxu0 0.0
      %1862 = vmatprep.subr.mxu0 0.0
      %1863 = vmatpush1.msra.mxu0 0.0
      %1864 = vmatprep.subr.mxu0 0.0
      %1865 = vmatpush1.msra.mxu0 0.0
      %1866 = vmatprep.subr.mxu0 0.0
      %1867 = vmatpush1.msra.mxu0 0.0
      %1868 = vmatprep.subr.mxu0 0.0
      %1869 = vmatpush1.msra.mxu0 0.0
      %1870 = vmatprep.subr.mxu0 0.0
      %1871 = vmatpush1.msra.mxu0 0.0
      %1872 = vmatprep.subr.mxu0 0.0
      %1873 = vmatpush1.msra.mxu0 0.0
      %1874 = vmatprep.subr.mxu0 0.0
      %1875 = vmatpush1.msra.mxu0 0.0
      %1876 = vmatprep.subr.mxu0 0.0
      %1877 = vmatpush1.msra.mxu0 %v1852
      %1878 = vmatprep.subr.mxu0 0.0
      %1879 = vmatpush1.msra.mxu0 %v1744
      %1880 = vmatprep.subr.mxu0 0.0
      %1881 = vmatpush1.msra.mxu0 %v1743
      %1882 = vmatprep.subr.mxu0 0.0
      %1883 = vmatpush1.msra.mxu0 %v1742
      %1884 = vmatprep.subr.mxu0 0.0
      %1885 = vmatpush1.msra.mxu0 %v1741
      %1886 = vmatprep.subr.mxu0 0.0
      %1887 = vmatpush2.msra.mxu0 0.0
      %1888 = vmatprep.subr.mxu0 0.0
      %1889 = vmatpush2.msra.mxu0 0.0
      %1890 = vmatprep.subr.mxu0 0.0
      %1891 = vmatpush2.msra.mxu0 0.0
      %1892 = vmatprep.subr.mxu0 0.0
      %1893 = vmatpush2.msra.mxu0 0.0
      %1894 = vmatprep.subr.mxu0 0.0
      %1895 = vmatpush2.msra.mxu0 0.0
      %1896 = vmatprep.subr.mxu0 0.0
      %1897 = vmatpush2.msra.mxu0 0.0
      %1898 = vmatprep.subr.mxu0 0.0
      %1899 = vmatpush2.msra.mxu0 0.0
      %1900 = vmatprep.subr.mxu0 0.0
      %1901 = vmatpush2.msra.mxu0 0.0
      %1902 = vmatprep.subr.mxu0 0.0
      %1903 = vmatpush2.msra.mxu0 0.0
      %1904 = vmatprep.subr.mxu0 0.0
      %1905 = vmatpush2.msra.mxu0 0.0
      %1906 = vmatprep.subr.mxu0 0.0
      %1907 = vmatpush2.msra.mxu0 0.0
      %1908 = vmatprep.subr.mxu0 0.0
      %1909 = vmatpush2.msra.mxu0 0.0
      %1910 = vmatprep.subr.mxu0 0.0
      %1911 = vmatpush2.msra.mxu0 0.0
      %1912 = vmatprep.subr.mxu0 0.0
      %1913 = vmatpush2.msra.mxu0 0.0
      %1914 = vmatprep.subr.mxu0 0.0
      %1915 = vmatpush2.msra.mxu0 0.0
      %1916 = vmatprep.subr.mxu0 0.0
      %1917 = vmatpush2.msra.mxu0 0.0
      %1918 = vmatprep.mubr.f32.mxu0 0.0
      %1919 = vmatmul.mubr.f32.gmra.mxu0 %v1755
      %v1920 = vpop.f32.mrf.mxu0
      %v1921 = vadd.f32 %v1751, %v1920
      %v1922 = vpop.f32.mrf.mxu0
      %1923 = vmatprep.mubr.f32.mxu0 0.0
      %1924 = vmatmul.mubr.f32.gmra.mxu0 %v1758
      %v1925 = vpop.f32.mrf.mxu0
      %v1926 = vadd.f32 %v1751, %v1925
      %v1927 = vpop.f32.mrf.mxu0
      %1928 = vmatprep.mubr.f32.mxu0 0.0
      %1929 = vmatmul.mubr.f32.gmra.mxu0 %v1761
      %v1930 = vpop.f32.mrf.mxu0
      %v1931 = vadd.f32 %v1751, %v1930
      %v1932 = vpop.f32.mrf.mxu0
      %1933 = vmatprep.mubr.f32.mxu0 0.0
      %1934 = vmatmul.mubr.f32.gmra.mxu0 %v1764
      %v1935 = vpop.f32.mrf.mxu0
      %v1936 = vadd.f32 %v1751, %v1935
      %v1937 = vpop.f32.mrf.mxu0
      %1938 = vmatprep.mubr.f32.mxu0 0.0
      %1939 = vmatmul.mubr.f32.gmra.mxu0 %v1767
      %v1940 = vpop.f32.mrf.mxu0
      %v1941 = vadd.f32 %v1751, %v1940
      %v1942 = vpop.f32.mrf.mxu0
      %1943 = vmatprep.mubr.f32.mxu0 0.0
      %1944 = vmatmul.mubr.f32.gmra.mxu0 %v1770
      %v1945 = vpop.f32.mrf.mxu0
      %v1946 = vadd.f32 %v1751, %v1945
      %v1947 = vpop.f32.mrf.mxu0
      %1948 = vmatprep.mubr.f32.mxu0 0.0
      %1949 = vmatmul.mubr.f32.gmra.mxu0 %v1773
      %v1950 = vpop.f32.mrf.mxu0
      %v1951 = vadd.f32 %v1751, %v1950
      %v1952 = vpop.f32.mrf.mxu0
      %1953 = vmatprep.mubr.f32.mxu0 0.0
      %1954 = vmatmul.mubr.f32.gmra.mxu0 %v1776
      %v1955 = vpop.f32.mrf.mxu0
      %v1956 = vadd.f32 %v1751, %v1955
      %v1957 = vpop.f32.mrf.mxu0
      %1958 = vmatprep.mubr.f32.mxu0 0.0
      %1959 = vmatmul.mubr.f32.gmra.mxu0 %v1779
      %v1960 = vpop.f32.mrf.mxu0
      %v1961 = vadd.f32 %v1751, %v1960
      %v1962 = vpop.f32.mrf.mxu0
      %1963 = vmatprep.mubr.f32.mxu0 0.0
      %1964 = vmatmul.mubr.f32.gmra.mxu0 %v1782
      %v1965 = vpop.f32.mrf.mxu0
      %v1966 = vadd.f32 %v1751, %v1965
      %v1967 = vpop.f32.mrf.mxu0
      %1968 = vmatprep.mubr.f32.mxu0 0.0
      %1969 = vmatmul.mubr.f32.gmra.mxu0 %v1785
      %v1970 = vpop.f32.mrf.mxu0
      %v1971 = vadd.f32 %v1751, %v1970
      %v1972 = vpop.f32.mrf.mxu0
      %1973 = vmatprep.mubr.f32.mxu0 0.0
      %1974 = vmatmul.mubr.f32.gmra.mxu0 %v1788
      %v1975 = vpop.f32.mrf.mxu0
      %v1976 = vadd.f32 %v1751, %v1975
      %v1977 = vpop.f32.mrf.mxu0
      %1978 = vmatprep.mubr.f32.mxu0 0.0
      %1979 = vmatmul.mubr.f32.gmra.mxu0 %v1791
      %v1980 = vpop.f32.mrf.mxu0
      %v1981 = vadd.f32 %v1751, %v1980
      %v1982 = vpop.f32.mrf.mxu0
      %1983 = vmatprep.mubr.f32.mxu0 0.0
      %1984 = vmatmul.mubr.f32.gmra.mxu0 %v1794
      %v1985 = vpop.f32.mrf.mxu0
      %v1986 = vadd.f32 %v1751, %v1985
      %v1987 = vpop.f32.mrf.mxu0
      %1988 = vmatprep.mubr.f32.mxu0 0.0
      %1989 = vmatmul.mubr.f32.gmra.mxu0 %v1797
      %v1990 = vpop.f32.mrf.mxu0
      %v1991 = vadd.f32 %v1751, %v1990
      %v1992 = vpop.f32.mrf.mxu0
      %1993 = vmatprep.mubr.f32.mxu0 0.0
      %1994 = vmatmul.mubr.f32.gmra.mxu0 %v1800
      %v1995 = vpop.f32.mrf.mxu0
      %v1996 = vadd.f32 %v1751, %v1995
      %v1997 = vpop.f32.mrf.mxu0
      %1998 = vmatprep.mubr.f32.mxu0 0.0
      %1999 = vmatmul.mubr.f32.gmra.mxu0 %v1803
      %v2000 = vpop.f32.mrf.mxu0
      %v2001 = vadd.f32 %v1751, %v2000
      %v2002 = vpop.f32.mrf.mxu0
      %2003 = vmatprep.mubr.f32.mxu0 0.0
      %2004 = vmatmul.mubr.f32.gmra.mxu0 %v1806
      %v2005 = vpop.f32.mrf.mxu0
      %v2006 = vadd.f32 %v1751, %v2005
      %v2007 = vpop.f32.mrf.mxu0
      %2008 = vmatprep.mubr.f32.mxu0 0.0
      %2009 = vmatmul.mubr.f32.gmra.mxu0 %v1809
      %v2010 = vpop.f32.mrf.mxu0
      %v2011 = vadd.f32 %v1751, %v2010
      %v2012 = vpop.f32.mrf.mxu0
      %2013 = vmatprep.mubr.f32.mxu0 0.0
      %2014 = vmatmul.mubr.f32.gmra.mxu0 %v1812
      %v2015 = vpop.f32.mrf.mxu0
      %v2016 = vadd.f32 %v1751, %v2015
      %v2017 = vpop.f32.mrf.mxu0
      %2018 = vmatprep.mubr.f32.mxu0 0.0
      %2019 = vmatmul.mubr.f32.gmra.mxu0 %v1815
      %v2020 = vpop.f32.mrf.mxu0
      %v2021 = vadd.f32 %v1751, %v2020
      %v2022 = vpop.f32.mrf.mxu0
      %2023 = vmatprep.mubr.f32.mxu0 0.0
      %2024 = vmatmul.mubr.f32.gmra.mxu0 %v1818
      %v2025 = vpop.f32.mrf.mxu0
      %v2026 = vadd.f32 %v1751, %v2025
      %v2027 = vpop.f32.mrf.mxu0
      %2028 = vmatprep.mubr.f32.mxu0 0.0
      %2029 = vmatmul.mubr.f32.gmra.mxu0 %v1821
      %v2030 = vpop.f32.mrf.mxu0
      %v2031 = vadd.f32 %v1751, %v2030
      %v2032 = vpop.f32.mrf.mxu0
      %2033 = vmatprep.mubr.f32.mxu0 0.0
      %2034 = vmatmul.mubr.f32.gmra.mxu0 %v1824
      %v2035 = vpop.f32.mrf.mxu0
      %v2036 = vadd.f32 %v1751, %v2035
      %v2037 = vpop.f32.mrf.mxu0
      %2038 = vmatprep.mubr.f32.mxu0 0.0
      %2039 = vmatmul.mubr.f32.gmra.mxu0 %v1827
      %v2040 = vpop.f32.mrf.mxu0
      %v2041 = vadd.f32 %v1751, %v2040
      %v2042 = vpop.f32.mrf.mxu0
      %2043 = vmatprep.mubr.f32.mxu0 0.0
      %2044 = vmatmul.mubr.f32.gmra.mxu0 %v1830
      %v2045 = vpop.f32.mrf.mxu0
      %v2046 = vadd.f32 %v1751, %v2045
      %v2047 = vpop.f32.mrf.mxu0
      %2048 = vmatprep.mubr.f32.mxu0 0.0
      %2049 = vmatmul.mubr.f32.gmra.mxu0 %v1833
      %v2050 = vpop.f32.mrf.mxu0
      %v2051 = vadd.f32 %v1751, %v2050
      %v2052 = vpop.f32.mrf.mxu0
      %2053 = vmatprep.mubr.f32.mxu0 0.0
      %2054 = vmatmul.mubr.f32.gmra.mxu0 %v1836
      %v2055 = vpop.f32.mrf.mxu0
      %v2056 = vadd.f32 %v1751, %v2055
      %v2057 = vpop.f32.mrf.mxu0
      %2058 = vmatprep.mubr.f32.mxu0 0.0
      %2059 = vmatmul.mubr.f32.gmra.mxu0 %v1839
      %v2060 = vpop.f32.mrf.mxu0
      %v2061 = vadd.f32 %v1751, %v2060
      %v2062 = vpop.f32.mrf.mxu0
      %2063 = vmatprep.mubr.f32.mxu0 0.0
      %2064 = vmatmul.mubr.f32.gmra.mxu0 %v1842
      %v2065 = vpop.f32.mrf.mxu0
      %v2066 = vadd.f32 %v1751, %v2065
      %v2067 = vpop.f32.mrf.mxu0
      %2068 = vmatprep.mubr.f32.mxu0 0.0
      %2069 = vmatmul.mubr.f32.gmra.mxu0 %v1845
      %v2070 = vpop.f32.mrf.mxu0
      %v2071 = vadd.f32 %v1751, %v2070
      %v2072 = vpop.f32.mrf.mxu0
      %2073 = vmatprep.mubr.f32.mxu0 0.0
      %2074 = vmatmul.mubr.f32.gmra.mxu0 %v1848
      %v2075 = vpop.f32.mrf.mxu0
      %v2076 = vadd.f32 %v1751, %v2075
      %v2077 = vpop.f32.mrf.mxu0
      %2078 = vdwg.mxu0
      %v2079 = vmax.f32 %v1921, 0.0
      %v2080 = vmax.f32 %v1926, 0.0
      %v2081 = vmax.f32 %v1931, 0.0
      %v2082 = vmax.f32 %v1936, 0.0
      %v2083 = vmax.f32 %v1941, 0.0
      %v2084 = vmax.f32 %v1946, 0.0
      %v2085 = vmax.f32 %v1951, 0.0
      %v2086 = vmax.f32 %v1956, 0.0
      %v2087 = vmax.f32 %v1961, 0.0
      %v2088 = vmax.f32 %v1966, 0.0
      %v2089 = vmax.f32 %v1971, 0.0
      %v2090 = vmax.f32 %v1976, 0.0
      %v2091 = vmax.f32 %v1981, 0.0
      %v2092 = vmax.f32 %v1986, 0.0
      %v2093 = vmax.f32 %v1991, 0.0
      %v2094 = vmax.f32 %v1996, 0.0
      %v2095 = vmax.f32 %v2001, 0.0
      %v2096 = vmax.f32 %v2006, 0.0
      %v2097 = vmax.f32 %v2011, 0.0
      %v2098 = vmax.f32 %v2016, 0.0
      %v2099 = vmax.f32 %v2021, 0.0
      %v2100 = vmax.f32 %v2026, 0.0
      %v2101 = vmax.f32 %v2031, 0.0
      %v2102 = vmax.f32 %v2036, 0.0
      %v2103 = vmax.f32 %v2041, 0.0
      %v2104 = vmax.f32 %v2046, 0.0
      %v2105 = vmax.f32 %v2051, 0.0
      %v2106 = vmax.f32 %v2056, 0.0
      %v2107 = vmax.f32 %v2061, 0.0
      %v2108 = vmax.f32 %v2066, 0.0
      %v2109 = vmax.f32 %v2071, 0.0
      %v2110 = vmax.f32 %v2076, 0.0
      %v2143 = vrot.slane %v2079, 7
      %v2144 = vrot.slane %v2080, 7
      %v2145 = vsel %vm369, %v2143, %v2144
      %v2146 = vrot.slane %v2081, 7
      %v2147 = vrot.slane %v2082, 7
      %v2148 = vsel %vm369, %v2146, %v2147
      %v2149 = vrot.slane %v2083, 7
      %v2150 = vrot.slane %v2084, 7
      %v2151 = vsel %vm369, %v2149, %v2150
      %v2152 = vrot.slane %v2085, 7
      %v2153 = vrot.slane %v2086, 7
      %v2154 = vsel %vm369, %v2152, %v2153
      %v2155 = vrot.slane %v2087, 7
      %v2156 = vrot.slane %v2088, 7
      %v2157 = vsel %vm369, %v2155, %v2156
      %v2158 = vrot.slane %v2089, 7
      %v2159 = vrot.slane %v2090, 7
      %v2160 = vsel %vm369, %v2158, %v2159
      %v2161 = vrot.slane %v2091, 7
      %v2162 = vrot.slane %v2092, 7
      %v2163 = vsel %vm369, %v2161, %v2162
      %v2164 = vrot.slane %v2093, 7
      %v2165 = vrot.slane %v2094, 7
      %v2166 = vsel %vm369, %v2164, %v2165
      %v2167 = vrot.slane %v2095, 7
      %v2168 = vrot.slane %v2096, 7
      %v2169 = vsel %vm369, %v2167, %v2168
      %v2170 = vrot.slane %v2097, 7
      %v2171 = vrot.slane %v2098, 7
      %v2172 = vsel %vm369, %v2170, %v2171
      %v2173 = vrot.slane %v2099, 7
      %v2174 = vrot.slane %v2100, 7
      %v2175 = vsel %vm369, %v2173, %v2174
      %v2176 = vrot.slane %v2101, 7
      %v2177 = vrot.slane %v2102, 7
      %v2178 = vsel %vm369, %v2176, %v2177
      %v2179 = vrot.slane %v2103, 7
      %v2180 = vrot.slane %v2104, 7
      %v2181 = vsel %vm369, %v2179, %v2180
      %v2182 = vrot.slane %v2105, 7
      %v2183 = vrot.slane %v2106, 7
      %v2184 = vsel %vm369, %v2182, %v2183
      %v2185 = vrot.slane %v2107, 7
      %v2186 = vrot.slane %v2108, 7
      %v2187 = vsel %vm369, %v2185, %v2186
      %v2188 = vrot.slane %v2109, 7
      %v2189 = vrot.slane %v2110, 7
      %v2190 = vsel %vm369, %v2188, %v2189
      %v2239 = vsel %vm369, 0.0, %v2143
      %v2240 = vsel %vm369, 0.0, %v2146
      %v2241 = vsel %vm369, 0.0, %v2149
      %v2242 = vsel %vm369, 0.0, %v2152
      %v2243 = vsel %vm369, 0.0, %v2155
      %v2244 = vsel %vm369, 0.0, %v2158
      %v2245 = vsel %vm369, 0.0, %v2161
      %v2246 = vsel %vm369, 0.0, %v2164
      %v2247 = vsel %vm369, 0.0, %v2167
      %v2248 = vsel %vm369, 0.0, %v2170
      %v2249 = vsel %vm369, 0.0, %v2173
      %v2250 = vsel %vm369, 0.0, %v2176
      %v2251 = vsel %vm369, 0.0, %v2179
      %v2252 = vsel %vm369, 0.0, %v2182
      %v2253 = vsel %vm369, 0.0, %v2185
      %v2254 = vsel %vm369, 0.0, %v2188
      %v2255 = vsel %vm369, %v2144, 0.0
      %v2256 = vsel %vm369, %v2147, 0.0
      %v2257 = vsel %vm369, %v2150, 0.0
      %v2258 = vsel %vm369, %v2153, 0.0
      %v2259 = vsel %vm369, %v2156, 0.0
      %v2260 = vsel %vm369, %v2159, 0.0
      %v2261 = vsel %vm369, %v2162, 0.0
      %v2262 = vsel %vm369, %v2165, 0.0
      %v2263 = vsel %vm369, %v2168, 0.0
      %v2264 = vsel %vm369, %v2171, 0.0
      %v2265 = vsel %vm369, %v2174, 0.0
      %v2266 = vsel %vm369, %v2177, 0.0
      %v2267 = vsel %vm369, %v2180, 0.0
      %v2268 = vsel %vm369, %v2183, 0.0
      %v2269 = vsel %vm369, %v2186, 0.0
      %v2270 = vsel %vm369, %v2189, 0.0
      %v2303 = vrot.slane %v304, 7
      %v2304 = vrot.slane %v305, 7
      %v2305 = vsel %vm369, %v2303, %v2304
      %v2306 = vrot.slane %v306, 7
      %v2307 = vrot.slane %v307, 7
      %v2308 = vsel %vm369, %v2306, %v2307
      %v2309 = vrot.slane %v308, 7
      %v2310 = vrot.slane %v309, 7
      %v2311 = vsel %vm369, %v2309, %v2310
      %v2312 = vrot.slane %v310, 7
      %v2313 = vrot.slane %v311, 7
      %v2314 = vsel %vm369, %v2312, %v2313
      %v2315 = vrot.slane %v312, 7
      %v2316 = vrot.slane %v313, 7
      %v2317 = vsel %vm369, %v2315, %v2316
      %v2318 = vrot.slane %v314, 7
      %v2319 = vrot.slane %v315, 7
      %v2320 = vsel %vm369, %v2318, %v2319
      %v2321 = vrot.slane %v316, 7
      %v2322 = vrot.slane %v317, 7
      %v2323 = vsel %vm369, %v2321, %v2322
      %v2324 = vrot.slane %v318, 7
      %v2325 = vrot.slane %v319, 7
      %v2326 = vsel %vm369, %v2324, %v2325
      %v2327 = vrot.slane %v320, 7
      %v2328 = vrot.slane %v321, 7
      %v2329 = vsel %vm369, %v2327, %v2328
      %v2330 = vrot.slane %v322, 7
      %v2331 = vrot.slane %v323, 7
      %v2332 = vsel %vm369, %v2330, %v2331
      %v2333 = vrot.slane %v324, 7
      %v2334 = vrot.slane %v325, 7
      %v2335 = vsel %vm369, %v2333, %v2334
      %v2336 = vrot.slane %v326, 7
      %v2337 = vrot.slane %v327, 7
      %v2338 = vsel %vm369, %v2336, %v2337
      %v2339 = vrot.slane %v328, 7
      %v2340 = vrot.slane %v329, 7
      %v2341 = vsel %vm369, %v2339, %v2340
      %v2342 = vrot.slane %v330, 7
      %v2343 = vrot.slane %v331, 7
      %v2344 = vsel %vm369, %v2342, %v2343
      %v2345 = vrot.slane %v332, 7
      %v2346 = vrot.slane %v333, 7
      %v2347 = vsel %vm369, %v2345, %v2346
      %v2348 = vrot.slane %v334, 7
      %v2349 = vrot.slane %v335, 7
      %v2350 = vsel %vm369, %v2348, %v2349
      %v2383 = vsel %vm369, 0.0, %v2303
      %v2384 = vsel %vm369, 0.0, %v2306
      %v2385 = vsel %vm369, 0.0, %v2309
      %v2386 = vsel %vm369, 0.0, %v2312
      %v2387 = vsel %vm369, 0.0, %v2315
      %v2388 = vsel %vm369, 0.0, %v2318
      %v2389 = vsel %vm369, 0.0, %v2321
      %v2390 = vsel %vm369, 0.0, %v2324
      %v2391 = vsel %vm369, 0.0, %v2327
      %v2392 = vsel %vm369, 0.0, %v2330
      %v2393 = vsel %vm369, 0.0, %v2333
      %v2394 = vsel %vm369, 0.0, %v2336
      %v2395 = vsel %vm369, 0.0, %v2339
      %v2396 = vsel %vm369, 0.0, %v2342
      %v2397 = vsel %vm369, 0.0, %v2345
      %v2398 = vsel %vm369, 0.0, %v2348
      %v2399 = vsel %vm369, %v2304, 0.0
      %v2400 = vsel %vm369, %v2307, 0.0
      %v2401 = vsel %vm369, %v2310, 0.0
      %v2402 = vsel %vm369, %v2313, 0.0
      %v2403 = vsel %vm369, %v2316, 0.0
      %v2404 = vsel %vm369, %v2319, 0.0
      %v2405 = vsel %vm369, %v2322, 0.0
      %v2406 = vsel %vm369, %v2325, 0.0
      %v2407 = vsel %vm369, %v2328, 0.0
      %v2408 = vsel %vm369, %v2331, 0.0
      %v2409 = vsel %vm369, %v2334, 0.0
      %v2410 = vsel %vm369, %v2337, 0.0
      %v2411 = vsel %vm369, %v2340, 0.0
      %v2412 = vsel %vm369, %v2343, 0.0
      %v2413 = vsel %vm369, %v2346, 0.0
      %v2414 = vsel %vm369, %v2349, 0.0
      %2430 = vrot.lane.b32.xlu0 %v469, 8
      %v2431 = vpop.permute.xlu0 %2430
      %2432 = vrot.lane.b32.xlu0 %v371, 8
      %v2433 = vpop.permute.xlu0 %2432
      %2434 = vrot.lane.b32.xlu0 %v2383, 8
      %v2435 = vpop.permute.xlu0 %2434
      %2436 = vrot.lane.b32.xlu0 %v2305, 8
      %v2437 = vpop.permute.xlu0 %2436
      %2438 = vrot.lane.b32.xlu0 %v2384, 8
      %v2439 = vpop.permute.xlu0 %2438
      %2440 = vrot.lane.b32.xlu0 %v2308, 8
      %v2441 = vpop.permute.xlu0 %2440
      %2442 = vrot.lane.b32.xlu0 %v2385, 8
      %v2443 = vpop.permute.xlu0 %2442
      %2444 = vrot.lane.b32.xlu0 %v2311, 8
      %v2445 = vpop.permute.xlu0 %2444
      %2446 = vrot.lane.b32.xlu0 %v2386, 8
      %v2447 = vpop.permute.xlu0 %2446
      %2448 = vrot.lane.b32.xlu0 %v2314, 8
      %v2449 = vpop.permute.xlu0 %2448
      %2450 = vrot.lane.b32.xlu0 %v2387, 8
      %v2451 = vpop.permute.xlu0 %2450
      %2452 = vrot.lane.b32.xlu0 %v2317, 8
      %v2453 = vpop.permute.xlu0 %2452
      %2454 = vrot.lane.b32.xlu0 %v2388, 8
      %v2455 = vpop.permute.xlu0 %2454
      %2456 = vrot.lane.b32.xlu0 %v2320, 8
      %v2457 = vpop.permute.xlu0 %2456
      %2458 = vrot.lane.b32.xlu0 %v2389, 8
      %v2459 = vpop.permute.xlu0 %2458
      %2460 = vrot.lane.b32.xlu0 %v2323, 8
      %v2461 = vpop.permute.xlu0 %2460
      %2462 = vrot.lane.b32.xlu0 %v2390, 8
      %v2463 = vpop.permute.xlu0 %2462
      %2464 = vrot.lane.b32.xlu0 %v2326, 8
      %v2465 = vpop.permute.xlu0 %2464
      %2466 = vrot.lane.b32.xlu0 %v2391, 8
      %v2467 = vpop.permute.xlu0 %2466
      %2468 = vrot.lane.b32.xlu0 %v2329, 8
      %v2469 = vpop.permute.xlu0 %2468
      %2470 = vrot.lane.b32.xlu0 %v2392, 8
      %v2471 = vpop.permute.xlu0 %2470
      %2472 = vrot.lane.b32.xlu0 %v2332, 8
      %v2473 = vpop.permute.xlu0 %2472
      %2474 = vrot.lane.b32.xlu0 %v2393, 8
      %v2475 = vpop.permute.xlu0 %2474
      %2476 = vrot.lane.b32.xlu0 %v2335, 8
      %v2477 = vpop.permute.xlu0 %2476
      %2478 = vrot.lane.b32.xlu0 %v2394, 8
      %v2479 = vpop.permute.xlu0 %2478
      %2480 = vrot.lane.b32.xlu0 %v2338, 8
      %v2481 = vpop.permute.xlu0 %2480
      %2482 = vrot.lane.b32.xlu0 %v2395, 8
      %v2483 = vpop.permute.xlu0 %2482
      %2484 = vrot.lane.b32.xlu0 %v2341, 8
      %v2485 = vpop.permute.xlu0 %2484
      %2486 = vrot.lane.b32.xlu0 %v2396, 8
      %v2487 = vpop.permute.xlu0 %2486
      %2488 = vrot.lane.b32.xlu0 %v2344, 8
      %v2489 = vpop.permute.xlu0 %2488
      %2490 = vrot.lane.b32.xlu0 %v2397, 8
      %v2491 = vpop.permute.xlu0 %2490
      %2492 = vrot.lane.b32.xlu0 %v2347, 8
      %v2493 = vpop.permute.xlu0 %2492
      %v2556 = vrot.slane %v2239, 1
      %v2557 = vrot.slane %v2145, 1
      %v2558 = vsel %vm535, %v2556, %v2557
      %v2559 = vrot.slane %v2255, 1
      %v2560 = vsel %vm535, %v2557, %v2559
      %v2561 = vrot.slane %v2240, 1
      %v2562 = vrot.slane %v2148, 1
      %v2563 = vsel %vm535, %v2561, %v2562
      %v2564 = vrot.slane %v2256, 1
      %v2565 = vsel %vm535, %v2562, %v2564
      %v2566 = vrot.slane %v2241, 1
      %v2567 = vrot.slane %v2151, 1
      %v2568 = vsel %vm535, %v2566, %v2567
      %v2569 = vrot.slane %v2257, 1
      %v2570 = vsel %vm535, %v2567, %v2569
      %v2571 = vrot.slane %v2242, 1
      %v2572 = vrot.slane %v2154, 1
      %v2573 = vsel %vm535, %v2571, %v2572
      %v2574 = vrot.slane %v2258, 1
      %v2575 = vsel %vm535, %v2572, %v2574
      %v2576 = vrot.slane %v2243, 1
      %v2577 = vrot.slane %v2157, 1
      %v2578 = vsel %vm535, %v2576, %v2577
      %v2579 = vrot.slane %v2259, 1
      %v2580 = vsel %vm535, %v2577, %v2579
      %v2581 = vrot.slane %v2244, 1
      %v2582 = vrot.slane %v2160, 1
      %v2583 = vsel %vm535, %v2581, %v2582
      %v2584 = vrot.slane %v2260, 1
      %v2585 = vsel %vm535, %v2582, %v2584
      %v2586 = vrot.slane %v2245, 1
      %v2587 = vrot.slane %v2163, 1
      %v2588 = vsel %vm535, %v2586, %v2587
      %v2589 = vrot.slane %v2261, 1
      %v2590 = vsel %vm535, %v2587, %v2589
      %v2591 = vrot.slane %v2246, 1
      %v2592 = vrot.slane %v2166, 1
      %v2593 = vsel %vm535, %v2591, %v2592
      %v2594 = vrot.slane %v2262, 1
      %v2595 = vsel %vm535, %v2592, %v2594
      %v2596 = vrot.slane %v2247, 1
      %v2597 = vrot.slane %v2169, 1
      %v2598 = vsel %vm535, %v2596, %v2597
      %v2599 = vrot.slane %v2263, 1
      %v2600 = vsel %vm535, %v2597, %v2599
      %v2601 = vrot.slane %v2248, 1
      %v2602 = vrot.slane %v2172, 1
      %v2603 = vsel %vm535, %v2601, %v2602
      %v2604 = vrot.slane %v2264, 1
      %v2605 = vsel %vm535, %v2602, %v2604
      %v2606 = vrot.slane %v2249, 1
      %v2607 = vrot.slane %v2175, 1
      %v2608 = vsel %vm535, %v2606, %v2607
      %v2609 = vrot.slane %v2265, 1
      %v2610 = vsel %vm535, %v2607, %v2609
      %v2611 = vrot.slane %v2250, 1
      %v2612 = vrot.slane %v2178, 1
      %v2613 = vsel %vm535, %v2611, %v2612
      %v2614 = vrot.slane %v2266, 1
      %v2615 = vsel %vm535, %v2612, %v2614
      %v2616 = vrot.slane %v2251, 1
      %v2617 = vrot.slane %v2181, 1
      %v2618 = vsel %vm535, %v2616, %v2617
      %v2619 = vrot.slane %v2267, 1
      %v2620 = vsel %vm535, %v2617, %v2619
      %v2621 = vrot.slane %v2252, 1
      %v2622 = vrot.slane %v2184, 1
      %v2623 = vsel %vm535, %v2621, %v2622
      %v2624 = vrot.slane %v2268, 1
      %v2625 = vsel %vm535, %v2622, %v2624
      %v2626 = vrot.slane %v2253, 1
      %v2627 = vrot.slane %v2187, 1
      %v2628 = vsel %vm535, %v2626, %v2627
      %v2629 = vrot.slane %v2269, 1
      %v2630 = vsel %vm535, %v2627, %v2629
      %2631 = vrot.lane.b32.xlu0 %v538, 12
      %v2632 = vpop.permute.xlu0 %2631
      %2633 = vrot.lane.b32.xlu0 %v540, 12
      %v2634 = vpop.permute.xlu0 %2633
      %2635 = vrot.lane.b32.xlu0 %v2558, 12
      %v2636 = vpop.permute.xlu0 %2635
      %2637 = vrot.lane.b32.xlu0 %v2560, 12
      %v2638 = vpop.permute.xlu0 %2637
      %2639 = vrot.lane.b32.xlu0 %v2563, 12
      %v2640 = vpop.permute.xlu0 %2639
      %2641 = vrot.lane.b32.xlu0 %v2565, 12
      %v2642 = vpop.permute.xlu0 %2641
      %2643 = vrot.lane.b32.xlu0 %v2568, 12
      %v2644 = vpop.permute.xlu0 %2643
      %2645 = vrot.lane.b32.xlu0 %v2570, 12
      %v2646 = vpop.permute.xlu0 %2645
      %2647 = vrot.lane.b32.xlu0 %v2573, 12
      %v2648 = vpop.permute.xlu0 %2647
      %2649 = vrot.lane.b32.xlu0 %v2575, 12
      %v2650 = vpop.permute.xlu0 %2649
      %2651 = vrot.lane.b32.xlu0 %v2578, 12
      %v2652 = vpop.permute.xlu0 %2651
      %2653 = vrot.lane.b32.xlu0 %v2580, 12
      %v2654 = vpop.permute.xlu0 %2653
      %2655 = vrot.lane.b32.xlu0 %v2583, 12
      %v2656 = vpop.permute.xlu0 %2655
      %2657 = vrot.lane.b32.xlu0 %v2585, 12
      %v2658 = vpop.permute.xlu0 %2657
      %2659 = vrot.lane.b32.xlu0 %v2588, 12
      %v2660 = vpop.permute.xlu0 %2659
      %2661 = vrot.lane.b32.xlu0 %v2590, 12
      %v2662 = vpop.permute.xlu0 %2661
      %2663 = vrot.lane.b32.xlu0 %v2593, 12
      %v2664 = vpop.permute.xlu0 %2663
      %2665 = vrot.lane.b32.xlu0 %v2595, 12
      %v2666 = vpop.permute.xlu0 %2665
      %2667 = vrot.lane.b32.xlu0 %v2598, 12
      %v2668 = vpop.permute.xlu0 %2667
      %2669 = vrot.lane.b32.xlu0 %v2600, 12
      %v2670 = vpop.permute.xlu0 %2669
      %2671 = vrot.lane.b32.xlu0 %v2603, 12
      %v2672 = vpop.permute.xlu0 %2671
      %2673 = vrot.lane.b32.xlu0 %v2605, 12
      %v2674 = vpop.permute.xlu0 %2673
      %2675 = vrot.lane.b32.xlu0 %v2608, 12
      %v2676 = vpop.permute.xlu0 %2675
      %2677 = vrot.lane.b32.xlu0 %v2610, 12
      %v2678 = vpop.permute.xlu0 %2677
      %2679 = vrot.lane.b32.xlu0 %v2613, 12
      %v2680 = vpop.permute.xlu0 %2679
      %2681 = vrot.lane.b32.xlu0 %v2615, 12
      %v2682 = vpop.permute.xlu0 %2681
      %2683 = vrot.lane.b32.xlu0 %v2618, 12
      %v2684 = vpop.permute.xlu0 %2683
      %2685 = vrot.lane.b32.xlu0 %v2620, 12
      %v2686 = vpop.permute.xlu0 %2685
      %2687 = vrot.lane.b32.xlu0 %v2623, 12
      %v2688 = vpop.permute.xlu0 %2687
      %2689 = vrot.lane.b32.xlu0 %v2625, 12
      %v2690 = vpop.permute.xlu0 %2689
      %2691 = vrot.lane.b32.xlu0 %v2628, 12
      %v2692 = vpop.permute.xlu0 %2691
      %2693 = vrot.lane.b32.xlu0 %v2630, 12
      %v2694 = vpop.permute.xlu0 %2693
      %v2742 = vrot.slane %v2383, 1
      %v2743 = vrot.slane %v2305, 1
      %v2744 = vsel %vm535, %v2742, %v2743
      %v2745 = vrot.slane %v2399, 1
      %v2746 = vsel %vm535, %v2743, %v2745
      %v2747 = vrot.slane %v2384, 1
      %v2748 = vrot.slane %v2308, 1
      %v2749 = vsel %vm535, %v2747, %v2748
      %v2750 = vrot.slane %v2400, 1
      %v2751 = vsel %vm535, %v2748, %v2750
      %v2752 = vrot.slane %v2385, 1
      %v2753 = vrot.slane %v2311, 1
      %v2754 = vsel %vm535, %v2752, %v2753
      %v2755 = vrot.slane %v2401, 1
      %v2756 = vsel %vm535, %v2753, %v2755
      %v2757 = vrot.slane %v2386, 1
      %v2758 = vrot.slane %v2314, 1
      %v2759 = vsel %vm535, %v2757, %v2758
      %v2760 = vrot.slane %v2402, 1
      %v2761 = vsel %vm535, %v2758, %v2760
      %v2762 = vrot.slane %v2387, 1
      %v2763 = vrot.slane %v2317, 1
      %v2764 = vsel %vm535, %v2762, %v2763
      %v2765 = vrot.slane %v2403, 1
      %v2766 = vsel %vm535, %v2763, %v2765
      %v2767 = vrot.slane %v2388, 1
      %v2768 = vrot.slane %v2320, 1
      %v2769 = vsel %vm535, %v2767, %v2768
      %v2770 = vrot.slane %v2404, 1
      %v2771 = vsel %vm535, %v2768, %v2770
      %v2772 = vrot.slane %v2389, 1
      %v2773 = vrot.slane %v2323, 1
      %v2774 = vsel %vm535, %v2772, %v2773
      %v2775 = vrot.slane %v2405, 1
      %v2776 = vsel %vm535, %v2773, %v2775
      %v2777 = vrot.slane %v2390, 1
      %v2778 = vrot.slane %v2326, 1
      %v2779 = vsel %vm535, %v2777, %v2778
      %v2780 = vrot.slane %v2406, 1
      %v2781 = vsel %vm535, %v2778, %v2780
      %v2782 = vrot.slane %v2391, 1
      %v2783 = vrot.slane %v2329, 1
      %v2784 = vsel %vm535, %v2782, %v2783
      %v2785 = vrot.slane %v2407, 1
      %v2786 = vsel %vm535, %v2783, %v2785
      %v2787 = vrot.slane %v2392, 1
      %v2788 = vrot.slane %v2332, 1
      %v2789 = vsel %vm535, %v2787, %v2788
      %v2790 = vrot.slane %v2408, 1
      %v2791 = vsel %vm535, %v2788, %v2790
      %v2792 = vrot.slane %v2393, 1
      %v2793 = vrot.slane %v2335, 1
      %v2794 = vsel %vm535, %v2792, %v2793
      %v2795 = vrot.slane %v2409, 1
      %v2796 = vsel %vm535, %v2793, %v2795
      %v2797 = vrot.slane %v2394, 1
      %v2798 = vrot.slane %v2338, 1
      %v2799 = vsel %vm535, %v2797, %v2798
      %v2800 = vrot.slane %v2410, 1
      %v2801 = vsel %vm535, %v2798, %v2800
      %v2802 = vrot.slane %v2395, 1
      %v2803 = vrot.slane %v2341, 1
      %v2804 = vsel %vm535, %v2802, %v2803
      %v2805 = vrot.slane %v2411, 1
      %v2806 = vsel %vm535, %v2803, %v2805
      %v2807 = vrot.slane %v2396, 1
      %v2808 = vrot.slane %v2344, 1
      %v2809 = vsel %vm535, %v2807, %v2808
      %v2810 = vrot.slane %v2412, 1
      %v2811 = vsel %vm535, %v2808, %v2810
      %v2812 = vrot.slane %v2397, 1
      %v2813 = vrot.slane %v2347, 1
      %v2814 = vsel %vm535, %v2812, %v2813
      %v2815 = vrot.slane %v2413, 1
      %v2816 = vsel %vm535, %v2813, %v2815
      %2817 = vrot.lane.b32.xlu0 %v538, 20
      %v2818 = vpop.permute.xlu0 %2817
      %2819 = vrot.lane.b32.xlu0 %v540, 20
      %v2820 = vpop.permute.xlu0 %2819
      %2821 = vrot.lane.b32.xlu0 %v2744, 20
      %v2822 = vpop.permute.xlu0 %2821
      %2823 = vrot.lane.b32.xlu0 %v2746, 20
      %v2824 = vpop.permute.xlu0 %2823
      %2825 = vrot.lane.b32.xlu0 %v2749, 20
      %v2826 = vpop.permute.xlu0 %2825
      %2827 = vrot.lane.b32.xlu0 %v2751, 20
      %v2828 = vpop.permute.xlu0 %2827
      %2829 = vrot.lane.b32.xlu0 %v2754, 20
      %v2830 = vpop.permute.xlu0 %2829
      %2831 = vrot.lane.b32.xlu0 %v2756, 20
      %v2832 = vpop.permute.xlu0 %2831
      %2833 = vrot.lane.b32.xlu0 %v2759, 20
      %v2834 = vpop.permute.xlu0 %2833
      %2835 = vrot.lane.b32.xlu0 %v2761, 20
      %v2836 = vpop.permute.xlu0 %2835
      %2837 = vrot.lane.b32.xlu0 %v2764, 20
      %v2838 = vpop.permute.xlu0 %2837
      %2839 = vrot.lane.b32.xlu0 %v2766, 20
      %v2840 = vpop.permute.xlu0 %2839
      %2841 = vrot.lane.b32.xlu0 %v2769, 20
      %v2842 = vpop.permute.xlu0 %2841
      %2843 = vrot.lane.b32.xlu0 %v2771, 20
      %v2844 = vpop.permute.xlu0 %2843
      %2845 = vrot.lane.b32.xlu0 %v2774, 20
      %v2846 = vpop.permute.xlu0 %2845
      %2847 = vrot.lane.b32.xlu0 %v2776, 20
      %v2848 = vpop.permute.xlu0 %2847
      %2849 = vrot.lane.b32.xlu0 %v2779, 20
      %v2850 = vpop.permute.xlu0 %2849
      %2851 = vrot.lane.b32.xlu0 %v2781, 20
      %v2852 = vpop.permute.xlu0 %2851
      %2853 = vrot.lane.b32.xlu0 %v2784, 20
      %v2854 = vpop.permute.xlu0 %2853
      %2855 = vrot.lane.b32.xlu0 %v2786, 20
      %v2856 = vpop.permute.xlu0 %2855
      %2857 = vrot.lane.b32.xlu0 %v2789, 20
      %v2858 = vpop.permute.xlu0 %2857
      %2859 = vrot.lane.b32.xlu0 %v2791, 20
      %v2860 = vpop.permute.xlu0 %2859
      %2861 = vrot.lane.b32.xlu0 %v2794, 20
      %v2862 = vpop.permute.xlu0 %2861
      %2863 = vrot.lane.b32.xlu0 %v2796, 20
      %v2864 = vpop.permute.xlu0 %2863
      %2865 = vrot.lane.b32.xlu0 %v2799, 20
      %v2866 = vpop.permute.xlu0 %2865
      %2867 = vrot.lane.b32.xlu0 %v2801, 20
      %v2868 = vpop.permute.xlu0 %2867
      %2869 = vrot.lane.b32.xlu0 %v2804, 20
      %v2870 = vpop.permute.xlu0 %2869
      %2871 = vrot.lane.b32.xlu0 %v2806, 20
      %v2872 = vpop.permute.xlu0 %2871
      %2873 = vrot.lane.b32.xlu0 %v2809, 20
      %v2874 = vpop.permute.xlu0 %2873
      %2875 = vrot.lane.b32.xlu0 %v2811, 20
      %v2876 = vpop.permute.xlu0 %2875
      %2877 = vrot.lane.b32.xlu0 %v2814, 20
      %v2878 = vpop.permute.xlu0 %2877
      %2879 = vrot.lane.b32.xlu0 %v2816, 20
      %v2880 = vpop.permute.xlu0 %2879
      %v2913 = vrot.slane %v2239, 2
      %v2914 = vrot.slane %v2145, 2
      %v2915 = vsel %vm712, %v2913, %v2914
      %v2916 = vrot.slane %v2255, 2
      %v2917 = vsel %vm712, %v2914, %v2916
      %v2918 = vrot.slane %v2240, 2
      %v2919 = vrot.slane %v2148, 2
      %v2920 = vsel %vm712, %v2918, %v2919
      %v2921 = vrot.slane %v2256, 2
      %v2922 = vsel %vm712, %v2919, %v2921
      %v2923 = vrot.slane %v2241, 2
      %v2924 = vrot.slane %v2151, 2
      %v2925 = vsel %vm712, %v2923, %v2924
      %v2926 = vrot.slane %v2257, 2
      %v2927 = vsel %vm712, %v2924, %v2926
      %v2928 = vrot.slane %v2242, 2
      %v2929 = vrot.slane %v2154, 2
      %v2930 = vsel %vm712, %v2928, %v2929
      %v2931 = vrot.slane %v2258, 2
      %v2932 = vsel %vm712, %v2929, %v2931
      %v2933 = vrot.slane %v2243, 2
      %v2934 = vrot.slane %v2157, 2
      %v2935 = vsel %vm712, %v2933, %v2934
      %v2936 = vrot.slane %v2259, 2
      %v2937 = vsel %vm712, %v2934, %v2936
      %v2938 = vrot.slane %v2244, 2
      %v2939 = vrot.slane %v2160, 2
      %v2940 = vsel %vm712, %v2938, %v2939
      %v2941 = vrot.slane %v2260, 2
      %v2942 = vsel %vm712, %v2939, %v2941
      %v2943 = vrot.slane %v2245, 2
      %v2944 = vrot.slane %v2163, 2
      %v2945 = vsel %vm712, %v2943, %v2944
      %v2946 = vrot.slane %v2261, 2
      %v2947 = vsel %vm712, %v2944, %v2946
      %v2948 = vrot.slane %v2246, 2
      %v2949 = vrot.slane %v2166, 2
      %v2950 = vsel %vm712, %v2948, %v2949
      %v2951 = vrot.slane %v2262, 2
      %v2952 = vsel %vm712, %v2949, %v2951
      %v2953 = vrot.slane %v2247, 2
      %v2954 = vrot.slane %v2169, 2
      %v2955 = vsel %vm712, %v2953, %v2954
      %v2956 = vrot.slane %v2263, 2
      %v2957 = vsel %vm712, %v2954, %v2956
      %v2958 = vrot.slane %v2248, 2
      %v2959 = vrot.slane %v2172, 2
      %v2960 = vsel %vm712, %v2958, %v2959
      %v2961 = vrot.slane %v2264, 2
      %v2962 = vsel %vm712, %v2959, %v2961
      %v2963 = vrot.slane %v2249, 2
      %v2964 = vrot.slane %v2175, 2
      %v2965 = vsel %vm712, %v2963, %v2964
      %v2966 = vrot.slane %v2265, 2
      %v2967 = vsel %vm712, %v2964, %v2966
      %v2968 = vrot.slane %v2250, 2
      %v2969 = vrot.slane %v2178, 2
      %v2970 = vsel %vm712, %v2968, %v2969
      %v2971 = vrot.slane %v2266, 2
      %v2972 = vsel %vm712, %v2969, %v2971
      %v2973 = vrot.slane %v2251, 2
      %v2974 = vrot.slane %v2181, 2
      %v2975 = vsel %vm712, %v2973, %v2974
      %v2976 = vrot.slane %v2267, 2
      %v2977 = vsel %vm712, %v2974, %v2976
      %v2978 = vrot.slane %v2252, 2
      %v2979 = vrot.slane %v2184, 2
      %v2980 = vsel %vm712, %v2978, %v2979
      %v2981 = vrot.slane %v2268, 2
      %v2982 = vsel %vm712, %v2979, %v2981
      %v2983 = vrot.slane %v2253, 2
      %v2984 = vrot.slane %v2187, 2
      %v2985 = vsel %vm712, %v2983, %v2984
      %v2986 = vrot.slane %v2269, 2
      %v2987 = vsel %vm712, %v2984, %v2986
      %2988 = vrot.lane.b32.xlu0 %v715, 24
      %v2989 = vpop.permute.xlu0 %2988
      %2990 = vrot.lane.b32.xlu0 %v717, 24
      %v2991 = vpop.permute.xlu0 %2990
      %2992 = vrot.lane.b32.xlu0 %v2915, 24
      %v2993 = vpop.permute.xlu0 %2992
      %2994 = vrot.lane.b32.xlu0 %v2917, 24
      %v2995 = vpop.permute.xlu0 %2994
      %2996 = vrot.lane.b32.xlu0 %v2920, 24
      %v2997 = vpop.permute.xlu0 %2996
      %2998 = vrot.lane.b32.xlu0 %v2922, 24
      %v2999 = vpop.permute.xlu0 %2998
      %3000 = vrot.lane.b32.xlu0 %v2925, 24
      %v3001 = vpop.permute.xlu0 %3000
      %3002 = vrot.lane.b32.xlu0 %v2927, 24
      %v3003 = vpop.permute.xlu0 %3002
      %3004 = vrot.lane.b32.xlu0 %v2930, 24
      %v3005 = vpop.permute.xlu0 %3004
      %3006 = vrot.lane.b32.xlu0 %v2932, 24
      %v3007 = vpop.permute.xlu0 %3006
      %3008 = vrot.lane.b32.xlu0 %v2935, 24
      %v3009 = vpop.permute.xlu0 %3008
      %3010 = vrot.lane.b32.xlu0 %v2937, 24
      %v3011 = vpop.permute.xlu0 %3010
      %3012 = vrot.lane.b32.xlu0 %v2940, 24
      %v3013 = vpop.permute.xlu0 %3012
      %3014 = vrot.lane.b32.xlu0 %v2942, 24
      %v3015 = vpop.permute.xlu0 %3014
      %3016 = vrot.lane.b32.xlu0 %v2945, 24
      %v3017 = vpop.permute.xlu0 %3016
      %3018 = vrot.lane.b32.xlu0 %v2947, 24
      %v3019 = vpop.permute.xlu0 %3018
      %3020 = vrot.lane.b32.xlu0 %v2950, 24
      %v3021 = vpop.permute.xlu0 %3020
      %3022 = vrot.lane.b32.xlu0 %v2952, 24
      %v3023 = vpop.permute.xlu0 %3022
      %3024 = vrot.lane.b32.xlu0 %v2955, 24
      %v3025 = vpop.permute.xlu0 %3024
      %3026 = vrot.lane.b32.xlu0 %v2957, 24
      %v3027 = vpop.permute.xlu0 %3026
      %3028 = vrot.lane.b32.xlu0 %v2960, 24
      %v3029 = vpop.permute.xlu0 %3028
      %3030 = vrot.lane.b32.xlu0 %v2962, 24
      %v3031 = vpop.permute.xlu0 %3030
      %3032 = vrot.lane.b32.xlu0 %v2965, 24
      %v3033 = vpop.permute.xlu0 %3032
      %3034 = vrot.lane.b32.xlu0 %v2967, 24
      %v3035 = vpop.permute.xlu0 %3034
      %3036 = vrot.lane.b32.xlu0 %v2970, 24
      %v3037 = vpop.permute.xlu0 %3036
      %3038 = vrot.lane.b32.xlu0 %v2972, 24
      %v3039 = vpop.permute.xlu0 %3038
      %3040 = vrot.lane.b32.xlu0 %v2975, 24
      %v3041 = vpop.permute.xlu0 %3040
      %3042 = vrot.lane.b32.xlu0 %v2977, 24
      %v3043 = vpop.permute.xlu0 %3042
      %3044 = vrot.lane.b32.xlu0 %v2980, 24
      %v3045 = vpop.permute.xlu0 %3044
      %3046 = vrot.lane.b32.xlu0 %v2982, 24
      %v3047 = vpop.permute.xlu0 %3046
      %3048 = vrot.lane.b32.xlu0 %v2985, 24
      %v3049 = vpop.permute.xlu0 %3048
      %3050 = vrot.lane.b32.xlu0 %v2987, 24
      %v3051 = vpop.permute.xlu0 %3050
      %v3084 = vrot.slane %v2383, 2
      %v3085 = vrot.slane %v2305, 2
      %v3086 = vsel %vm712, %v3084, %v3085
      %v3087 = vrot.slane %v2399, 2
      %v3088 = vsel %vm712, %v3085, %v3087
      %v3089 = vrot.slane %v2384, 2
      %v3090 = vrot.slane %v2308, 2
      %v3091 = vsel %vm712, %v3089, %v3090
      %v3092 = vrot.slane %v2400, 2
      %v3093 = vsel %vm712, %v3090, %v3092
      %v3094 = vrot.slane %v2385, 2
      %v3095 = vrot.slane %v2311, 2
      %v3096 = vsel %vm712, %v3094, %v3095
      %v3097 = vrot.slane %v2401, 2
      %v3098 = vsel %vm712, %v3095, %v3097
      %v3099 = vrot.slane %v2386, 2
      %v3100 = vrot.slane %v2314, 2
      %v3101 = vsel %vm712, %v3099, %v3100
      %v3102 = vrot.slane %v2402, 2
      %v3103 = vsel %vm712, %v3100, %v3102
      %v3104 = vrot.slane %v2387, 2
      %v3105 = vrot.slane %v2317, 2
      %v3106 = vsel %vm712, %v3104, %v3105
      %v3107 = vrot.slane %v2403, 2
      %v3108 = vsel %vm712, %v3105, %v3107
      %v3109 = vrot.slane %v2388, 2
      %v3110 = vrot.slane %v2320, 2
      %v3111 = vsel %vm712, %v3109, %v3110
      %v3112 = vrot.slane %v2404, 2
      %v3113 = vsel %vm712, %v3110, %v3112
      %v3114 = vrot.slane %v2389, 2
      %v3115 = vrot.slane %v2323, 2
      %v3116 = vsel %vm712, %v3114, %v3115
      %v3117 = vrot.slane %v2405, 2
      %v3118 = vsel %vm712, %v3115, %v3117
      %v3119 = vrot.slane %v2390, 2
      %v3120 = vrot.slane %v2326, 2
      %v3121 = vsel %vm712, %v3119, %v3120
      %v3122 = vrot.slane %v2406, 2
      %v3123 = vsel %vm712, %v3120, %v3122
      %v3124 = vrot.slane %v2391, 2
      %v3125 = vrot.slane %v2329, 2
      %v3126 = vsel %vm712, %v3124, %v3125
      %v3127 = vrot.slane %v2407, 2
      %v3128 = vsel %vm712, %v3125, %v3127
      %v3129 = vrot.slane %v2392, 2
      %v3130 = vrot.slane %v2332, 2
      %v3131 = vsel %vm712, %v3129, %v3130
      %v3132 = vrot.slane %v2408, 2
      %v3133 = vsel %vm712, %v3130, %v3132
      %v3134 = vrot.slane %v2393, 2
      %v3135 = vrot.slane %v2335, 2
      %v3136 = vsel %vm712, %v3134, %v3135
      %v3137 = vrot.slane %v2409, 2
      %v3138 = vsel %vm712, %v3135, %v3137
      %v3139 = vrot.slane %v2394, 2
      %v3140 = vrot.slane %v2338, 2
      %v3141 = vsel %vm712, %v3139, %v3140
      %v3142 = vrot.slane %v2410, 2
      %v3143 = vsel %vm712, %v3140, %v3142
      %v3144 = vrot.slane %v2395, 2
      %v3145 = vrot.slane %v2341, 2
      %v3146 = vsel %vm712, %v3144, %v3145
      %v3147 = vrot.slane %v2411, 2
      %v3148 = vsel %vm712, %v3145, %v3147
      %v3149 = vrot.slane %v2396, 2
      %v3150 = vrot.slane %v2344, 2
      %v3151 = vsel %vm712, %v3149, %v3150
      %v3152 = vrot.slane %v2412, 2
      %v3153 = vsel %vm712, %v3150, %v3152
      %v3154 = vrot.slane %v2397, 2
      %v3155 = vrot.slane %v2347, 2
      %v3156 = vsel %vm712, %v3154, %v3155
      %v3157 = vrot.slane %v2413, 2
      %v3158 = vsel %vm712, %v3155, %v3157
      %3159 = vrot.lane.b32.xlu0 %v3086, 32
      %v3160 = vpop.permute.xlu0 %3159
      %3161 = vrot.lane.b32.xlu0 %v3088, 32
      %v3162 = vpop.permute.xlu0 %3161
      %3163 = vrot.lane.b32.xlu0 %v3091, 32
      %v3164 = vpop.permute.xlu0 %3163
      %3165 = vrot.lane.b32.xlu0 %v3093, 32
      %v3166 = vpop.permute.xlu0 %3165
      %3167 = vrot.lane.b32.xlu0 %v3096, 32
      %v3168 = vpop.permute.xlu0 %3167
      %3169 = vrot.lane.b32.xlu0 %v3098, 32
      %v3170 = vpop.permute.xlu0 %3169
      %3171 = vrot.lane.b32.xlu0 %v3101, 32
      %v3172 = vpop.permute.xlu0 %3171
      %3173 = vrot.lane.b32.xlu0 %v3103, 32
      %v3174 = vpop.permute.xlu0 %3173
      %3175 = vrot.lane.b32.xlu0 %v3106, 32
      %v3176 = vpop.permute.xlu0 %3175
      %3177 = vrot.lane.b32.xlu0 %v3108, 32
      %v3178 = vpop.permute.xlu0 %3177
      %3179 = vrot.lane.b32.xlu0 %v3111, 32
      %v3180 = vpop.permute.xlu0 %3179
      %3181 = vrot.lane.b32.xlu0 %v3113, 32
      %v3182 = vpop.permute.xlu0 %3181
      %3183 = vrot.lane.b32.xlu0 %v3116, 32
      %v3184 = vpop.permute.xlu0 %3183
      %3185 = vrot.lane.b32.xlu0 %v3118, 32
      %v3186 = vpop.permute.xlu0 %3185
      %3187 = vrot.lane.b32.xlu0 %v3121, 32
      %v3188 = vpop.permute.xlu0 %3187
      %3189 = vrot.lane.b32.xlu0 %v3123, 32
      %v3190 = vpop.permute.xlu0 %3189
      %3191 = vrot.lane.b32.xlu0 %v3126, 32
      %v3192 = vpop.permute.xlu0 %3191
      %3193 = vrot.lane.b32.xlu0 %v3128, 32
      %v3194 = vpop.permute.xlu0 %3193
      %3195 = vrot.lane.b32.xlu0 %v3131, 32
      %v3196 = vpop.permute.xlu0 %3195
      %3197 = vrot.lane.b32.xlu0 %v3133, 32
      %v3198 = vpop.permute.xlu0 %3197
      %3199 = vrot.lane.b32.xlu0 %v3136, 32
      %v3200 = vpop.permute.xlu0 %3199
      %3201 = vrot.lane.b32.xlu0 %v3138, 32
      %v3202 = vpop.permute.xlu0 %3201
      %3203 = vrot.lane.b32.xlu0 %v3141, 32
      %v3204 = vpop.permute.xlu0 %3203
      %3205 = vrot.lane.b32.xlu0 %v3143, 32
      %v3206 = vpop.permute.xlu0 %3205
      %3207 = vrot.lane.b32.xlu0 %v3146, 32
      %v3208 = vpop.permute.xlu0 %3207
      %3209 = vrot.lane.b32.xlu0 %v3148, 32
      %v3210 = vpop.permute.xlu0 %3209
      %3211 = vrot.lane.b32.xlu0 %v3151, 32
      %v3212 = vpop.permute.xlu0 %3211
      %3213 = vrot.lane.b32.xlu0 %v3153, 32
      %v3214 = vpop.permute.xlu0 %3213
      %3215 = vrot.lane.b32.xlu0 %v3156, 32
      %v3216 = vpop.permute.xlu0 %3215
      %3217 = vrot.lane.b32.xlu0 %v3158, 32
      %v3218 = vpop.permute.xlu0 %3217
      %3250 = vrot.lane.b32.xlu0 %v2239, 36
      %v3251 = vpop.permute.xlu0 %3250
      %3252 = vrot.lane.b32.xlu0 %v2145, 36
      %v3253 = vpop.permute.xlu0 %3252
      %3254 = vrot.lane.b32.xlu0 %v2240, 36
      %v3255 = vpop.permute.xlu0 %3254
      %3256 = vrot.lane.b32.xlu0 %v2148, 36
      %v3257 = vpop.permute.xlu0 %3256
      %3258 = vrot.lane.b32.xlu0 %v2241, 36
      %v3259 = vpop.permute.xlu0 %3258
      %3260 = vrot.lane.b32.xlu0 %v2151, 36
      %v3261 = vpop.permute.xlu0 %3260
      %3262 = vrot.lane.b32.xlu0 %v2242, 36
      %v3263 = vpop.permute.xlu0 %3262
      %3264 = vrot.lane.b32.xlu0 %v2154, 36
      %v3265 = vpop.permute.xlu0 %3264
      %3266 = vrot.lane.b32.xlu0 %v2243, 36
      %v3267 = vpop.permute.xlu0 %3266
      %3268 = vrot.lane.b32.xlu0 %v2157, 36
      %v3269 = vpop.permute.xlu0 %3268
      %3270 = vrot.lane.b32.xlu0 %v2244, 36
      %v3271 = vpop.permute.xlu0 %3270
      %3272 = vrot.lane.b32.xlu0 %v2160, 36
      %v3273 = vpop.permute.xlu0 %3272
      %3274 = vrot.lane.b32.xlu0 %v2245, 36
      %v3275 = vpop.permute.xlu0 %3274
      %3276 = vrot.lane.b32.xlu0 %v2163, 36
      %v3277 = vpop.permute.xlu0 %3276
      %3278 = vrot.lane.b32.xlu0 %v2246, 36
      %v3279 = vpop.permute.xlu0 %3278
      %3280 = vrot.lane.b32.xlu0 %v2166, 36
      %v3281 = vpop.permute.xlu0 %3280
      %3282 = vrot.lane.b32.xlu0 %v2247, 36
      %v3283 = vpop.permute.xlu0 %3282
      %3284 = vrot.lane.b32.xlu0 %v2169, 36
      %v3285 = vpop.permute.xlu0 %3284
      %3286 = vrot.lane.b32.xlu0 %v2248, 36
      %v3287 = vpop.permute.xlu0 %3286
      %3288 = vrot.lane.b32.xlu0 %v2172, 36
      %v3289 = vpop.permute.xlu0 %3288
      %3290 = vrot.lane.b32.xlu0 %v2249, 36
      %v3291 = vpop.permute.xlu0 %3290
      %3292 = vrot.lane.b32.xlu0 %v2175, 36
      %v3293 = vpop.permute.xlu0 %3292
      %3294 = vrot.lane.b32.xlu0 %v2250, 36
      %v3295 = vpop.permute.xlu0 %3294
      %3296 = vrot.lane.b32.xlu0 %v2178, 36
      %v3297 = vpop.permute.xlu0 %3296
      %3298 = vrot.lane.b32.xlu0 %v2251, 36
      %v3299 = vpop.permute.xlu0 %3298
      %3300 = vrot.lane.b32.xlu0 %v2181, 36
      %v3301 = vpop.permute.xlu0 %3300
      %3302 = vrot.lane.b32.xlu0 %v2252, 36
      %v3303 = vpop.permute.xlu0 %3302
      %3304 = vrot.lane.b32.xlu0 %v2184, 36
      %v3305 = vpop.permute.xlu0 %3304
      %3306 = vrot.lane.b32.xlu0 %v2253, 36
      %v3307 = vpop.permute.xlu0 %3306
      %3308 = vrot.lane.b32.xlu0 %v2187, 36
      %v3309 = vpop.permute.xlu0 %3308
      %3310 = vrot.lane.b32.xlu0 %v2254, 36
      %v3311 = vpop.permute.xlu0 %3310
      %3312 = vrot.lane.b32.xlu0 %v2190, 36
      %v3313 = vpop.permute.xlu0 %3312
      %3347 = vrot.lane.b32.xlu0 %v2383, 44
      %v3348 = vpop.permute.xlu0 %3347
      %3349 = vrot.lane.b32.xlu0 %v2305, 44
      %v3350 = vpop.permute.xlu0 %3349
      %3351 = vrot.lane.b32.xlu0 %v2384, 44
      %v3352 = vpop.permute.xlu0 %3351
      %3353 = vrot.lane.b32.xlu0 %v2308, 44
      %v3354 = vpop.permute.xlu0 %3353
      %3355 = vrot.lane.b32.xlu0 %v2385, 44
      %v3356 = vpop.permute.xlu0 %3355
      %3357 = vrot.lane.b32.xlu0 %v2311, 44
      %v3358 = vpop.permute.xlu0 %3357
      %3359 = vrot.lane.b32.xlu0 %v2386, 44
      %v3360 = vpop.permute.xlu0 %3359
      %3361 = vrot.lane.b32.xlu0 %v2314, 44
      %v3362 = vpop.permute.xlu0 %3361
      %3363 = vrot.lane.b32.xlu0 %v2387, 44
      %v3364 = vpop.permute.xlu0 %3363
      %3365 = vrot.lane.b32.xlu0 %v2317, 44
      %v3366 = vpop.permute.xlu0 %3365
      %3367 = vrot.lane.b32.xlu0 %v2388, 44
      %v3368 = vpop.permute.xlu0 %3367
      %3369 = vrot.lane.b32.xlu0 %v2320, 44
      %v3370 = vpop.permute.xlu0 %3369
      %3371 = vrot.lane.b32.xlu0 %v2389, 44
      %v3372 = vpop.permute.xlu0 %3371
      %3373 = vrot.lane.b32.xlu0 %v2323, 44
      %v3374 = vpop.permute.xlu0 %3373
      %3375 = vrot.lane.b32.xlu0 %v2390, 44
      %v3376 = vpop.permute.xlu0 %3375
      %3377 = vrot.lane.b32.xlu0 %v2326, 44
      %v3378 = vpop.permute.xlu0 %3377
      %3379 = vrot.lane.b32.xlu0 %v2391, 44
      %v3380 = vpop.permute.xlu0 %3379
      %3381 = vrot.lane.b32.xlu0 %v2329, 44
      %v3382 = vpop.permute.xlu0 %3381
      %3383 = vrot.lane.b32.xlu0 %v2392, 44
      %v3384 = vpop.permute.xlu0 %3383
      %3385 = vrot.lane.b32.xlu0 %v2332, 44
      %v3386 = vpop.permute.xlu0 %3385
      %3387 = vrot.lane.b32.xlu0 %v2393, 44
      %v3388 = vpop.permute.xlu0 %3387
      %3389 = vrot.lane.b32.xlu0 %v2335, 44
      %v3390 = vpop.permute.xlu0 %3389
      %3391 = vrot.lane.b32.xlu0 %v2394, 44
      %v3392 = vpop.permute.xlu0 %3391
      %3393 = vrot.lane.b32.xlu0 %v2338, 44
      %v3394 = vpop.permute.xlu0 %3393
      %3395 = vrot.lane.b32.xlu0 %v2395, 44
      %v3396 = vpop.permute.xlu0 %3395
      %3397 = vrot.lane.b32.xlu0 %v2341, 44
      %v3398 = vpop.permute.xlu0 %3397
      %3399 = vrot.lane.b32.xlu0 %v2396, 44
      %v3400 = vpop.permute.xlu0 %3399
      %3401 = vrot.lane.b32.xlu0 %v2344, 44
      %v3402 = vpop.permute.xlu0 %3401
      %3403 = vrot.lane.b32.xlu0 %v2397, 44
      %v3404 = vpop.permute.xlu0 %3403
      %3405 = vrot.lane.b32.xlu0 %v2347, 44
      %v3406 = vpop.permute.xlu0 %3405
      %3407 = vrot.lane.b32.xlu0 %v2398, 44
      %v3408 = vpop.permute.xlu0 %3407
      %3409 = vrot.lane.b32.xlu0 %v2350, 44
      %v3410 = vpop.permute.xlu0 %3409
      %v3444 = vrot.slane %v2254, 1
      %v3445 = vrot.slane %v2190, 1
      %v3446 = vsel %vm535, %v3444, %v3445
      %v3447 = vrot.slane %v2270, 1
      %v3448 = vsel %vm535, %v3445, %v3447
      %3449 = vrot.lane.b32.xlu0 %v2558, 48
      %v3450 = vpop.permute.xlu0 %3449
      %3451 = vrot.lane.b32.xlu0 %v2560, 48
      %v3452 = vpop.permute.xlu0 %3451
      %3453 = vrot.lane.b32.xlu0 %v2563, 48
      %v3454 = vpop.permute.xlu0 %3453
      %3455 = vrot.lane.b32.xlu0 %v2565, 48
      %v3456 = vpop.permute.xlu0 %3455
      %3457 = vrot.lane.b32.xlu0 %v2568, 48
      %v3458 = vpop.permute.xlu0 %3457
      %3459 = vrot.lane.b32.xlu0 %v2570, 48
      %v3460 = vpop.permute.xlu0 %3459
      %3461 = vrot.lane.b32.xlu0 %v2573, 48
      %v3462 = vpop.permute.xlu0 %3461
      %3463 = vrot.lane.b32.xlu0 %v2575, 48
      %v3464 = vpop.permute.xlu0 %3463
      %3465 = vrot.lane.b32.xlu0 %v2578, 48
      %v3466 = vpop.permute.xlu0 %3465
      %3467 = vrot.lane.b32.xlu0 %v2580, 48
      %v3468 = vpop.permute.xlu0 %3467
      %3469 = vrot.lane.b32.xlu0 %v2583, 48
      %v3470 = vpop.permute.xlu0 %3469
      %3471 = vrot.lane.b32.xlu0 %v2585, 48
      %v3472 = vpop.permute.xlu0 %3471
      %3473 = vrot.lane.b32.xlu0 %v2588, 48
      %v3474 = vpop.permute.xlu0 %3473
      %3475 = vrot.lane.b32.xlu0 %v2590, 48
      %v3476 = vpop.permute.xlu0 %3475
      %3477 = vrot.lane.b32.xlu0 %v2593, 48
      %v3478 = vpop.permute.xlu0 %3477
      %3479 = vrot.lane.b32.xlu0 %v2595, 48
      %v3480 = vpop.permute.xlu0 %3479
      %3481 = vrot.lane.b32.xlu0 %v2598, 48
      %v3482 = vpop.permute.xlu0 %3481
      %3483 = vrot.lane.b32.xlu0 %v2600, 48
      %v3484 = vpop.permute.xlu0 %3483
      %3485 = vrot.lane.b32.xlu0 %v2603, 48
      %v3486 = vpop.permute.xlu0 %3485
      %3487 = vrot.lane.b32.xlu0 %v2605, 48
      %v3488 = vpop.permute.xlu0 %3487
      %3489 = vrot.lane.b32.xlu0 %v2608, 48
      %v3490 = vpop.permute.xlu0 %3489
      %3491 = vrot.lane.b32.xlu0 %v2610, 48
      %v3492 = vpop.permute.xlu0 %3491
      %3493 = vrot.lane.b32.xlu0 %v2613, 48
      %v3494 = vpop.permute.xlu0 %3493
      %3495 = vrot.lane.b32.xlu0 %v2615, 48
      %v3496 = vpop.permute.xlu0 %3495
      %3497 = vrot.lane.b32.xlu0 %v2618, 48
      %v3498 = vpop.permute.xlu0 %3497
      %3499 = vrot.lane.b32.xlu0 %v2620, 48
      %v3500 = vpop.permute.xlu0 %3499
      %3501 = vrot.lane.b32.xlu0 %v2623, 48
      %v3502 = vpop.permute.xlu0 %3501
      %3503 = vrot.lane.b32.xlu0 %v2625, 48
      %v3504 = vpop.permute.xlu0 %3503
      %3505 = vrot.lane.b32.xlu0 %v2628, 48
      %v3506 = vpop.permute.xlu0 %3505
      %3507 = vrot.lane.b32.xlu0 %v2630, 48
      %v3508 = vpop.permute.xlu0 %3507
      %3509 = vrot.lane.b32.xlu0 %v3446, 48
      %v3510 = vpop.permute.xlu0 %3509
      %3511 = vrot.lane.b32.xlu0 %v3448, 48
      %v3512 = vpop.permute.xlu0 %3511
      %v3546 = vrot.slane %v2398, 1
      %v3547 = vrot.slane %v2350, 1
      %v3548 = vsel %vm535, %v3546, %v3547
      %v3549 = vrot.slane %v2414, 1
      %v3550 = vsel %vm535, %v3547, %v3549
      %3551 = vrot.lane.b32.xlu0 %v2744, 56
      %v3552 = vpop.permute.xlu0 %3551
      %3553 = vrot.lane.b32.xlu0 %v2746, 56
      %v3554 = vpop.permute.xlu0 %3553
      %3555 = vrot.lane.b32.xlu0 %v2749, 56
      %v3556 = vpop.permute.xlu0 %3555
      %3557 = vrot.lane.b32.xlu0 %v2751, 56
      %v3558 = vpop.permute.xlu0 %3557
      %3559 = vrot.lane.b32.xlu0 %v2754, 56
      %v3560 = vpop.permute.xlu0 %3559
      %3561 = vrot.lane.b32.xlu0 %v2756, 56
      %v3562 = vpop.permute.xlu0 %3561
      %3563 = vrot.lane.b32.xlu0 %v2759, 56
      %v3564 = vpop.permute.xlu0 %3563
      %3565 = vrot.lane.b32.xlu0 %v2761, 56
      %v3566 = vpop.permute.xlu0 %3565
      %3567 = vrot.lane.b32.xlu0 %v2764, 56
      %v3568 = vpop.permute.xlu0 %3567
      %3569 = vrot.lane.b32.xlu0 %v2766, 56
      %v3570 = vpop.permute.xlu0 %3569
      %3571 = vrot.lane.b32.xlu0 %v2769, 56
      %v3572 = vpop.permute.xlu0 %3571
      %3573 = vrot.lane.b32.xlu0 %v2771, 56
      %v3574 = vpop.permute.xlu0 %3573
      %3575 = vrot.lane.b32.xlu0 %v2774, 56
      %v3576 = vpop.permute.xlu0 %3575
      %3577 = vrot.lane.b32.xlu0 %v2776, 56
      %v3578 = vpop.permute.xlu0 %3577
      %3579 = vrot.lane.b32.xlu0 %v2779, 56
      %v3580 = vpop.permute.xlu0 %3579
      %3581 = vrot.lane.b32.xlu0 %v2781, 56
      %v3582 = vpop.permute.xlu0 %3581
      %3583 = vrot.lane.b32.xlu0 %v2784, 56
      %v3584 = vpop.permute.xlu0 %3583
      %3585 = vrot.lane.b32.xlu0 %v2786, 56
      %v3586 = vpop.permute.xlu0 %3585
      %3587 = vrot.lane.b32.xlu0 %v2789, 56
      %v3588 = vpop.permute.xlu0 %3587
      %3589 = vrot.lane.b32.xlu0 %v2791, 56
      %v3590 = vpop.permute.xlu0 %3589
      %3591 = vrot.lane.b32.xlu0 %v2794, 56
      %v3592 = vpop.permute.xlu0 %3591
      %3593 = vrot.lane.b32.xlu0 %v2796, 56
      %v3594 = vpop.permute.xlu0 %3593
      %3595 = vrot.lane.b32.xlu0 %v2799, 56
      %v3596 = vpop.permute.xlu0 %3595
      %3597 = vrot.lane.b32.xlu0 %v2801, 56
      %v3598 = vpop.permute.xlu0 %3597
      %3599 = vrot.lane.b32.xlu0 %v2804, 56
      %v3600 = vpop.permute.xlu0 %3599
      %3601 = vrot.lane.b32.xlu0 %v2806, 56
      %v3602 = vpop.permute.xlu0 %3601
      %3603 = vrot.lane.b32.xlu0 %v2809, 56
      %v3604 = vpop.permute.xlu0 %3603
      %3605 = vrot.lane.b32.xlu0 %v2811, 56
      %v3606 = vpop.permute.xlu0 %3605
      %3607 = vrot.lane.b32.xlu0 %v2814, 56
      %v3608 = vpop.permute.xlu0 %3607
      %3609 = vrot.lane.b32.xlu0 %v2816, 56
      %v3610 = vpop.permute.xlu0 %3609
      %3611 = vrot.lane.b32.xlu0 %v3548, 56
      %v3612 = vpop.permute.xlu0 %3611
      %3613 = vrot.lane.b32.xlu0 %v3550, 56
      %v3614 = vpop.permute.xlu0 %3613
      %v3647 = vrot.slane %v2254, 2
      %v3648 = vrot.slane %v2190, 2
      %v3649 = vsel %vm712, %v3647, %v3648
      %v3650 = vrot.slane %v2270, 2
      %v3651 = vsel %vm712, %v3648, %v3650
      %3652 = vrot.lane.b32.xlu0 %v2915, 60
      %v3653 = vpop.permute.xlu0 %3652
      %3654 = vrot.lane.b32.xlu0 %v2917, 60
      %v3655 = vpop.permute.xlu0 %3654
      %3656 = vrot.lane.b32.xlu0 %v2920, 60
      %v3657 = vpop.permute.xlu0 %3656
      %3658 = vrot.lane.b32.xlu0 %v2922, 60
      %v3659 = vpop.permute.xlu0 %3658
      %3660 = vrot.lane.b32.xlu0 %v2925, 60
      %v3661 = vpop.permute.xlu0 %3660
      %3662 = vrot.lane.b32.xlu0 %v2927, 60
      %v3663 = vpop.permute.xlu0 %3662
      %3664 = vrot.lane.b32.xlu0 %v2930, 60
      %v3665 = vpop.permute.xlu0 %3664
      %3666 = vrot.lane.b32.xlu0 %v2932, 60
      %v3667 = vpop.permute.xlu0 %3666
      %3668 = vrot.lane.b32.xlu0 %v2935, 60
      %v3669 = vpop.permute.xlu0 %3668
      %3670 = vrot.lane.b32.xlu0 %v2937, 60
      %v3671 = vpop.permute.xlu0 %3670
      %3672 = vrot.lane.b32.xlu0 %v2940, 60
      %v3673 = vpop.permute.xlu0 %3672
      %3674 = vrot.lane.b32.xlu0 %v2942, 60
      %v3675 = vpop.permute.xlu0 %3674
      %3676 = vrot.lane.b32.xlu0 %v2945, 60
      %v3677 = vpop.permute.xlu0 %3676
      %3678 = vrot.lane.b32.xlu0 %v2947, 60
      %v3679 = vpop.permute.xlu0 %3678
      %3680 = vrot.lane.b32.xlu0 %v2950, 60
      %v3681 = vpop.permute.xlu0 %3680
      %3682 = vrot.lane.b32.xlu0 %v2952, 60
      %v3683 = vpop.permute.xlu0 %3682
      %3684 = vrot.lane.b32.xlu0 %v2955, 60
      %v3685 = vpop.permute.xlu0 %3684
      %3686 = vrot.lane.b32.xlu0 %v2957, 60
      %v3687 = vpop.permute.xlu0 %3686
      %3688 = vrot.lane.b32.xlu0 %v2960, 60
      %v3689 = vpop.permute.xlu0 %3688
      %3690 = vrot.lane.b32.xlu0 %v2962, 60
      %v3691 = vpop.permute.xlu0 %3690
      %3692 = vrot.lane.b32.xlu0 %v2965, 60
      %v3693 = vpop.permute.xlu0 %3692
      %3694 = vrot.lane.b32.xlu0 %v2967, 60
      %v3695 = vpop.permute.xlu0 %3694
      %3696 = vrot.lane.b32.xlu0 %v2970, 60
      %v3697 = vpop.permute.xlu0 %3696
      %3698 = vrot.lane.b32.xlu0 %v2972, 60
      %v3699 = vpop.permute.xlu0 %3698
      %3700 = vrot.lane.b32.xlu0 %v2975, 60
      %v3701 = vpop.permute.xlu0 %3700
      %3702 = vrot.lane.b32.xlu0 %v2977, 60
      %v3703 = vpop.permute.xlu0 %3702
      %3704 = vrot.lane.b32.xlu0 %v2980, 60
      %v3705 = vpop.permute.xlu0 %3704
      %3706 = vrot.lane.b32.xlu0 %v2982, 60
      %v3707 = vpop.permute.xlu0 %3706
      %3708 = vrot.lane.b32.xlu0 %v2985, 60
      %v3709 = vpop.permute.xlu0 %3708
      %3710 = vrot.lane.b32.xlu0 %v2987, 60
      %v3711 = vpop.permute.xlu0 %3710
      %3712 = vrot.lane.b32.xlu0 %v3649, 60
      %v3713 = vpop.permute.xlu0 %3712
      %3714 = vrot.lane.b32.xlu0 %v3651, 60
      %v3715 = vpop.permute.xlu0 %3714
      %v3748 = vrot.slane %v2398, 2
      %v3749 = vrot.slane %v2350, 2
      %v3750 = vsel %vm712, %v3748, %v3749
      %v3751 = vrot.slane %v2414, 2
      %v3752 = vsel %vm712, %v3749, %v3751
      %3753 = vrot.lane.b32.xlu0 %v3086, 68
      %v3754 = vpop.permute.xlu0 %3753
      %3755 = vrot.lane.b32.xlu0 %v3088, 68
      %v3756 = vpop.permute.xlu0 %3755
      %3757 = vrot.lane.b32.xlu0 %v3091, 68
      %v3758 = vpop.permute.xlu0 %3757
      %3759 = vrot.lane.b32.xlu0 %v3093, 68
      %v3760 = vpop.permute.xlu0 %3759
      %3761 = vrot.lane.b32.xlu0 %v3096, 68
      %v3762 = vpop.permute.xlu0 %3761
      %3763 = vrot.lane.b32.xlu0 %v3098, 68
      %v3764 = vpop.permute.xlu0 %3763
      %3765 = vrot.lane.b32.xlu0 %v3101, 68
      %v3766 = vpop.permute.xlu0 %3765
      %3767 = vrot.lane.b32.xlu0 %v3103, 68
      %v3768 = vpop.permute.xlu0 %3767
      %3769 = vrot.lane.b32.xlu0 %v3106, 68
      %v3770 = vpop.permute.xlu0 %3769
      %3771 = vrot.lane.b32.xlu0 %v3108, 68
      %v3772 = vpop.permute.xlu0 %3771
      %3773 = vrot.lane.b32.xlu0 %v3111, 68
      %v3774 = vpop.permute.xlu0 %3773
      %3775 = vrot.lane.b32.xlu0 %v3113, 68
      %v3776 = vpop.permute.xlu0 %3775
      %3777 = vrot.lane.b32.xlu0 %v3116, 68
      %v3778 = vpop.permute.xlu0 %3777
      %3779 = vrot.lane.b32.xlu0 %v3118, 68
      %v3780 = vpop.permute.xlu0 %3779
      %3781 = vrot.lane.b32.xlu0 %v3121, 68
      %v3782 = vpop.permute.xlu0 %3781
      %3783 = vrot.lane.b32.xlu0 %v3123, 68
      %v3784 = vpop.permute.xlu0 %3783
      %3785 = vrot.lane.b32.xlu0 %v3126, 68
      %v3786 = vpop.permute.xlu0 %3785
      %3787 = vrot.lane.b32.xlu0 %v3128, 68
      %v3788 = vpop.permute.xlu0 %3787
      %3789 = vrot.lane.b32.xlu0 %v3131, 68
      %v3790 = vpop.permute.xlu0 %3789
      %3791 = vrot.lane.b32.xlu0 %v3133, 68
      %v3792 = vpop.permute.xlu0 %3791
      %3793 = vrot.lane.b32.xlu0 %v3136, 68
      %v3794 = vpop.permute.xlu0 %3793
      %3795 = vrot.lane.b32.xlu0 %v3138, 68
      %v3796 = vpop.permute.xlu0 %3795
      %3797 = vrot.lane.b32.xlu0 %v3141, 68
      %v3798 = vpop.permute.xlu0 %3797
      %3799 = vrot.lane.b32.xlu0 %v3143, 68
      %v3800 = vpop.permute.xlu0 %3799
      %3801 = vrot.lane.b32.xlu0 %v3146, 68
      %v3802 = vpop.permute.xlu0 %3801
      %3803 = vrot.lane.b32.xlu0 %v3148, 68
      %v3804 = vpop.permute.xlu0 %3803
      %3805 = vrot.lane.b32.xlu0 %v3151, 68
      %v3806 = vpop.permute.xlu0 %3805
      %3807 = vrot.lane.b32.xlu0 %v3153, 68
      %v3808 = vpop.permute.xlu0 %3807
      %3809 = vrot.lane.b32.xlu0 %v3156, 68
      %v3810 = vpop.permute.xlu0 %3809
      %3811 = vrot.lane.b32.xlu0 %v3158, 68
      %v3812 = vpop.permute.xlu0 %3811
      %3813 = vrot.lane.b32.xlu0 %v3750, 68
      %v3814 = vpop.permute.xlu0 %3813
      %3815 = vrot.lane.b32.xlu0 %v3752, 68
      %v3816 = vpop.permute.xlu0 %3815
      %3849 = vrot.lane.b32.xlu0 %v2240, 72
      %v3850 = vpop.permute.xlu0 %3849
      %3851 = vrot.lane.b32.xlu0 %v2148, 72
      %v3852 = vpop.permute.xlu0 %3851
      %3853 = vrot.lane.b32.xlu0 %v2241, 72
      %v3854 = vpop.permute.xlu0 %3853
      %3855 = vrot.lane.b32.xlu0 %v2151, 72
      %v3856 = vpop.permute.xlu0 %3855
      %3857 = vrot.lane.b32.xlu0 %v2242, 72
      %v3858 = vpop.permute.xlu0 %3857
      %3859 = vrot.lane.b32.xlu0 %v2154, 72
      %v3860 = vpop.permute.xlu0 %3859
      %3861 = vrot.lane.b32.xlu0 %v2243, 72
      %v3862 = vpop.permute.xlu0 %3861
      %3863 = vrot.lane.b32.xlu0 %v2157, 72
      %v3864 = vpop.permute.xlu0 %3863
      %3865 = vrot.lane.b32.xlu0 %v2244, 72
      %v3866 = vpop.permute.xlu0 %3865
      %3867 = vrot.lane.b32.xlu0 %v2160, 72
      %v3868 = vpop.permute.xlu0 %3867
      %3869 = vrot.lane.b32.xlu0 %v2245, 72
      %v3870 = vpop.permute.xlu0 %3869
      %3871 = vrot.lane.b32.xlu0 %v2163, 72
      %v3872 = vpop.permute.xlu0 %3871
      %3873 = vrot.lane.b32.xlu0 %v2246, 72
      %v3874 = vpop.permute.xlu0 %3873
      %3875 = vrot.lane.b32.xlu0 %v2166, 72
      %v3876 = vpop.permute.xlu0 %3875
      %3877 = vrot.lane.b32.xlu0 %v2247, 72
      %v3878 = vpop.permute.xlu0 %3877
      %3879 = vrot.lane.b32.xlu0 %v2169, 72
      %v3880 = vpop.permute.xlu0 %3879
      %3881 = vrot.lane.b32.xlu0 %v2248, 72
      %v3882 = vpop.permute.xlu0 %3881
      %3883 = vrot.lane.b32.xlu0 %v2172, 72
      %v3884 = vpop.permute.xlu0 %3883
      %3885 = vrot.lane.b32.xlu0 %v2249, 72
      %v3886 = vpop.permute.xlu0 %3885
      %3887 = vrot.lane.b32.xlu0 %v2175, 72
      %v3888 = vpop.permute.xlu0 %3887
      %3889 = vrot.lane.b32.xlu0 %v2250, 72
      %v3890 = vpop.permute.xlu0 %3889
      %3891 = vrot.lane.b32.xlu0 %v2178, 72
      %v3892 = vpop.permute.xlu0 %3891
      %3893 = vrot.lane.b32.xlu0 %v2251, 72
      %v3894 = vpop.permute.xlu0 %3893
      %3895 = vrot.lane.b32.xlu0 %v2181, 72
      %v3896 = vpop.permute.xlu0 %3895
      %3897 = vrot.lane.b32.xlu0 %v2252, 72
      %v3898 = vpop.permute.xlu0 %3897
      %3899 = vrot.lane.b32.xlu0 %v2184, 72
      %v3900 = vpop.permute.xlu0 %3899
      %3901 = vrot.lane.b32.xlu0 %v2253, 72
      %v3902 = vpop.permute.xlu0 %3901
      %3903 = vrot.lane.b32.xlu0 %v2187, 72
      %v3904 = vpop.permute.xlu0 %3903
      %3905 = vrot.lane.b32.xlu0 %v2254, 72
      %v3906 = vpop.permute.xlu0 %3905
      %3907 = vrot.lane.b32.xlu0 %v2190, 72
      %v3908 = vpop.permute.xlu0 %3907
      %3909 = vrot.lane.b32.xlu0 %v469, 72
      %v3910 = vpop.permute.xlu0 %3909
      %3911 = vrot.lane.b32.xlu0 %v371, 72
      %v3912 = vpop.permute.xlu0 %3911
      %3945 = vrot.lane.b32.xlu0 %v2384, 80
      %v3946 = vpop.permute.xlu0 %3945
      %3947 = vrot.lane.b32.xlu0 %v2308, 80
      %v3948 = vpop.permute.xlu0 %3947
      %3949 = vrot.lane.b32.xlu0 %v2385, 80
      %v3950 = vpop.permute.xlu0 %3949
      %3951 = vrot.lane.b32.xlu0 %v2311, 80
      %v3952 = vpop.permute.xlu0 %3951
      %3953 = vrot.lane.b32.xlu0 %v2386, 80
      %v3954 = vpop.permute.xlu0 %3953
      %3955 = vrot.lane.b32.xlu0 %v2314, 80
      %v3956 = vpop.permute.xlu0 %3955
      %3957 = vrot.lane.b32.xlu0 %v2387, 80
      %v3958 = vpop.permute.xlu0 %3957
      %3959 = vrot.lane.b32.xlu0 %v2317, 80
      %v3960 = vpop.permute.xlu0 %3959
      %3961 = vrot.lane.b32.xlu0 %v2388, 80
      %v3962 = vpop.permute.xlu0 %3961
      %3963 = vrot.lane.b32.xlu0 %v2320, 80
      %v3964 = vpop.permute.xlu0 %3963
      %3965 = vrot.lane.b32.xlu0 %v2389, 80
      %v3966 = vpop.permute.xlu0 %3965
      %3967 = vrot.lane.b32.xlu0 %v2323, 80
      %v3968 = vpop.permute.xlu0 %3967
      %3969 = vrot.lane.b32.xlu0 %v2390, 80
      %v3970 = vpop.permute.xlu0 %3969
      %3971 = vrot.lane.b32.xlu0 %v2326, 80
      %v3972 = vpop.permute.xlu0 %3971
      %3973 = vrot.lane.b32.xlu0 %v2391, 80
      %v3974 = vpop.permute.xlu0 %3973
      %3975 = vrot.lane.b32.xlu0 %v2329, 80
      %v3976 = vpop.permute.xlu0 %3975
      %3977 = vrot.lane.b32.xlu0 %v2392, 80
      %v3978 = vpop.permute.xlu0 %3977
      %3979 = vrot.lane.b32.xlu0 %v2332, 80
      %v3980 = vpop.permute.xlu0 %3979
      %3981 = vrot.lane.b32.xlu0 %v2393, 80
      %v3982 = vpop.permute.xlu0 %3981
      %3983 = vrot.lane.b32.xlu0 %v2335, 80
      %v3984 = vpop.permute.xlu0 %3983
      %3985 = vrot.lane.b32.xlu0 %v2394, 80
      %v3986 = vpop.permute.xlu0 %3985
      %3987 = vrot.lane.b32.xlu0 %v2338, 80
      %v3988 = vpop.permute.xlu0 %3987
      %3989 = vrot.lane.b32.xlu0 %v2395, 80
      %v3990 = vpop.permute.xlu0 %3989
      %3991 = vrot.lane.b32.xlu0 %v2341, 80
      %v3992 = vpop.permute.xlu0 %3991
      %3993 = vrot.lane.b32.xlu0 %v2396, 80
      %v3994 = vpop.permute.xlu0 %3993
      %3995 = vrot.lane.b32.xlu0 %v2344, 80
      %v3996 = vpop.permute.xlu0 %3995
      %3997 = vrot.lane.b32.xlu0 %v2397, 80
      %v3998 = vpop.permute.xlu0 %3997
      %3999 = vrot.lane.b32.xlu0 %v2347, 80
      %v4000 = vpop.permute.xlu0 %3999
      %4001 = vrot.lane.b32.xlu0 %v2398, 80
      %v4002 = vpop.permute.xlu0 %4001
      %4003 = vrot.lane.b32.xlu0 %v2350, 80
      %v4004 = vpop.permute.xlu0 %4003
      %4005 = vrot.lane.b32.xlu0 %v469, 80
      %v4006 = vpop.permute.xlu0 %4005
      %4007 = vrot.lane.b32.xlu0 %v371, 80
      %v4008 = vpop.permute.xlu0 %4007
      %4041 = vrot.lane.b32.xlu0 %v2563, 84
      %v4042 = vpop.permute.xlu0 %4041
      %4043 = vrot.lane.b32.xlu0 %v2565, 84
      %v4044 = vpop.permute.xlu0 %4043
      %4045 = vrot.lane.b32.xlu0 %v2568, 84
      %v4046 = vpop.permute.xlu0 %4045
      %4047 = vrot.lane.b32.xlu0 %v2570, 84
      %v4048 = vpop.permute.xlu0 %4047
      %4049 = vrot.lane.b32.xlu0 %v2573, 84
      %v4050 = vpop.permute.xlu0 %4049
      %4051 = vrot.lane.b32.xlu0 %v2575, 84
      %v4052 = vpop.permute.xlu0 %4051
      %4053 = vrot.lane.b32.xlu0 %v2578, 84
      %v4054 = vpop.permute.xlu0 %4053
      %4055 = vrot.lane.b32.xlu0 %v2580, 84
      %v4056 = vpop.permute.xlu0 %4055
      %4057 = vrot.lane.b32.xlu0 %v2583, 84
      %v4058 = vpop.permute.xlu0 %4057
      %4059 = vrot.lane.b32.xlu0 %v2585, 84
      %v4060 = vpop.permute.xlu0 %4059
      %4061 = vrot.lane.b32.xlu0 %v2588, 84
      %v4062 = vpop.permute.xlu0 %4061
      %4063 = vrot.lane.b32.xlu0 %v2590, 84
      %v4064 = vpop.permute.xlu0 %4063
      %4065 = vrot.lane.b32.xlu0 %v2593, 84
      %v4066 = vpop.permute.xlu0 %4065
      %4067 = vrot.lane.b32.xlu0 %v2595, 84
      %v4068 = vpop.permute.xlu0 %4067
      %4069 = vrot.lane.b32.xlu0 %v2598, 84
      %v4070 = vpop.permute.xlu0 %4069
      %4071 = vrot.lane.b32.xlu0 %v2600, 84
      %v4072 = vpop.permute.xlu0 %4071
      %4073 = vrot.lane.b32.xlu0 %v2603, 84
      %v4074 = vpop.permute.xlu0 %4073
      %4075 = vrot.lane.b32.xlu0 %v2605, 84
      %v4076 = vpop.permute.xlu0 %4075
      %4077 = vrot.lane.b32.xlu0 %v2608, 84
      %v4078 = vpop.permute.xlu0 %4077
      %4079 = vrot.lane.b32.xlu0 %v2610, 84
      %v4080 = vpop.permute.xlu0 %4079
      %4081 = vrot.lane.b32.xlu0 %v2613, 84
      %v4082 = vpop.permute.xlu0 %4081
      %4083 = vrot.lane.b32.xlu0 %v2615, 84
      %v4084 = vpop.permute.xlu0 %4083
      %4085 = vrot.lane.b32.xlu0 %v2618, 84
      %v4086 = vpop.permute.xlu0 %4085
      %4087 = vrot.lane.b32.xlu0 %v2620, 84
      %v4088 = vpop.permute.xlu0 %4087
      %4089 = vrot.lane.b32.xlu0 %v2623, 84
      %v4090 = vpop.permute.xlu0 %4089
      %4091 = vrot.lane.b32.xlu0 %v2625, 84
      %v4092 = vpop.permute.xlu0 %4091
      %4093 = vrot.lane.b32.xlu0 %v2628, 84
      %v4094 = vpop.permute.xlu0 %4093
      %4095 = vrot.lane.b32.xlu0 %v2630, 84
      %v4096 = vpop.permute.xlu0 %4095
      %4097 = vrot.lane.b32.xlu0 %v3446, 84
      %v4098 = vpop.permute.xlu0 %4097
      %4099 = vrot.lane.b32.xlu0 %v3448, 84
      %v4100 = vpop.permute.xlu0 %4099
      %4101 = vrot.lane.b32.xlu0 %v538, 84
      %v4102 = vpop.permute.xlu0 %4101
      %4103 = vrot.lane.b32.xlu0 %v540, 84
      %v4104 = vpop.permute.xlu0 %4103
      %4137 = vrot.lane.b32.xlu0 %v2749, 92
      %v4138 = vpop.permute.xlu0 %4137
      %4139 = vrot.lane.b32.xlu0 %v2751, 92
      %v4140 = vpop.permute.xlu0 %4139
      %4141 = vrot.lane.b32.xlu0 %v2754, 92
      %v4142 = vpop.permute.xlu0 %4141
      %4143 = vrot.lane.b32.xlu0 %v2756, 92
      %v4144 = vpop.permute.xlu0 %4143
      %4145 = vrot.lane.b32.xlu0 %v2759, 92
      %v4146 = vpop.permute.xlu0 %4145
      %4147 = vrot.lane.b32.xlu0 %v2761, 92
      %v4148 = vpop.permute.xlu0 %4147
      %4149 = vrot.lane.b32.xlu0 %v2764, 92
      %v4150 = vpop.permute.xlu0 %4149
      %4151 = vrot.lane.b32.xlu0 %v2766, 92
      %v4152 = vpop.permute.xlu0 %4151
      %4153 = vrot.lane.b32.xlu0 %v2769, 92
      %v4154 = vpop.permute.xlu0 %4153
      %4155 = vrot.lane.b32.xlu0 %v2771, 92
      %v4156 = vpop.permute.xlu0 %4155
      %4157 = vrot.lane.b32.xlu0 %v2774, 92
      %v4158 = vpop.permute.xlu0 %4157
      %4159 = vrot.lane.b32.xlu0 %v2776, 92
      %v4160 = vpop.permute.xlu0 %4159
      %4161 = vrot.lane.b32.xlu0 %v2779, 92
      %v4162 = vpop.permute.xlu0 %4161
      %4163 = vrot.lane.b32.xlu0 %v2781, 92
      %v4164 = vpop.permute.xlu0 %4163
      %4165 = vrot.lane.b32.xlu0 %v2784, 92
      %v4166 = vpop.permute.xlu0 %4165
      %4167 = vrot.lane.b32.xlu0 %v2786, 92
      %v4168 = vpop.permute.xlu0 %4167
      %4169 = vrot.lane.b32.xlu0 %v2789, 92
      %v4170 = vpop.permute.xlu0 %4169
      %4171 = vrot.lane.b32.xlu0 %v2791, 92
      %v4172 = vpop.permute.xlu0 %4171
      %4173 = vrot.lane.b32.xlu0 %v2794, 92
      %v4174 = vpop.permute.xlu0 %4173
      %4175 = vrot.lane.b32.xlu0 %v2796, 92
      %v4176 = vpop.permute.xlu0 %4175
      %4177 = vrot.lane.b32.xlu0 %v2799, 92
      %v4178 = vpop.permute.xlu0 %4177
      %4179 = vrot.lane.b32.xlu0 %v2801, 92
      %v4180 = vpop.permute.xlu0 %4179
      %4181 = vrot.lane.b32.xlu0 %v2804, 92
      %v4182 = vpop.permute.xlu0 %4181
      %4183 = vrot.lane.b32.xlu0 %v2806, 92
      %v4184 = vpop.permute.xlu0 %4183
      %4185 = vrot.lane.b32.xlu0 %v2809, 92
      %v4186 = vpop.permute.xlu0 %4185
      %4187 = vrot.lane.b32.xlu0 %v2811, 92
      %v4188 = vpop.permute.xlu0 %4187
      %4189 = vrot.lane.b32.xlu0 %v2814, 92
      %v4190 = vpop.permute.xlu0 %4189
      %4191 = vrot.lane.b32.xlu0 %v2816, 92
      %v4192 = vpop.permute.xlu0 %4191
      %4193 = vrot.lane.b32.xlu0 %v3548, 92
      %v4194 = vpop.permute.xlu0 %4193
      %4195 = vrot.lane.b32.xlu0 %v3550, 92
      %v4196 = vpop.permute.xlu0 %4195
      %4197 = vrot.lane.b32.xlu0 %v538, 92
      %v4198 = vpop.permute.xlu0 %4197
      %4199 = vrot.lane.b32.xlu0 %v540, 92
      %v4200 = vpop.permute.xlu0 %4199
      %v4233 = vsel %vm1510, %v469, %v2431
      %v4234 = vsel %vm1510, %v371, %v2433
      %v4235 = vsel %vm1510, %v2239, %v2435
      %v4236 = vsel %vm1510, %v2145, %v2437
      %v4237 = vsel %vm1510, %v2240, %v2439
      %v4238 = vsel %vm1510, %v2148, %v2441
      %v4239 = vsel %vm1510, %v2241, %v2443
      %v4240 = vsel %vm1510, %v2151, %v2445
      %v4241 = vsel %vm1510, %v2242, %v2447
      %v4242 = vsel %vm1510, %v2154, %v2449
      %v4243 = vsel %vm1510, %v2243, %v2451
      %v4244 = vsel %vm1510, %v2157, %v2453
      %v4245 = vsel %vm1510, %v2244, %v2455
      %v4246 = vsel %vm1510, %v2160, %v2457
      %v4247 = vsel %vm1510, %v2245, %v2459
      %v4248 = vsel %vm1510, %v2163, %v2461
      %v4249 = vsel %vm1510, %v2246, %v2463
      %v4250 = vsel %vm1510, %v2166, %v2465
      %v4251 = vsel %vm1510, %v2247, %v2467
      %v4252 = vsel %vm1510, %v2169, %v2469
      %v4253 = vsel %vm1510, %v2248, %v2471
      %v4254 = vsel %vm1510, %v2172, %v2473
      %v4255 = vsel %vm1510, %v2249, %v2475
      %v4256 = vsel %vm1510, %v2175, %v2477
      %v4257 = vsel %vm1510, %v2250, %v2479
      %v4258 = vsel %vm1510, %v2178, %v2481
      %v4259 = vsel %vm1510, %v2251, %v2483
      %v4260 = vsel %vm1510, %v2181, %v2485
      %v4261 = vsel %vm1510, %v2252, %v2487
      %v4262 = vsel %vm1510, %v2184, %v2489
      %v4263 = vsel %vm1510, %v2253, %v2491
      %v4264 = vsel %vm1510, %v2187, %v2493
      %v4265 = vsel %vm1543, %v4233, %v2632
      %v4266 = vsel %vm1543, %v4234, %v2634
      %v4267 = vsel %vm1543, %v4235, %v2636
      %v4268 = vsel %vm1543, %v4236, %v2638
      %v4269 = vsel %vm1543, %v4237, %v2640
      %v4270 = vsel %vm1543, %v4238, %v2642
      %v4271 = vsel %vm1543, %v4239, %v2644
      %v4272 = vsel %vm1543, %v4240, %v2646
      %v4273 = vsel %vm1543, %v4241, %v2648
      %v4274 = vsel %vm1543, %v4242, %v2650
      %v4275 = vsel %vm1543, %v4243, %v2652
      %v4276 = vsel %vm1543, %v4244, %v2654
      %v4277 = vsel %vm1543, %v4245, %v2656
      %v4278 = vsel %vm1543, %v4246, %v2658
      %v4279 = vsel %vm1543, %v4247, %v2660
      %v4280 = vsel %vm1543, %v4248, %v2662
      %v4281 = vsel %vm1543, %v4249, %v2664
      %v4282 = vsel %vm1543, %v4250, %v2666
      %v4283 = vsel %vm1543, %v4251, %v2668
      %v4284 = vsel %vm1543, %v4252, %v2670
      %v4285 = vsel %vm1543, %v4253, %v2672
      %v4286 = vsel %vm1543, %v4254, %v2674
      %v4287 = vsel %vm1543, %v4255, %v2676
      %v4288 = vsel %vm1543, %v4256, %v2678
      %v4289 = vsel %vm1543, %v4257, %v2680
      %v4290 = vsel %vm1543, %v4258, %v2682
      %v4291 = vsel %vm1543, %v4259, %v2684
      %v4292 = vsel %vm1543, %v4260, %v2686
      %v4293 = vsel %vm1543, %v4261, %v2688
      %v4294 = vsel %vm1543, %v4262, %v2690
      %v4295 = vsel %vm1543, %v4263, %v2692
      %v4296 = vsel %vm1543, %v4264, %v2694
      %v4297 = vsel %vm1609, %v4265, %v2818
      %v4298 = vsel %vm1609, %v4266, %v2820
      %v4299 = vsel %vm1609, %v4267, %v2822
      %v4300 = vsel %vm1609, %v4268, %v2824
      %v4301 = vsel %vm1609, %v4269, %v2826
      %v4302 = vsel %vm1609, %v4270, %v2828
      %v4303 = vsel %vm1609, %v4271, %v2830
      %v4304 = vsel %vm1609, %v4272, %v2832
      %v4305 = vsel %vm1609, %v4273, %v2834
      %v4306 = vsel %vm1609, %v4274, %v2836
      %v4307 = vsel %vm1609, %v4275, %v2838
      %v4308 = vsel %vm1609, %v4276, %v2840
      %v4309 = vsel %vm1609, %v4277, %v2842
      %v4310 = vsel %vm1609, %v4278, %v2844
      %v4311 = vsel %vm1609, %v4279, %v2846
      %v4312 = vsel %vm1609, %v4280, %v2848
      %v4313 = vsel %vm1609, %v4281, %v2850
      %v4314 = vsel %vm1609, %v4282, %v2852
      %v4315 = vsel %vm1609, %v4283, %v2854
      %v4316 = vsel %vm1609, %v4284, %v2856
      %v4317 = vsel %vm1609, %v4285, %v2858
      %v4318 = vsel %vm1609, %v4286, %v2860
      %v4319 = vsel %vm1609, %v4287, %v2862
      %v4320 = vsel %vm1609, %v4288, %v2864
      %v4321 = vsel %vm1609, %v4289, %v2866
      %v4322 = vsel %vm1609, %v4290, %v2868
      %v4323 = vsel %vm1609, %v4291, %v2870
      %v4324 = vsel %vm1609, %v4292, %v2872
      %v4325 = vsel %vm1609, %v4293, %v2874
      %v4326 = vsel %vm1609, %v4294, %v2876
      %v4327 = vsel %vm1609, %v4295, %v2878
      %v4328 = vsel %vm1609, %v4296, %v2880
      %v4329 = vsel %vm1642, %v4297, %v2989
      %v4330 = vsel %vm1642, %v4298, %v2991
      %v4331 = vsel %vm1642, %v4299, %v2993
      %v4332 = vsel %vm1642, %v4300, %v2995
      %v4333 = vsel %vm1642, %v4301, %v2997
      %v4334 = vsel %vm1642, %v4302, %v2999
      %v4335 = vsel %vm1642, %v4303, %v3001
      %v4336 = vsel %vm1642, %v4304, %v3003
      %v4337 = vsel %vm1642, %v4305, %v3005
      %v4338 = vsel %vm1642, %v4306, %v3007
      %v4339 = vsel %vm1642, %v4307, %v3009
      %v4340 = vsel %vm1642, %v4308, %v3011
      %v4341 = vsel %vm1642, %v4309, %v3013
      %v4342 = vsel %vm1642, %v4310, %v3015
      %v4343 = vsel %vm1642, %v4311, %v3017
      %v4344 = vsel %vm1642, %v4312, %v3019
      %v4345 = vsel %vm1642, %v4313, %v3021
      %v4346 = vsel %vm1642, %v4314, %v3023
      %v4347 = vsel %vm1642, %v4315, %v3025
      %v4348 = vsel %vm1642, %v4316, %v3027
      %v4349 = vsel %vm1642, %v4317, %v3029
      %v4350 = vsel %vm1642, %v4318, %v3031
      %v4351 = vsel %vm1642, %v4319, %v3033
      %v4352 = vsel %vm1642, %v4320, %v3035
      %v4353 = vsel %vm1642, %v4321, %v3037
      %v4354 = vsel %vm1642, %v4322, %v3039
      %v4355 = vsel %vm1642, %v4323, %v3041
      %v4356 = vsel %vm1642, %v4324, %v3043
      %v4357 = vsel %vm1642, %v4325, %v3045
      %v4358 = vsel %vm1642, %v4326, %v3047
      %v4359 = vsel %vm1642, %v4327, %v3049
      %v4360 = vsel %vm1642, %v4328, %v3051
      %v4361 = vsel %vm1708, %v4329, %v1442
      %v4362 = vsel %vm1708, %v4330, %v1444
      %v4363 = vsel %vm1708, %v4331, %v3160
      %v4364 = vsel %vm1708, %v4332, %v3162
      %v4365 = vsel %vm1708, %v4333, %v3164
      %v4366 = vsel %vm1708, %v4334, %v3166
      %v4367 = vsel %vm1708, %v4335, %v3168
      %v4368 = vsel %vm1708, %v4336, %v3170
      %v4369 = vsel %vm1708, %v4337, %v3172
      %v4370 = vsel %vm1708, %v4338, %v3174
      %v4371 = vsel %vm1708, %v4339, %v3176
      %v4372 = vsel %vm1708, %v4340, %v3178
      %v4373 = vsel %vm1708, %v4341, %v3180
      %v4374 = vsel %vm1708, %v4342, %v3182
      %v4375 = vsel %vm1708, %v4343, %v3184
      %v4376 = vsel %vm1708, %v4344, %v3186
      %v4377 = vsel %vm1708, %v4345, %v3188
      %v4378 = vsel %vm1708, %v4346, %v3190
      %v4379 = vsel %vm1708, %v4347, %v3192
      %v4380 = vsel %vm1708, %v4348, %v3194
      %v4381 = vsel %vm1708, %v4349, %v3196
      %v4382 = vsel %vm1708, %v4350, %v3198
      %v4383 = vsel %vm1708, %v4351, %v3200
      %v4384 = vsel %vm1708, %v4352, %v3202
      %v4385 = vsel %vm1708, %v4353, %v3204
      %v4386 = vsel %vm1708, %v4354, %v3206
      %v4387 = vsel %vm1708, %v4355, %v3208
      %v4388 = vsel %vm1708, %v4356, %v3210
      %v4389 = vsel %vm1708, %v4357, %v3212
      %v4390 = vsel %vm1708, %v4358, %v3214
      %v4391 = vsel %vm1708, %v4359, %v3216
      %v4392 = vsel %vm1708, %v4360, %v3218
      %v4393 = vsel %vm1753, %v4361, %v3251
      %v4394 = vsel %vm1753, %v4362, %v3253
      %v4395 = vsel %vm1753, %v4363, %v3255
      %v4396 = vsel %vm1753, %v4364, %v3257
      %v4397 = vsel %vm1753, %v4365, %v3259
      %v4398 = vsel %vm1753, %v4366, %v3261
      %v4399 = vsel %vm1753, %v4367, %v3263
      %v4400 = vsel %vm1753, %v4368, %v3265
      %v4401 = vsel %vm1753, %v4369, %v3267
      %v4402 = vsel %vm1753, %v4370, %v3269
      %v4403 = vsel %vm1753, %v4371, %v3271
      %v4404 = vsel %vm1753, %v4372, %v3273
      %v4405 = vsel %vm1753, %v4373, %v3275
      %v4406 = vsel %vm1753, %v4374, %v3277
      %v4407 = vsel %vm1753, %v4375, %v3279
      %v4408 = vsel %vm1753, %v4376, %v3281
      %v4409 = vsel %vm1753, %v4377, %v3283
      %v4410 = vsel %vm1753, %v4378, %v3285
      %v4411 = vsel %vm1753, %v4379, %v3287
      %v4412 = vsel %vm1753, %v4380, %v3289
      %v4413 = vsel %vm1753, %v4381, %v3291
      %v4414 = vsel %vm1753, %v4382, %v3293
      %v4415 = vsel %vm1753, %v4383, %v3295
      %v4416 = vsel %vm1753, %v4384, %v3297
      %v4417 = vsel %vm1753, %v4385, %v3299
      %v4418 = vsel %vm1753, %v4386, %v3301
      %v4419 = vsel %vm1753, %v4387, %v3303
      %v4420 = vsel %vm1753, %v4388, %v3305
      %v4421 = vsel %vm1753, %v4389, %v3307
      %v4422 = vsel %vm1753, %v4390, %v3309
      %v4423 = vsel %vm1753, %v4391, %v3311
      %v4424 = vsel %vm1753, %v4392, %v3313
      %vm4425 = vcmask 359424
      %v4426 = vsel %vm4425, %v4393, %v3348
      %v4427 = vsel %vm4425, %v4394, %v3350
      %v4428 = vsel %vm4425, %v4395, %v3352
      %v4429 = vsel %vm4425, %v4396, %v3354
      %v4430 = vsel %vm4425, %v4397, %v3356
      %v4431 = vsel %vm4425, %v4398, %v3358
      %v4432 = vsel %vm4425, %v4399, %v3360
      %v4433 = vsel %vm4425, %v4400, %v3362
      %v4434 = vsel %vm4425, %v4401, %v3364
      %v4435 = vsel %vm4425, %v4402, %v3366
      %v4436 = vsel %vm4425, %v4403, %v3368
      %v4437 = vsel %vm4425, %v4404, %v3370
      %v4438 = vsel %vm4425, %v4405, %v3372
      %v4439 = vsel %vm4425, %v4406, %v3374
      %v4440 = vsel %vm4425, %v4407, %v3376
      %v4441 = vsel %vm4425, %v4408, %v3378
      %v4442 = vsel %vm4425, %v4409, %v3380
      %v4443 = vsel %vm4425, %v4410, %v3382
      %v4444 = vsel %vm4425, %v4411, %v3384
      %v4445 = vsel %vm4425, %v4412, %v3386
      %v4446 = vsel %vm4425, %v4413, %v3388
      %v4447 = vsel %vm4425, %v4414, %v3390
      %v4448 = vsel %vm4425, %v4415, %v3392
      %v4449 = vsel %vm4425, %v4416, %v3394
      %v4450 = vsel %vm4425, %v4417, %v3396
      %v4451 = vsel %vm4425, %v4418, %v3398
      %v4452 = vsel %vm4425, %v4419, %v3400
      %v4453 = vsel %vm4425, %v4420, %v3402
      %v4454 = vsel %vm4425, %v4421, %v3404
      %v4455 = vsel %vm4425, %v4422, %v3406
      %v4456 = vsel %vm4425, %v4423, %v3408
      %v4457 = vsel %vm4425, %v4424, %v3410
      %vm4458 = vcmask 392192
      %v4459 = vsel %vm4458, %v4426, %v3450
      %v4460 = vsel %vm4458, %v4427, %v3452
      %v4461 = vsel %vm4458, %v4428, %v3454
      %v4462 = vsel %vm4458, %v4429, %v3456
      %v4463 = vsel %vm4458, %v4430, %v3458
      %v4464 = vsel %vm4458, %v4431, %v3460
      %v4465 = vsel %vm4458, %v4432, %v3462
      %v4466 = vsel %vm4458, %v4433, %v3464
      %v4467 = vsel %vm4458, %v4434, %v3466
      %v4468 = vsel %vm4458, %v4435, %v3468
      %v4469 = vsel %vm4458, %v4436, %v3470
      %v4470 = vsel %vm4458, %v4437, %v3472
      %v4471 = vsel %vm4458, %v4438, %v3474
      %v4472 = vsel %vm4458, %v4439, %v3476
      %v4473 = vsel %vm4458, %v4440, %v3478
      %v4474 = vsel %vm4458, %v4441, %v3480
      %v4475 = vsel %vm4458, %v4442, %v3482
      %v4476 = vsel %vm4458, %v4443, %v3484
      %v4477 = vsel %vm4458, %v4444, %v3486
      %v4478 = vsel %vm4458, %v4445, %v3488
      %v4479 = vsel %vm4458, %v4446, %v3490
      %v4480 = vsel %vm4458, %v4447, %v3492
      %v4481 = vsel %vm4458, %v4448, %v3494
      %v4482 = vsel %vm4458, %v4449, %v3496
      %v4483 = vsel %vm4458, %v4450, %v3498
      %v4484 = vsel %vm4458, %v4451, %v3500
      %v4485 = vsel %vm4458, %v4452, %v3502
      %v4486 = vsel %vm4458, %v4453, %v3504
      %v4487 = vsel %vm4458, %v4454, %v3506
      %v4488 = vsel %vm4458, %v4455, %v3508
      %v4489 = vsel %vm4458, %v4456, %v3510
      %v4490 = vsel %vm4458, %v4457, %v3512
      %vm4491 = vcmask 457728
      %v4492 = vsel %vm4491, %v4459, %v3552
      %v4493 = vsel %vm4491, %v4460, %v3554
      %v4494 = vsel %vm4491, %v4461, %v3556
      %v4495 = vsel %vm4491, %v4462, %v3558
      %v4496 = vsel %vm4491, %v4463, %v3560
      %v4497 = vsel %vm4491, %v4464, %v3562
      %v4498 = vsel %vm4491, %v4465, %v3564
      %v4499 = vsel %vm4491, %v4466, %v3566
      %v4500 = vsel %vm4491, %v4467, %v3568
      %v4501 = vsel %vm4491, %v4468, %v3570
      %v4502 = vsel %vm4491, %v4469, %v3572
      %v4503 = vsel %vm4491, %v4470, %v3574
      %v4504 = vsel %vm4491, %v4471, %v3576
      %v4505 = vsel %vm4491, %v4472, %v3578
      %v4506 = vsel %vm4491, %v4473, %v3580
      %v4507 = vsel %vm4491, %v4474, %v3582
      %v4508 = vsel %vm4491, %v4475, %v3584
      %v4509 = vsel %vm4491, %v4476, %v3586
      %v4510 = vsel %vm4491, %v4477, %v3588
      %v4511 = vsel %vm4491, %v4478, %v3590
      %v4512 = vsel %vm4491, %v4479, %v3592
      %v4513 = vsel %vm4491, %v4480, %v3594
      %v4514 = vsel %vm4491, %v4481, %v3596
      %v4515 = vsel %vm4491, %v4482, %v3598
      %v4516 = vsel %vm4491, %v4483, %v3600
      %v4517 = vsel %vm4491, %v4484, %v3602
      %v4518 = vsel %vm4491, %v4485, %v3604
      %v4519 = vsel %vm4491, %v4486, %v3606
      %v4520 = vsel %vm4491, %v4487, %v3608
      %v4521 = vsel %vm4491, %v4488, %v3610
      %v4522 = vsel %vm4491, %v4489, %v3612
      %v4523 = vsel %vm4491, %v4490, %v3614
      %vm4524 = vcmask 490496
      %v4525 = vsel %vm4524, %v4492, %v3653
      %v4526 = vsel %vm4524, %v4493, %v3655
      %v4527 = vsel %vm4524, %v4494, %v3657
      %v4528 = vsel %vm4524, %v4495, %v3659
      %v4529 = vsel %vm4524, %v4496, %v3661
      %v4530 = vsel %vm4524, %v4497, %v3663
      %v4531 = vsel %vm4524, %v4498, %v3665
      %v4532 = vsel %vm4524, %v4499, %v3667
      %v4533 = vsel %vm4524, %v4500, %v3669
      %v4534 = vsel %vm4524, %v4501, %v3671
      %v4535 = vsel %vm4524, %v4502, %v3673
      %v4536 = vsel %vm4524, %v4503, %v3675
      %v4537 = vsel %vm4524, %v4504, %v3677
      %v4538 = vsel %vm4524, %v4505, %v3679
      %v4539 = vsel %vm4524, %v4506, %v3681
      %v4540 = vsel %vm4524, %v4507, %v3683
      %v4541 = vsel %vm4524, %v4508, %v3685
      %v4542 = vsel %vm4524, %v4509, %v3687
      %v4543 = vsel %vm4524, %v4510, %v3689
      %v4544 = vsel %vm4524, %v4511, %v3691
      %v4545 = vsel %vm4524, %v4512, %v3693
      %v4546 = vsel %vm4524, %v4513, %v3695
      %v4547 = vsel %vm4524, %v4514, %v3697
      %v4548 = vsel %vm4524, %v4515, %v3699
      %v4549 = vsel %vm4524, %v4516, %v3701
      %v4550 = vsel %vm4524, %v4517, %v3703
      %v4551 = vsel %vm4524, %v4518, %v3705
      %v4552 = vsel %vm4524, %v4519, %v3707
      %v4553 = vsel %vm4524, %v4520, %v3709
      %v4554 = vsel %vm4524, %v4521, %v3711
      %v4555 = vsel %vm4524, %v4522, %v3713
      %v4556 = vsel %vm4524, %v4523, %v3715
      %vm4557 = vcmask 556032
      %v4558 = vsel %vm4557, %v4525, %v3754
      %v4559 = vsel %vm4557, %v4526, %v3756
      %v4560 = vsel %vm4557, %v4527, %v3758
      %v4561 = vsel %vm4557, %v4528, %v3760
      %v4562 = vsel %vm4557, %v4529, %v3762
      %v4563 = vsel %vm4557, %v4530, %v3764
      %v4564 = vsel %vm4557, %v4531, %v3766
      %v4565 = vsel %vm4557, %v4532, %v3768
      %v4566 = vsel %vm4557, %v4533, %v3770
      %v4567 = vsel %vm4557, %v4534, %v3772
      %v4568 = vsel %vm4557, %v4535, %v3774
      %v4569 = vsel %vm4557, %v4536, %v3776
      %v4570 = vsel %vm4557, %v4537, %v3778
      %v4571 = vsel %vm4557, %v4538, %v3780
      %v4572 = vsel %vm4557, %v4539, %v3782
      %v4573 = vsel %vm4557, %v4540, %v3784
      %v4574 = vsel %vm4557, %v4541, %v3786
      %v4575 = vsel %vm4557, %v4542, %v3788
      %v4576 = vsel %vm4557, %v4543, %v3790
      %v4577 = vsel %vm4557, %v4544, %v3792
      %v4578 = vsel %vm4557, %v4545, %v3794
      %v4579 = vsel %vm4557, %v4546, %v3796
      %v4580 = vsel %vm4557, %v4547, %v3798
      %v4581 = vsel %vm4557, %v4548, %v3800
      %v4582 = vsel %vm4557, %v4549, %v3802
      %v4583 = vsel %vm4557, %v4550, %v3804
      %v4584 = vsel %vm4557, %v4551, %v3806
      %v4585 = vsel %vm4557, %v4552, %v3808
      %v4586 = vsel %vm4557, %v4553, %v3810
      %v4587 = vsel %vm4557, %v4554, %v3812
      %v4588 = vsel %vm4557, %v4555, %v3814
      %v4589 = vsel %vm4557, %v4556, %v3816
      %vm4590 = vcmask 588800
      %v4591 = vsel %vm4590, %v4558, %v3850
      %v4592 = vsel %vm4590, %v4559, %v3852
      %v4593 = vsel %vm4590, %v4560, %v3854
      %v4594 = vsel %vm4590, %v4561, %v3856
      %v4595 = vsel %vm4590, %v4562, %v3858
      %v4596 = vsel %vm4590, %v4563, %v3860
      %v4597 = vsel %vm4590, %v4564, %v3862
      %v4598 = vsel %vm4590, %v4565, %v3864
      %v4599 = vsel %vm4590, %v4566, %v3866
      %v4600 = vsel %vm4590, %v4567, %v3868
      %v4601 = vsel %vm4590, %v4568, %v3870
      %v4602 = vsel %vm4590, %v4569, %v3872
      %v4603 = vsel %vm4590, %v4570, %v3874
      %v4604 = vsel %vm4590, %v4571, %v3876
      %v4605 = vsel %vm4590, %v4572, %v3878
      %v4606 = vsel %vm4590, %v4573, %v3880
      %v4607 = vsel %vm4590, %v4574, %v3882
      %v4608 = vsel %vm4590, %v4575, %v3884
      %v4609 = vsel %vm4590, %v4576, %v3886
      %v4610 = vsel %vm4590, %v4577, %v3888
      %v4611 = vsel %vm4590, %v4578, %v3890
      %v4612 = vsel %vm4590, %v4579, %v3892
      %v4613 = vsel %vm4590, %v4580, %v3894
      %v4614 = vsel %vm4590, %v4581, %v3896
      %v4615 = vsel %vm4590, %v4582, %v3898
      %v4616 = vsel %vm4590, %v4583, %v3900
      %v4617 = vsel %vm4590, %v4584, %v3902
      %v4618 = vsel %vm4590, %v4585, %v3904
      %v4619 = vsel %vm4590, %v4586, %v3906
      %v4620 = vsel %vm4590, %v4587, %v3908
      %v4621 = vsel %vm4590, %v4588, %v3910
      %v4622 = vsel %vm4590, %v4589, %v3912
      %vm4623 = vcmask 654336
      %v4624 = vsel %vm4623, %v4591, %v3946
      %v4625 = vsel %vm4623, %v4592, %v3948
      %v4626 = vsel %vm4623, %v4593, %v3950
      %v4627 = vsel %vm4623, %v4594, %v3952
      %v4628 = vsel %vm4623, %v4595, %v3954
      %v4629 = vsel %vm4623, %v4596, %v3956
      %v4630 = vsel %vm4623, %v4597, %v3958
      %v4631 = vsel %vm4623, %v4598, %v3960
      %v4632 = vsel %vm4623, %v4599, %v3962
      %v4633 = vsel %vm4623, %v4600, %v3964
      %v4634 = vsel %vm4623, %v4601, %v3966
      %v4635 = vsel %vm4623, %v4602, %v3968
      %v4636 = vsel %vm4623, %v4603, %v3970
      %v4637 = vsel %vm4623, %v4604, %v3972
      %v4638 = vsel %vm4623, %v4605, %v3974
      %v4639 = vsel %vm4623, %v4606, %v3976
      %v4640 = vsel %vm4623, %v4607, %v3978
      %v4641 = vsel %vm4623, %v4608, %v3980
      %v4642 = vsel %vm4623, %v4609, %v3982
      %v4643 = vsel %vm4623, %v4610, %v3984
      %v4644 = vsel %vm4623, %v4611, %v3986
      %v4645 = vsel %vm4623, %v4612, %v3988
      %v4646 = vsel %vm4623, %v4613, %v3990
      %v4647 = vsel %vm4623, %v4614, %v3992
      %v4648 = vsel %vm4623, %v4615, %v3994
      %v4649 = vsel %vm4623, %v4616, %v3996
      %v4650 = vsel %vm4623, %v4617, %v3998
      %v4651 = vsel %vm4623, %v4618, %v4000
      %v4652 = vsel %vm4623, %v4619, %v4002
      %v4653 = vsel %vm4623, %v4620, %v4004
      %v4654 = vsel %vm4623, %v4621, %v4006
      %v4655 = vsel %vm4623, %v4622, %v4008
      %vm4656 = vcmask 687104
      %v4657 = vsel %vm4656, %v4624, %v4042
      %v4658 = vsel %vm4656, %v4625, %v4044
      %v4659 = vsel %vm4656, %v4626, %v4046
      %v4660 = vsel %vm4656, %v4627, %v4048
      %v4661 = vsel %vm4656, %v4628, %v4050
      %v4662 = vsel %vm4656, %v4629, %v4052
      %v4663 = vsel %vm4656, %v4630, %v4054
      %v4664 = vsel %vm4656, %v4631, %v4056
      %v4665 = vsel %vm4656, %v4632, %v4058
      %v4666 = vsel %vm4656, %v4633, %v4060
      %v4667 = vsel %vm4656, %v4634, %v4062
      %v4668 = vsel %vm4656, %v4635, %v4064
      %v4669 = vsel %vm4656, %v4636, %v4066
      %v4670 = vsel %vm4656, %v4637, %v4068
      %v4671 = vsel %vm4656, %v4638, %v4070
      %v4672 = vsel %vm4656, %v4639, %v4072
      %v4673 = vsel %vm4656, %v4640, %v4074
      %v4674 = vsel %vm4656, %v4641, %v4076
      %v4675 = vsel %vm4656, %v4642, %v4078
      %v4676 = vsel %vm4656, %v4643, %v4080
      %v4677 = vsel %vm4656, %v4644, %v4082
      %v4678 = vsel %vm4656, %v4645, %v4084
      %v4679 = vsel %vm4656, %v4646, %v4086
      %v4680 = vsel %vm4656, %v4647, %v4088
      %v4681 = vsel %vm4656, %v4648, %v4090
      %v4682 = vsel %vm4656, %v4649, %v4092
      %v4683 = vsel %vm4656, %v4650, %v4094
      %v4684 = vsel %vm4656, %v4651, %v4096
      %v4685 = vsel %vm4656, %v4652, %v4098
      %v4686 = vsel %vm4656, %v4653, %v4100
      %v4687 = vsel %vm4656, %v4654, %v4102
      %v4688 = vsel %vm4656, %v4655, %v4104
      %vm4689 = vcmask 752640
      %v4690 = vsel %vm4689, %v4657, %v4138
      %v4691 = vsel %vm4689, %v4658, %v4140
      %v4692 = vsel %vm4689, %v4659, %v4142
      %v4693 = vsel %vm4689, %v4660, %v4144
      %v4694 = vsel %vm4689, %v4661, %v4146
      %v4695 = vsel %vm4689, %v4662, %v4148
      %v4696 = vsel %vm4689, %v4663, %v4150
      %v4697 = vsel %vm4689, %v4664, %v4152
      %v4698 = vsel %vm4689, %v4665, %v4154
      %v4699 = vsel %vm4689, %v4666, %v4156
      %v4700 = vsel %vm4689, %v4667, %v4158
      %v4701 = vsel %vm4689, %v4668, %v4160
      %v4702 = vsel %vm4689, %v4669, %v4162
      %v4703 = vsel %vm4689, %v4670, %v4164
      %v4704 = vsel %vm4689, %v4671, %v4166
      %v4705 = vsel %vm4689, %v4672, %v4168
      %v4706 = vsel %vm4689, %v4673, %v4170
      %v4707 = vsel %vm4689, %v4674, %v4172
      %v4708 = vsel %vm4689, %v4675, %v4174
      %v4709 = vsel %vm4689, %v4676, %v4176
      %v4710 = vsel %vm4689, %v4677, %v4178
      %v4711 = vsel %vm4689, %v4678, %v4180
      %v4712 = vsel %vm4689, %v4679, %v4182
      %v4713 = vsel %vm4689, %v4680, %v4184
      %v4714 = vsel %vm4689, %v4681, %v4186
      %v4715 = vsel %vm4689, %v4682, %v4188
      %v4716 = vsel %vm4689, %v4683, %v4190
      %v4717 = vsel %vm4689, %v4684, %v4192
      %v4718 = vsel %vm4689, %v4685, %v4194
      %v4719 = vsel %vm4689, %v4686, %v4196
      %v4720 = vsel %vm4689, %v4687, %v4198
      %v4721 = vsel %vm4689, %v4688, %v4200
      %4722 = vrot.lane.b32.xlu0 %v2400, 8
      %v4723 = vpop.permute.xlu0 %4722
      %4724 = vrot.lane.b32.xlu0 %v2401, 8
      %v4725 = vpop.permute.xlu0 %4724
      %4726 = vrot.lane.b32.xlu0 %v2402, 8
      %v4727 = vpop.permute.xlu0 %4726
      %4728 = vrot.lane.b32.xlu0 %v2403, 8
      %v4729 = vpop.permute.xlu0 %4728
      %4730 = vrot.lane.b32.xlu0 %v2404, 8
      %v4731 = vpop.permute.xlu0 %4730
      %4732 = vrot.lane.b32.xlu0 %v2405, 8
      %v4733 = vpop.permute.xlu0 %4732
      %4734 = vrot.lane.b32.xlu0 %v2406, 8
      %v4735 = vpop.permute.xlu0 %4734
      %4736 = vrot.lane.b32.xlu0 %v2407, 8
      %v4737 = vpop.permute.xlu0 %4736
      %4738 = vrot.lane.b32.xlu0 %v2408, 8
      %v4739 = vpop.permute.xlu0 %4738
      %4740 = vrot.lane.b32.xlu0 %v2409, 8
      %v4741 = vpop.permute.xlu0 %4740
      %4742 = vrot.lane.b32.xlu0 %v2410, 8
      %v4743 = vpop.permute.xlu0 %4742
      %4744 = vrot.lane.b32.xlu0 %v2411, 8
      %v4745 = vpop.permute.xlu0 %4744
      %4746 = vrot.lane.b32.xlu0 %v2412, 8
      %v4747 = vpop.permute.xlu0 %4746
      %4748 = vrot.lane.b32.xlu0 %v2413, 8
      %v4749 = vpop.permute.xlu0 %4748
      %4750 = vrot.lane.b32.xlu0 %v2398, 8
      %v4751 = vpop.permute.xlu0 %4750
      %4752 = vrot.lane.b32.xlu0 %v2350, 8
      %v4753 = vpop.permute.xlu0 %4752
      %4754 = vrot.lane.b32.xlu0 %v2414, 8
      %v4755 = vpop.permute.xlu0 %4754
      %4756 = vrot.lane.b32.xlu0 %v486, 8
      %v4757 = vpop.permute.xlu0 %4756
      %v4776 = vsel %vm1510, %v2256, %v4723
      %v4777 = vsel %vm1510, %v2257, %v4725
      %v4778 = vsel %vm1510, %v2258, %v4727
      %v4779 = vsel %vm1510, %v2259, %v4729
      %v4780 = vsel %vm1510, %v2260, %v4731
      %v4781 = vsel %vm1510, %v2261, %v4733
      %v4782 = vsel %vm1510, %v2262, %v4735
      %v4783 = vsel %vm1510, %v2263, %v4737
      %v4784 = vsel %vm1510, %v2264, %v4739
      %v4785 = vsel %vm1510, %v2265, %v4741
      %v4786 = vsel %vm1510, %v2266, %v4743
      %v4787 = vsel %vm1510, %v2267, %v4745
      %v4788 = vsel %vm1510, %v2268, %v4747
      %v4789 = vsel %vm1510, %v2269, %v4749
      %v4790 = vsel %vm1510, %v2254, %v4751
      %v4791 = vsel %vm1510, %v2190, %v4753
      %v4792 = vsel %vm1510, %v2270, %v4755
      %v4793 = vsel %vm1510, %v486, %v4757
      %v4842 = vrot.slane %v4237, 2
      %v4843 = vrot.slane %v4238, 2
      %v4844 = vsel %vm712, %v4842, %v4843
      %v4845 = vrot.slane %v4776, 2
      %v4846 = vsel %vm712, %v4843, %v4845
      %v4847 = vrot.slane %v4239, 2
      %v4848 = vrot.slane %v4240, 2
      %v4849 = vsel %vm712, %v4847, %v4848
      %v4850 = vrot.slane %v4777, 2
      %v4851 = vsel %vm712, %v4848, %v4850
      %v4852 = vrot.slane %v4241, 2
      %v4853 = vrot.slane %v4242, 2
      %v4854 = vsel %vm712, %v4852, %v4853
      %v4855 = vrot.slane %v4778, 2
      %v4856 = vsel %vm712, %v4853, %v4855
      %v4857 = vrot.slane %v4243, 2
      %v4858 = vrot.slane %v4244, 2
      %v4859 = vsel %vm712, %v4857, %v4858
      %v4860 = vrot.slane %v4779, 2
      %v4861 = vsel %vm712, %v4858, %v4860
      %v4862 = vrot.slane %v4245, 2
      %v4863 = vrot.slane %v4246, 2
      %v4864 = vsel %vm712, %v4862, %v4863
      %v4865 = vrot.slane %v4780, 2
      %v4866 = vsel %vm712, %v4863, %v4865
      %v4867 = vrot.slane %v4247, 2
      %v4868 = vrot.slane %v4248, 2
      %v4869 = vsel %vm712, %v4867, %v4868
      %v4870 = vrot.slane %v4781, 2
      %v4871 = vsel %vm712, %v4868, %v4870
      %v4872 = vrot.slane %v4249, 2
      %v4873 = vrot.slane %v4250, 2
      %v4874 = vsel %vm712, %v4872, %v4873
      %v4875 = vrot.slane %v4782, 2
      %v4876 = vsel %vm712, %v4873, %v4875
      %v4877 = vrot.slane %v4251, 2
      %v4878 = vrot.slane %v4252, 2
      %v4879 = vsel %vm712, %v4877, %v4878
      %v4880 = vrot.slane %v4783, 2
      %v4881 = vsel %vm712, %v4878, %v4880
      %v4882 = vrot.slane %v4253, 2
      %v4883 = vrot.slane %v4254, 2
      %v4884 = vsel %vm712, %v4882, %v4883
      %v4885 = vrot.slane %v4784, 2
      %v4886 = vsel %vm712, %v4883, %v4885
      %v4887 = vrot.slane %v4255, 2
      %v4888 = vrot.slane %v4256, 2
      %v4889 = vsel %vm712, %v4887, %v4888
      %v4890 = vrot.slane %v4785, 2
      %v4891 = vsel %vm712, %v4888, %v4890
      %v4892 = vrot.slane %v4257, 2
      %v4893 = vrot.slane %v4258, 2
      %v4894 = vsel %vm712, %v4892, %v4893
      %v4895 = vrot.slane %v4786, 2
      %v4896 = vsel %vm712, %v4893, %v4895
      %v4897 = vrot.slane %v4259, 2
      %v4898 = vrot.slane %v4260, 2
      %v4899 = vsel %vm712, %v4897, %v4898
      %v4900 = vrot.slane %v4787, 2
      %v4901 = vsel %vm712, %v4898, %v4900
      %v4902 = vrot.slane %v4261, 2
      %v4903 = vrot.slane %v4262, 2
      %v4904 = vsel %vm712, %v4902, %v4903
      %v4905 = vrot.slane %v4788, 2
      %v4906 = vsel %vm712, %v4903, %v4905
      %v4907 = vrot.slane %v4263, 2
      %v4908 = vrot.slane %v4264, 2
      %v4909 = vsel %vm712, %v4907, %v4908
      %v4910 = vrot.slane %v4789, 2
      %v4911 = vsel %vm712, %v4908, %v4910
      %v4912 = vrot.slane %v4790, 2
      %v4913 = vrot.slane %v4791, 2
      %v4914 = vsel %vm712, %v4912, %v4913
      %v4915 = vrot.slane %v4792, 2
      %v4916 = vsel %vm712, %v4913, %v4915
      %v4917 = vrot.slane %v4233, 2
      %v4918 = vrot.slane %v4234, 2
      %v4919 = vsel %vm712, %v4917, %v4918
      %v4920 = vrot.slane %v4793, 2
      %v4921 = vsel %vm712, %v4918, %v4920
      %4922 = vrot.lane.b32.xlu0 %v4844, 96
      %v4923 = vpop.permute.xlu0 %4922
      %4924 = vrot.lane.b32.xlu0 %v4846, 96
      %v4925 = vpop.permute.xlu0 %4924
      %4926 = vrot.lane.b32.xlu0 %v4849, 96
      %v4927 = vpop.permute.xlu0 %4926
      %4928 = vrot.lane.b32.xlu0 %v4851, 96
      %v4929 = vpop.permute.xlu0 %4928
      %4930 = vrot.lane.b32.xlu0 %v4854, 96
      %v4931 = vpop.permute.xlu0 %4930
      %4932 = vrot.lane.b32.xlu0 %v4856, 96
      %v4933 = vpop.permute.xlu0 %4932
      %4934 = vrot.lane.b32.xlu0 %v4859, 96
      %v4935 = vpop.permute.xlu0 %4934
      %4936 = vrot.lane.b32.xlu0 %v4861, 96
      %v4937 = vpop.permute.xlu0 %4936
      %4938 = vrot.lane.b32.xlu0 %v4864, 96
      %v4939 = vpop.permute.xlu0 %4938
      %4940 = vrot.lane.b32.xlu0 %v4866, 96
      %v4941 = vpop.permute.xlu0 %4940
      %4942 = vrot.lane.b32.xlu0 %v4869, 96
      %v4943 = vpop.permute.xlu0 %4942
      %4944 = vrot.lane.b32.xlu0 %v4871, 96
      %v4945 = vpop.permute.xlu0 %4944
      %4946 = vrot.lane.b32.xlu0 %v4874, 96
      %v4947 = vpop.permute.xlu0 %4946
      %4948 = vrot.lane.b32.xlu0 %v4876, 96
      %v4949 = vpop.permute.xlu0 %4948
      %4950 = vrot.lane.b32.xlu0 %v4879, 96
      %v4951 = vpop.permute.xlu0 %4950
      %4952 = vrot.lane.b32.xlu0 %v4881, 96
      %v4953 = vpop.permute.xlu0 %4952
      %4954 = vrot.lane.b32.xlu0 %v4884, 96
      %v4955 = vpop.permute.xlu0 %4954
      %4956 = vrot.lane.b32.xlu0 %v4886, 96
      %v4957 = vpop.permute.xlu0 %4956
      %4958 = vrot.lane.b32.xlu0 %v4889, 96
      %v4959 = vpop.permute.xlu0 %4958
      %4960 = vrot.lane.b32.xlu0 %v4891, 96
      %v4961 = vpop.permute.xlu0 %4960
      %4962 = vrot.lane.b32.xlu0 %v4894, 96
      %v4963 = vpop.permute.xlu0 %4962
      %4964 = vrot.lane.b32.xlu0 %v4896, 96
      %v4965 = vpop.permute.xlu0 %4964
      %4966 = vrot.lane.b32.xlu0 %v4899, 96
      %v4967 = vpop.permute.xlu0 %4966
      %4968 = vrot.lane.b32.xlu0 %v4901, 96
      %v4969 = vpop.permute.xlu0 %4968
      %4970 = vrot.lane.b32.xlu0 %v4904, 96
      %v4971 = vpop.permute.xlu0 %4970
      %4972 = vrot.lane.b32.xlu0 %v4906, 96
      %v4973 = vpop.permute.xlu0 %4972
      %4974 = vrot.lane.b32.xlu0 %v4909, 96
      %v4975 = vpop.permute.xlu0 %4974
      %4976 = vrot.lane.b32.xlu0 %v4911, 96
      %v4977 = vpop.permute.xlu0 %4976
      %4978 = vrot.lane.b32.xlu0 %v4914, 96
      %v4979 = vpop.permute.xlu0 %4978
      %4980 = vrot.lane.b32.xlu0 %v4916, 96
      %v4981 = vpop.permute.xlu0 %4980
      %4982 = vrot.lane.b32.xlu0 %v4919, 96
      %v4983 = vpop.permute.xlu0 %4982
      %4984 = vrot.lane.b32.xlu0 %v4921, 96
      %v4985 = vpop.permute.xlu0 %4984
      %vm5018 = vcmask 785408
      %v5019 = vsel %vm5018, %v4690, %v4923
      %v5020 = vsel %vm5018, %v4691, %v4925
      %v5021 = vsel %vm5018, %v4692, %v4927
      %v5022 = vsel %vm5018, %v4693, %v4929
      %v5023 = vsel %vm5018, %v4694, %v4931
      %v5024 = vsel %vm5018, %v4695, %v4933
      %v5025 = vsel %vm5018, %v4696, %v4935
      %v5026 = vsel %vm5018, %v4697, %v4937
      %v5027 = vsel %vm5018, %v4698, %v4939
      %v5028 = vsel %vm5018, %v4699, %v4941
      %v5029 = vsel %vm5018, %v4700, %v4943
      %v5030 = vsel %vm5018, %v4701, %v4945
      %v5031 = vsel %vm5018, %v4702, %v4947
      %v5032 = vsel %vm5018, %v4703, %v4949
      %v5033 = vsel %vm5018, %v4704, %v4951
      %v5034 = vsel %vm5018, %v4705, %v4953
      %v5035 = vsel %vm5018, %v4706, %v4955
      %v5036 = vsel %vm5018, %v4707, %v4957
      %v5037 = vsel %vm5018, %v4708, %v4959
      %v5038 = vsel %vm5018, %v4709, %v4961
      %v5039 = vsel %vm5018, %v4710, %v4963
      %v5040 = vsel %vm5018, %v4711, %v4965
      %v5041 = vsel %vm5018, %v4712, %v4967
      %v5042 = vsel %vm5018, %v4713, %v4969
      %v5043 = vsel %vm5018, %v4714, %v4971
      %v5044 = vsel %vm5018, %v4715, %v4973
      %v5045 = vsel %vm5018, %v4716, %v4975
      %v5046 = vsel %vm5018, %v4717, %v4977
      %v5047 = vsel %vm5018, %v4718, %v4979
      %v5048 = vsel %vm5018, %v4719, %v4981
      %v5049 = vsel %vm5018, %v4720, %v4983
      %v5050 = vsel %vm5018, %v4721, %v4985
      %v5051 = vld [vmem:[%s4] sm:$0xff]
      %v5052 = vld [vmem:[%s4 + $0x8] sm:$0xff]
      %v5053 = vld [vmem:[%s4 + $0x10] sm:$0xff]
      %v5054 = vld [vmem:[%s4 + $0x18] sm:$0xff]
      %v5055 = vld [vmem:[%s4 + $0x20] sm:$0xff]
      %v5056 = vld [vmem:[%s4 + $0x28] sm:$0xff]
      %v5057 = vld [vmem:[%s4 + $0x30] sm:$0xff]
      %v5058 = vld [vmem:[%s4 + $0x38] sm:$0xff]
      %v5059 = vld [vmem:[%s4 + $0x40] sm:$0xff]
      %v5060 = vld [vmem:[%s4 + $0x48] sm:$0xff]
      %v5061 = vld [vmem:[%s4 + $0x50] sm:$0xff]
      %v5062 = vld [vmem:[%s4 + $0x58] sm:$0xff]
      %v5063 = vld [vmem:[%s4 + $0x60] sm:$0xff]
      %v5064 = vld [vmem:[%s4 + $0x68] sm:$0xf]
      %v5065 = vld [vmem:[%s5] sm:$0x1]
      %v5067 = vlaneseq
      %v5068 = vshrl.u32 %v5067, 7
      %v5069 = vsub.s32 0, %v5068
      %v5070 = vrot.slane %v5065, %v5069
      %vm5072 = vcmask 883712
      %v5074 = vsel %vm5072, %v5019, 0
      %v5077 = vsel %vm5072, %v5020, 0
      %v5080 = vsel %vm5072, %v5021, 0
      %v5083 = vsel %vm5072, %v5022, 0
      %v5086 = vsel %vm5072, %v5023, 0
      %v5089 = vsel %vm5072, %v5024, 0
      %v5092 = vsel %vm5072, %v5025, 0
      %v5095 = vsel %vm5072, %v5026, 0
      %v5098 = vsel %vm5072, %v5027, 0
      %v5101 = vsel %vm5072, %v5028, 0
      %v5104 = vsel %vm5072, %v5029, 0
      %v5107 = vsel %vm5072, %v5030, 0
      %v5110 = vsel %vm5072, %v5031, 0
      %v5113 = vsel %vm5072, %v5032, 0
      %v5116 = vsel %vm5072, %v5033, 0
      %v5119 = vsel %vm5072, %v5034, 0
      %v5122 = vsel %vm5072, %v5035, 0
      %v5125 = vsel %vm5072, %v5036, 0
      %v5128 = vsel %vm5072, %v5037, 0
      %v5131 = vsel %vm5072, %v5038, 0
      %v5134 = vsel %vm5072, %v5039, 0
      %v5137 = vsel %vm5072, %v5040, 0
      %v5140 = vsel %vm5072, %v5041, 0
      %v5143 = vsel %vm5072, %v5042, 0
      %v5146 = vsel %vm5072, %v5043, 0
      %v5149 = vsel %vm5072, %v5044, 0
      %v5152 = vsel %vm5072, %v5045, 0
      %v5155 = vsel %vm5072, %v5046, 0
      %v5158 = vsel %vm5072, %v5047, 0
      %v5161 = vsel %vm5072, %v5048, 0
      %v5164 = vsel %vm5072, %v5049, 0
      %v5167 = vsel %vm5072, %v5050, 0
      %v5170 = vsel %vm1850, %v5064, 0
      %5172 = vmatprep.subr.mxu0 0.0
      %5173 = vmatpush1.msra.mxu0 0.0
      %5174 = vmatprep.subr.mxu0 0.0
      %5175 = vmatpush1.msra.mxu0 0.0
      %5176 = vmatprep.subr.mxu0 0.0
      %5177 = vmatpush1.msra.mxu0 %v5170
      %5178 = vmatprep.subr.mxu0 0.0
      %5179 = vmatpush1.msra.mxu0 %v5063
      %5180 = vmatprep.subr.mxu0 0.0
      %5181 = vmatpush1.msra.mxu0 %v5062
      %5182 = vmatprep.subr.mxu0 0.0
      %5183 = vmatpush1.msra.mxu0 %v5061
      %5184 = vmatprep.subr.mxu0 0.0
      %5185 = vmatpush1.msra.mxu0 %v5060
      %5186 = vmatprep.subr.mxu0 0.0
      %5187 = vmatpush1.msra.mxu0 %v5059
      %5188 = vmatprep.subr.mxu0 0.0
      %5189 = vmatpush1.msra.mxu0 %v5058
      %5190 = vmatprep.subr.mxu0 0.0
      %5191 = vmatpush1.msra.mxu0 %v5057
      %5192 = vmatprep.subr.mxu0 0.0
      %5193 = vmatpush1.msra.mxu0 %v5056
      %5194 = vmatprep.subr.mxu0 0.0
      %5195 = vmatpush1.msra.mxu0 %v5055
      %5196 = vmatprep.subr.mxu0 0.0
      %5197 = vmatpush1.msra.mxu0 %v5054
      %5198 = vmatprep.subr.mxu0 0.0
      %5199 = vmatpush1.msra.mxu0 %v5053
      %5200 = vmatprep.subr.mxu0 0.0
      %5201 = vmatpush1.msra.mxu0 %v5052
      %5202 = vmatprep.subr.mxu0 0.0
      %5203 = vmatpush1.msra.mxu0 %v5051
      %5204 = vmatprep.subr.mxu0 0.0
      %5205 = vmatpush2.msra.mxu0 0.0
      %5206 = vmatprep.subr.mxu0 0.0
      %5207 = vmatpush2.msra.mxu0 0.0
      %5208 = vmatprep.subr.mxu0 0.0
      %5209 = vmatpush2.msra.mxu0 0.0
      %5210 = vmatprep.subr.mxu0 0.0
      %5211 = vmatpush2.msra.mxu0 0.0
      %5212 = vmatprep.subr.mxu0 0.0
      %5213 = vmatpush2.msra.mxu0 0.0
      %5214 = vmatprep.subr.mxu0 0.0
      %5215 = vmatpush2.msra.mxu0 0.0
      %5216 = vmatprep.subr.mxu0 0.0
      %5217 = vmatpush2.msra.mxu0 0.0
      %5218 = vmatprep.subr.mxu0 0.0
      %5219 = vmatpush2.msra.mxu0 0.0
      %5220 = vmatprep.subr.mxu0 0.0
      %5221 = vmatpush2.msra.mxu0 0.0
      %5222 = vmatprep.subr.mxu0 0.0
      %5223 = vmatpush2.msra.mxu0 0.0
      %5224 = vmatprep.subr.mxu0 0.0
      %5225 = vmatpush2.msra.mxu0 0.0
      %5226 = vmatprep.subr.mxu0 0.0
      %5227 = vmatpush2.msra.mxu0 0.0
      %5228 = vmatprep.subr.mxu0 0.0
      %5229 = vmatpush2.msra.mxu0 0.0
      %5230 = vmatprep.subr.mxu0 0.0
      %5231 = vmatpush2.msra.mxu0 0.0
      %5232 = vmatprep.subr.mxu0 0.0
      %5233 = vmatpush2.msra.mxu0 0.0
      %5234 = vmatprep.subr.mxu0 0.0
      %5235 = vmatpush2.msra.mxu0 0.0
      %5236 = vmatprep.mubr.f32.mxu0 0.0
      %5237 = vmatmul.mubr.f32.gmra.mxu0 %v5074
      %v5238 = vpop.f32.mrf.mxu0
      %v5239 = vadd.f32 %v5070, %v5238
      %v5240 = vpop.f32.mrf.mxu0
      %5241 = vmatprep.mubr.f32.mxu0 0.0
      %5242 = vmatmul.mubr.f32.gmra.mxu0 %v5077
      %v5243 = vpop.f32.mrf.mxu0
      %v5244 = vadd.f32 %v5070, %v5243
      %v5245 = vpop.f32.mrf.mxu0
      %5246 = vmatprep.mubr.f32.mxu0 0.0
      %5247 = vmatmul.mubr.f32.gmra.mxu0 %v5080
      %v5248 = vpop.f32.mrf.mxu0
      %v5249 = vadd.f32 %v5070, %v5248
      %v5250 = vpop.f32.mrf.mxu0
      %5251 = vmatprep.mubr.f32.mxu0 0.0
      %5252 = vmatmul.mubr.f32.gmra.mxu0 %v5083
      %v5253 = vpop.f32.mrf.mxu0
      %v5254 = vadd.f32 %v5070, %v5253
      %v5255 = vpop.f32.mrf.mxu0
      %5256 = vmatprep.mubr.f32.mxu0 0.0
      %5257 = vmatmul.mubr.f32.gmra.mxu0 %v5086
      %v5258 = vpop.f32.mrf.mxu0
      %v5259 = vadd.f32 %v5070, %v5258
      %v5260 = vpop.f32.mrf.mxu0
      %5261 = vmatprep.mubr.f32.mxu0 0.0
      %5262 = vmatmul.mubr.f32.gmra.mxu0 %v5089
      %v5263 = vpop.f32.mrf.mxu0
      %v5264 = vadd.f32 %v5070, %v5263
      %v5265 = vpop.f32.mrf.mxu0
      %5266 = vmatprep.mubr.f32.mxu0 0.0
      %5267 = vmatmul.mubr.f32.gmra.mxu0 %v5092
      %v5268 = vpop.f32.mrf.mxu0
      %v5269 = vadd.f32 %v5070, %v5268
      %v5270 = vpop.f32.mrf.mxu0
      %5271 = vmatprep.mubr.f32.mxu0 0.0
      %5272 = vmatmul.mubr.f32.gmra.mxu0 %v5095
      %v5273 = vpop.f32.mrf.mxu0
      %v5274 = vadd.f32 %v5070, %v5273
      %v5275 = vpop.f32.mrf.mxu0
      %5276 = vmatprep.mubr.f32.mxu0 0.0
      %5277 = vmatmul.mubr.f32.gmra.mxu0 %v5098
      %v5278 = vpop.f32.mrf.mxu0
      %v5279 = vadd.f32 %v5070, %v5278
      %v5280 = vpop.f32.mrf.mxu0
      %5281 = vmatprep.mubr.f32.mxu0 0.0
      %5282 = vmatmul.mubr.f32.gmra.mxu0 %v5101
      %v5283 = vpop.f32.mrf.mxu0
      %v5284 = vadd.f32 %v5070, %v5283
      %v5285 = vpop.f32.mrf.mxu0
      %5286 = vmatprep.mubr.f32.mxu0 0.0
      %5287 = vmatmul.mubr.f32.gmra.mxu0 %v5104
      %v5288 = vpop.f32.mrf.mxu0
      %v5289 = vadd.f32 %v5070, %v5288
      %v5290 = vpop.f32.mrf.mxu0
      %5291 = vmatprep.mubr.f32.mxu0 0.0
      %5292 = vmatmul.mubr.f32.gmra.mxu0 %v5107
      %v5293 = vpop.f32.mrf.mxu0
      %v5294 = vadd.f32 %v5070, %v5293
      %v5295 = vpop.f32.mrf.mxu0
      %5296 = vmatprep.mubr.f32.mxu0 0.0
      %5297 = vmatmul.mubr.f32.gmra.mxu0 %v5110
      %v5298 = vpop.f32.mrf.mxu0
      %v5299 = vadd.f32 %v5070, %v5298
      %v5300 = vpop.f32.mrf.mxu0
      %5301 = vmatprep.mubr.f32.mxu0 0.0
      %5302 = vmatmul.mubr.f32.gmra.mxu0 %v5113
      %v5303 = vpop.f32.mrf.mxu0
      %v5304 = vadd.f32 %v5070, %v5303
      %v5305 = vpop.f32.mrf.mxu0
      %5306 = vmatprep.mubr.f32.mxu0 0.0
      %5307 = vmatmul.mubr.f32.gmra.mxu0 %v5116
      %v5308 = vpop.f32.mrf.mxu0
      %v5309 = vadd.f32 %v5070, %v5308
      %v5310 = vpop.f32.mrf.mxu0
      %5311 = vmatprep.mubr.f32.mxu0 0.0
      %5312 = vmatmul.mubr.f32.gmra.mxu0 %v5119
      %v5313 = vpop.f32.mrf.mxu0
      %v5314 = vadd.f32 %v5070, %v5313
      %v5315 = vpop.f32.mrf.mxu0
      %5316 = vmatprep.mubr.f32.mxu0 0.0
      %5317 = vmatmul.mubr.f32.gmra.mxu0 %v5122
      %v5318 = vpop.f32.mrf.mxu0
      %v5319 = vadd.f32 %v5070, %v5318
      %v5320 = vpop.f32.mrf.mxu0
      %5321 = vmatprep.mubr.f32.mxu0 0.0
      %5322 = vmatmul.mubr.f32.gmra.mxu0 %v5125
      %v5323 = vpop.f32.mrf.mxu0
      %v5324 = vadd.f32 %v5070, %v5323
      %v5325 = vpop.f32.mrf.mxu0
      %5326 = vmatprep.mubr.f32.mxu0 0.0
      %5327 = vmatmul.mubr.f32.gmra.mxu0 %v5128
      %v5328 = vpop.f32.mrf.mxu0
      %v5329 = vadd.f32 %v5070, %v5328
      %v5330 = vpop.f32.mrf.mxu0
      %5331 = vmatprep.mubr.f32.mxu0 0.0
      %5332 = vmatmul.mubr.f32.gmra.mxu0 %v5131
      %v5333 = vpop.f32.mrf.mxu0
      %v5334 = vadd.f32 %v5070, %v5333
      %v5335 = vpop.f32.mrf.mxu0
      %5336 = vmatprep.mubr.f32.mxu0 0.0
      %5337 = vmatmul.mubr.f32.gmra.mxu0 %v5134
      %v5338 = vpop.f32.mrf.mxu0
      %v5339 = vadd.f32 %v5070, %v5338
      %v5340 = vpop.f32.mrf.mxu0
      %5341 = vmatprep.mubr.f32.mxu0 0.0
      %5342 = vmatmul.mubr.f32.gmra.mxu0 %v5137
      %v5343 = vpop.f32.mrf.mxu0
      %v5344 = vadd.f32 %v5070, %v5343
      %v5345 = vpop.f32.mrf.mxu0
      %5346 = vmatprep.mubr.f32.mxu0 0.0
      %5347 = vmatmul.mubr.f32.gmra.mxu0 %v5140
      %v5348 = vpop.f32.mrf.mxu0
      %v5349 = vadd.f32 %v5070, %v5348
      %v5350 = vpop.f32.mrf.mxu0
      %5351 = vmatprep.mubr.f32.mxu0 0.0
      %5352 = vmatmul.mubr.f32.gmra.mxu0 %v5143
      %v5353 = vpop.f32.mrf.mxu0
      %v5354 = vadd.f32 %v5070, %v5353
      %v5355 = vpop.f32.mrf.mxu0
      %5356 = vmatprep.mubr.f32.mxu0 0.0
      %5357 = vmatmul.mubr.f32.gmra.mxu0 %v5146
      %v5358 = vpop.f32.mrf.mxu0
      %v5359 = vadd.f32 %v5070, %v5358
      %v5360 = vpop.f32.mrf.mxu0
      %5361 = vmatprep.mubr.f32.mxu0 0.0
      %5362 = vmatmul.mubr.f32.gmra.mxu0 %v5149
      %v5363 = vpop.f32.mrf.mxu0
      %v5364 = vadd.f32 %v5070, %v5363
      %v5365 = vpop.f32.mrf.mxu0
      %5366 = vmatprep.mubr.f32.mxu0 0.0
      %5367 = vmatmul.mubr.f32.gmra.mxu0 %v5152
      %v5368 = vpop.f32.mrf.mxu0
      %v5369 = vadd.f32 %v5070, %v5368
      %v5370 = vpop.f32.mrf.mxu0
      %5371 = vmatprep.mubr.f32.mxu0 0.0
      %5372 = vmatmul.mubr.f32.gmra.mxu0 %v5155
      %v5373 = vpop.f32.mrf.mxu0
      %v5374 = vadd.f32 %v5070, %v5373
      %v5375 = vpop.f32.mrf.mxu0
      %5376 = vmatprep.mubr.f32.mxu0 0.0
      %5377 = vmatmul.mubr.f32.gmra.mxu0 %v5158
      %v5378 = vpop.f32.mrf.mxu0
      %v5379 = vadd.f32 %v5070, %v5378
      %v5380 = vpop.f32.mrf.mxu0
      %5381 = vmatprep.mubr.f32.mxu0 0.0
      %5382 = vmatmul.mubr.f32.gmra.mxu0 %v5161
      %v5383 = vpop.f32.mrf.mxu0
      %v5384 = vadd.f32 %v5070, %v5383
      %v5385 = vpop.f32.mrf.mxu0
      %5386 = vmatprep.mubr.f32.mxu0 0.0
      %5387 = vmatmul.mubr.f32.gmra.mxu0 %v5164
      %v5388 = vpop.f32.mrf.mxu0
      %v5389 = vadd.f32 %v5070, %v5388
      %v5390 = vpop.f32.mrf.mxu0
      %5391 = vmatprep.mubr.f32.mxu0 0.0
      %5392 = vmatmul.mubr.f32.gmra.mxu0 %v5167
      %v5393 = vpop.f32.mrf.mxu0
      %v5394 = vadd.f32 %v5070, %v5393
      %v5395 = vpop.f32.mrf.mxu0
      %5396 = vdwg.mxu0
      %v5397 = vmax.f32 %v5239, 0.0
      %v5398 = vmax.f32 %v5244, 0.0
      %v5399 = vmax.f32 %v5249, 0.0
      %v5400 = vmax.f32 %v5254, 0.0
      %v5401 = vmax.f32 %v5259, 0.0
      %v5402 = vmax.f32 %v5264, 0.0
      %v5403 = vmax.f32 %v5269, 0.0
      %v5404 = vmax.f32 %v5274, 0.0
      %v5405 = vmax.f32 %v5279, 0.0
      %v5406 = vmax.f32 %v5284, 0.0
      %v5407 = vmax.f32 %v5289, 0.0
      %v5408 = vmax.f32 %v5294, 0.0
      %v5409 = vmax.f32 %v5299, 0.0
      %v5410 = vmax.f32 %v5304, 0.0
      %v5411 = vmax.f32 %v5309, 0.0
      %v5412 = vmax.f32 %v5314, 0.0
      %v5413 = vmax.f32 %v5319, 0.0
      %v5414 = vmax.f32 %v5324, 0.0
      %v5415 = vmax.f32 %v5329, 0.0
      %v5416 = vmax.f32 %v5334, 0.0
      %v5417 = vmax.f32 %v5339, 0.0
      %v5418 = vmax.f32 %v5344, 0.0
      %v5419 = vmax.f32 %v5349, 0.0
      %v5420 = vmax.f32 %v5354, 0.0
      %v5421 = vmax.f32 %v5359, 0.0
      %v5422 = vmax.f32 %v5364, 0.0
      %v5423 = vmax.f32 %v5369, 0.0
      %v5424 = vmax.f32 %v5374, 0.0
      %v5425 = vmax.f32 %v5379, 0.0
      %v5426 = vmax.f32 %v5384, 0.0
      %v5427 = vmax.f32 %v5389, 0.0
      %v5428 = vmax.f32 %v5394, 0.0
      %5429 = vst.msk [vmem:[%s271] sm:$0xff] %vm1477, %v5397
      %5430 = vst.msk [vmem:[%s271 + $0x8] sm:$0xff] %vm1477, %v5398
      %5431 = vst.msk [vmem:[%s271 + $0x10] sm:$0xff] %vm1477, %v5399
      %5432 = vst.msk [vmem:[%s271 + $0x18] sm:$0xff] %vm1477, %v5400
      %5433 = vst.msk [vmem:[%s271 + $0x20] sm:$0xff] %vm1477, %v5401
      %5434 = vst.msk [vmem:[%s271 + $0x28] sm:$0xff] %vm1477, %v5402
      %5435 = vst.msk [vmem:[%s271 + $0x30] sm:$0xff] %vm1477, %v5403
      %5436 = vst.msk [vmem:[%s271 + $0x38] sm:$0xff] %vm1477, %v5404
      %5437 = vst.msk [vmem:[%s271 + $0x40] sm:$0xff] %vm1477, %v5405
      %5438 = vst.msk [vmem:[%s271 + $0x48] sm:$0xff] %vm1477, %v5406
      %5439 = vst.msk [vmem:[%s271 + $0x50] sm:$0xff] %vm1477, %v5407
      %5440 = vst.msk [vmem:[%s271 + $0x58] sm:$0xff] %vm1477, %v5408
      %5441 = vst.msk [vmem:[%s271 + $0x60] sm:$0xff] %vm1477, %v5409
      %5442 = vst.msk [vmem:[%s271 + $0x68] sm:$0xff] %vm1477, %v5410
      %5443 = vst.msk [vmem:[%s271 + $0x70] sm:$0xff] %vm1477, %v5411
      %5444 = vst.msk [vmem:[%s271 + $0x78] sm:$0xff] %vm1477, %v5412
      %5445 = vst.msk [vmem:[%s271 + $0x80] sm:$0xff] %vm1477, %v5413
      %5446 = vst.msk [vmem:[%s271 + $0x88] sm:$0xff] %vm1477, %v5414
      %5447 = vst.msk [vmem:[%s271 + $0x90] sm:$0xff] %vm1477, %v5415
      %5448 = vst.msk [vmem:[%s271 + $0x98] sm:$0xff] %vm1477, %v5416
      %5449 = vst.msk [vmem:[%s271 + $0xa0] sm:$0xff] %vm1477, %v5417
      %5450 = vst.msk [vmem:[%s271 + $0xa8] sm:$0xff] %vm1477, %v5418
      %5451 = vst.msk [vmem:[%s271 + $0xb0] sm:$0xff] %vm1477, %v5419
      %5452 = vst.msk [vmem:[%s271 + $0xb8] sm:$0xff] %vm1477, %v5420
      %5453 = vst.msk [vmem:[%s271 + $0xc0] sm:$0xff] %vm1477, %v5421
      %5454 = vst.msk [vmem:[%s271 + $0xc8] sm:$0xff] %vm1477, %v5422
      %5455 = vst.msk [vmem:[%s271 + $0xd0] sm:$0xff] %vm1477, %v5423
      %5456 = vst.msk [vmem:[%s271 + $0xd8] sm:$0xff] %vm1477, %v5424
      %5457 = vst.msk [vmem:[%s271 + $0xe0] sm:$0xff] %vm1477, %v5425
      %5458 = vst.msk [vmem:[%s271 + $0xe8] sm:$0xff] %vm1477, %v5426
      %5459 = vst.msk [vmem:[%s271 + $0xf0] sm:$0xff] %vm1477, %v5427
      %5460 = vst.msk [vmem:[%s271 + $0xf8] sm:$0xff] %vm1477, %v5428
      %p5461 = scmp.lt.s32.totalorder %s17, 1
      %s5462 = scalar_select %p5461, %s17, 1
      %s5463 = smul.addr %s5462, 32
      %s5464 = smul.addr %s5463, 8
      %s5465 = scalar_lea.vmem %s6, %s5464
      // Predicated region
      $region45: #{decode_layer_forward.1} parent=43 // pred_check
        %p5466 = pneg %p171
      $region46: #{decode_layer_forward.1} parent=43 // pred_check_branch
        %5468 = sbr.rel (%p5466) target = $region48
      $region47: #{decode_layer_forward.1} parent=43 // pred_region
        _
      $region48: #{decode_layer_forward.1} parent=43 // pred_fallthru
        _
    $region44: #{decode_layer_forward.1} parent=5 // pred_fallthru
      _
    %p5469 = scmp.le.s32.totalorder 2, %s12
    // Predicated region
    $region49: #{decode_layer_forward.1} parent=5 // pred_check
      %p5470 = pneg %p5469
    $region50: #{decode_layer_forward.1} parent=5 // pred_check_branch
      %5472 = sbr.rel (%p5470) target = $region52
    $region51: #{decode_layer_forward.1} parent=5 // pred_region
      %s5473 = ssub.s32 %s12, 2
      // Predicated region
      $region53: #{decode_layer_forward.1} parent=51 // pred_check
        %p5474 = pneg %p177
      $region54: #{decode_layer_forward.1} parent=51 // pred_check_branch
        %5476 = sbr.rel (%p5474) target = $region56
      $region55: #{decode_layer_forward.1} parent=51 // pred_region
        %p5477 = scmp.lt.s32.totalorder %s18, 1
        %s5478 = scalar_select %p5477, %s18, 1
        %s5479 = smul.addr %s5478, 32
        %s5480 = smul.addr %s5479, 8
        %s5481 = scalar_lea.vmem %s6, %s5480
      $region56: #{decode_layer_forward.1} parent=51 // pred_fallthru
        _
    $region52: #{decode_layer_forward.1} parent=5 // pred_fallthru
      _
  $region6: #{decode_layer_forward.1} parent=0 // loop_footer
    %s16 = sadd.s32 1, %s12
  $region7: #{decode_layer_forward.1} parent=0 // loop_footer_branch
    %11 = sbr.rel target = $region3
  $region8: #{decode_layer_forward.1} parent=0 // loop_exit
    _

</llo_original>
